<compile_context>
chip_gen: v6e
topology: v6e:2x2x1
jax: 0.10.0
libtpu: 0.0.40
codegen_flags: <defaults>
</compile_context>

<pallas_src>
import functools
import math

import jax
import jax.numpy as jnp
from jax.experimental import pallas as pl
from jax.experimental.pallas import tpu as pltpu

BN_EPS = 1e-5
HID = 512
IN_FEATURES = 962
IN_PAD = 1024                      # 962 zero-padded to a lane multiple (kept at 1024 for safe bf16 layout)
NBLOCKS = 8                        # layers 2..9 (identical 512->512->512 blocks)
TAIL_PAD = 256                     # lane padding for tail bias/alpha vectors
TAIL_DIMS = [(HID, 256), (256, 128), (128, 64), (64, 32), (32, 16), (16, 1)]


def _prelu(x, alpha):
    return jnp.where(x >= 0, x, alpha * x)


# ------------------------- fused kernel (single grid step) -------------------------
def flowtron_kernel(x_ref, w1d_ref, v1_ref, w1s_ref,
                    wd_ref, ws_ref, bvec_ref,
                    tw0_ref, tw1_ref, tw2_ref, tw3_ref, tw4_ref, tw5_ref,
                    tvec_ref, out_ref):
    bf16 = jnp.bfloat16
    f32 = jnp.float32

    # ---- layer 1 (double1/single1); batchNorm1 is folded into block 0's wd ----
    v1 = v1_ref[...]                                       # rows: bd1, ad1, bs1, as1
    h = jnp.dot(x_ref[...].astype(bf16), w1d_ref[...], preferred_element_type=f32)
    h = _prelu(h + v1[0:1, :], v1[1:2, :])
    h = jnp.dot(h.astype(bf16), w1s_ref[...], preferred_element_type=f32)
    h = _prelu(h + v1[2:3, :], v1[3:4, :])

    # ---- blocks 2..9: previous BN folded into wd', this block's BN folded into
    #      the next stage's weights.  Weights stay in VMEM; bf16 x bf16 MXU dots. ----
    def block_body(j, h):
        bv = bvec_ref[j]                                   # (4, HID): bd', ad, bs, a_s
        h = jnp.dot(h.astype(bf16), wd_ref[j], preferred_element_type=f32)
        h = _prelu(h + bv[0:1, :], bv[1:2, :])
        h = jnp.dot(h.astype(bf16), ws_ref[j], preferred_element_type=f32)
        h = _prelu(h + bv[2:3, :], bv[3:4, :])
        return h

    h = jax.lax.fori_loop(0, NBLOCKS, block_body, h)

    # ---- tail (double10 .. single12); batchNorm9 folded into double10 ----
    tv = tvec_ref[...]                                     # (12, TAIL_PAD)
    for li, tw_ref in enumerate((tw0_ref, tw1_ref, tw2_ref,
                                 tw3_ref, tw4_ref, tw5_ref)):
        npad = tw_ref.shape[1]
        h = jnp.dot(h.astype(bf16), tw_ref[...], preferred_element_type=f32)
        h = _prelu(h + tv[2 * li:2 * li + 1, :npad],
                   tv[2 * li + 1:2 * li + 2, :npad])
    out_ref[...] = h


# ------------------------- wrapper -------------------------
def _nbytes(a):
    return math.prod(a.shape) * jnp.dtype(a.dtype).itemsize


def flowtron_forward(x, kp):
    B = x.shape[0]
    B_pad = max(8, ((B + 7) // 8) * 8)                     # full sublanes, no masked stores
    f32 = jnp.float32
    x_pad = jnp.zeros((B_pad, IN_PAD), f32).at[:B, :IN_FEATURES].set(x.astype(f32))

    in_specs = [
        pl.BlockSpec((B_pad, IN_PAD), lambda i: (0, 0)),                 # x
        pl.BlockSpec((IN_PAD, HID), lambda i: (0, 0)),                   # w1d
        pl.BlockSpec((4, HID), lambda i: (0, 0)),                        # layer1 vectors
        pl.BlockSpec((HID, HID), lambda i: (0, 0)),                      # w1s
        pl.BlockSpec((NBLOCKS, HID, HID), lambda i: (0, 0, 0)),          # stacked wd (resident)
        pl.BlockSpec((NBLOCKS, HID, HID), lambda i: (0, 0, 0)),          # stacked ws (resident)
        pl.BlockSpec((NBLOCKS, 4, HID), lambda i: (0, 0, 0)),            # packed block vecs
    ]
    for w in kp["tail_w"]:
        in_specs.append(pl.BlockSpec(w.shape, lambda i: (0, 0)))         # tail W (resident)
    in_specs.append(pl.BlockSpec((2 * len(TAIL_DIMS), TAIL_PAD), lambda i: (0, 0)))

    operands = [x_pad, kp["w1d"], kp["v1"], kp["w1s"], kp["wd"], kp["ws"], kp["bvec"],
                *kp["tail_w"], kp["tvec"]]

    flops = 2 * B_pad * (IN_PAD * HID + HID * HID + NBLOCKS * 2 * HID * HID
                         + sum(w.shape[0] * w.shape[1] for w in kp["tail_w"]))
    bytes_accessed = sum(_nbytes(a) for a in operands) + B_pad * 128 * 4

    out_pad = pl.pallas_call(
        flowtron_kernel,
        out_shape=jax.ShapeDtypeStruct((B_pad, 128), f32),
        grid=(1,),
        in_specs=in_specs,
        out_specs=pl.BlockSpec((B_pad, 128), lambda i: (0, 0)),
        compiler_params=pltpu.CompilerParams(
            dimension_semantics=("arbitrary",),
            vmem_limit_bytes=48 * 1024 * 1024),            # ~21 MiB actual; headroom on v7x 64 MiB part
        cost_estimate=pl.CostEstimate(flops=flops, transcendentals=0,
                                      bytes_accessed=bytes_accessed),
    )(*operands)

    return out_pad[:B, :1]                                 # real output lives in column 0


# ------------------ deterministic parameter init (f32 masters) ------------------
def make_params(key):
    f32 = jnp.float32
    keys = jax.random.split(key, 128)
    kit = iter(keys)

    def lin(fan_in, fan_out):
        w = jax.random.normal(next(kit), (fan_in, fan_out), f32) * (1.0 / float(fan_in) ** 0.5)
        b = 0.01 * jax.random.normal(next(kit), (1, fan_out), f32)
        a = jnp.full((1, fan_out), 0.25, f32)              # PyTorch PReLU default init
        return w, b, a

    def bn(n):
        g = 1.0 + 0.1 * jax.random.normal(next(kit), (1, n), f32)
        be = 0.1 * jax.random.normal(next(kit), (1, n), f32)
        m = 0.1 * jax.random.normal(next(kit), (1, n), f32)
        v = 1.0 + 0.1 * jnp.abs(jax.random.normal(next(kit), (1, n), f32))
        return g, be, m, v

    wd1, bd1, ad1 = lin(IN_FEATURES, HID)
    ws1, bs1, a_s1 = lin(HID, HID)
    g1, be1, m1, v1 = bn(HID)
    layer1 = dict(wd=wd1, bd=bd1, ad=ad1, ws=ws1, bs=bs1, a_s=a_s1,
                  g=g1, be=be1, m=m1, v=v1)

    blocks_raw = []
    for _ in range(NBLOCKS):
        wd, bd, ad = lin(HID, HID)
        ws, bs, a_s = lin(HID, HID)
        g, be, m, v = bn(HID)
        blocks_raw.append((wd, bd, ad, ws, bs, a_s, g, be, m, v))

    tail_raw = [lin(fi, fo) for fi, fo in TAIL_DIMS]
    return dict(layer1=layer1, blocks_raw=blocks_raw, tail_raw=tail_raw)


# --------- kernel parameter prep: fold eval BN downstream, pack vectors, bf16 ---------
def prepare_kernel_params(p):
    f32, bf16 = jnp.float32, jnp.bfloat16

    def bn_fold(g, be, m, v):
        s = g * jax.lax.rsqrt(v + BN_EPS)
        return s, be - m * s                               # y = h*s + c

    l1 = p["layer1"]
    s_prev, c_prev = bn_fold(l1["g"], l1["be"], l1["m"], l1["v"])

    kp = {}
    w1d_pad = jnp.zeros((IN_PAD, HID), f32).at[:IN_FEATURES, :].set(l1["wd"])
    kp["w1d"] = w1d_pad.astype(bf16)
    kp["w1s"] = l1["ws"].astype(bf16)
    kp["v1"] = jnp.concatenate([l1["bd"], l1["ad"], l1["bs"], l1["a_s"]], axis=0)

    wd_l, ws_l, bvec_l = [], [], []
    for (wd, bd, ad, ws, bs, a_s, g, be, m, v) in p["blocks_raw"]:
        bd_f = bd + c_prev @ wd                            # fold previous BN shift
        wd_f = wd * s_prev.reshape(HID, 1)                 # fold previous BN scale (rows)
        wd_l.append(wd_f.astype(bf16))
        ws_l.append(ws.astype(bf16))
        bvec_l.append(jnp.concatenate([bd_f, ad, bs, a_s], axis=0))   # (4, HID)
        s_prev, c_prev = bn_fold(g, be, m, v)
    kp["wd"] = jnp.stack(wd_l)                             # (8, 512, 512) bf16
    kp["ws"] = jnp.stack(ws_l)                             # (8, 512, 512) bf16
    kp["bvec"] = jnp.stack(bvec_l)                         # (8, 4, 512)  f32

    tail_w, tvec_rows = [], []
    in_pad = HID
    for li, ((w, b, a), (fi, fo)) in enumerate(zip(p["tail_raw"], TAIL_DIMS)):
        if li == 0:                                        # fold batchNorm9 into double10
            b = b + c_prev @ w
            w = w * s_prev.reshape(HID, 1)
        out_p = max(fo, 128)
        wp = jnp.zeros((in_pad, out_p), f32).at[:fi, :fo].set(w)
        tail_w.append(wp.astype(bf16))
        tvec_rows.append(jnp.zeros((TAIL_PAD,), f32).at[:fo].set(b[0]))
        tvec_rows.append(jnp.zeros((TAIL_PAD,), f32).at[:fo].set(a[0]))
        in_pad = out_p
    kp["tail_w"] = tail_w                                  # 6 bf16 matrices (resident)
    kp["tvec"] = jnp.stack(tvec_rows)                      # (12, 256) f32
    return kp


# ------------------------- references -------------------------
def reference_forward(x, params):
    """Exact eval-mode module semantics on the f32 master parameters."""
    dot = functools.partial(jnp.dot, precision=jax.lax.Precision.HIGHEST)

    def prelu(z, a):
        return jnp.where(z >= 0, z, a * z)

    l1 = params["layer1"]
    h = prelu(dot(x, l1["wd"]) + l1["bd"], l1["ad"])
    h = prelu(dot(h, l1["ws"]) + l1["bs"], l1["a_s"])
    h = (h - l1["m"]) * jax.lax.rsqrt(l1["v"] + BN_EPS) * l1["g"] + l1["be"]
    for (wd, bd, ad, ws, bs, a_s, g, be, m, v) in params["blocks_raw"]:
        h = prelu(dot(h, wd) + bd, ad)
        h = prelu(dot(h, ws) + bs, a_s)
        h = (h - m) * jax.lax.rsqrt(v + BN_EPS) * g + be
    for (w, b, a) in params["tail_raw"]:
        h = prelu(dot(h, w) + b, a)
    return h


def kernel_equiv_reference(x, kp):
    """Same math as the kernel (folded BN, bf16 weights AND bf16 activation casts)."""
    dot = functools.partial(jnp.dot, precision=jax.lax.Precision.HIGHEST)

    def prelu(z, a):
        return jnp.where(z >= 0, z, a * z)

    bf16, f32 = jnp.bfloat16, jnp.float32

    def q(v):                                              # bf16 cast as done before each MXU dot
        return v.astype(bf16).astype(f32)

    B = x.shape[0]
    xp = jnp.zeros((B, IN_PAD), f32).at[:, :IN_FEATURES].set(x)
    v1 = kp["v1"]
    h = prelu(dot(q(xp), kp["w1d"].astype(f32)) + v1[0:1], v1[1:2])
    h = prelu(dot(q(h), kp["w1s"].astype(f32)) + v1[2:3], v1[3:4])
    for j in range(NBLOCKS):
        bv = kp["bvec"][j]
        h = prelu(dot(q(h), kp["wd"][j].astype(f32)) + bv[0:1], bv[1:2])
        h = prelu(dot(q(h), kp["ws"][j].astype(f32)) + bv[2:3], bv[3:4])
    tv = kp["tvec"]
    for li, w in enumerate(kp["tail_w"]):
        npad = w.shape[1]
        h = prelu(dot(q(h), w.astype(f32)) + tv[2 * li:2 * li + 1, :npad],
                  tv[2 * li + 1:2 * li + 2, :npad])
    return h[:, :1]


if __name__ == "__main__":
    key = jax.random.PRNGKey(0)
    pkey, xkey = jax.random.split(key)
    params = make_params(pkey)
    kp = prepare_kernel_params(params)

    B = 4
    x = jax.random.normal(xkey, (B, IN_FEATURES), jnp.float32)

    fwd = jax.jit(flowtron_forward)
    out = jax.block_until_ready(fwd(x, kp))
    assert out.shape == (B, 1), out.shape

    # tight check: kernel vs identical math (folded BN, bf16 weights+activations) in pure JAX
    ref_k = kernel_equiv_reference(x, kp)
    err_k = float(jnp.max(jnp.abs(out - ref_k)))
    tol_k = 1e-2 * (1.0 + float(jnp.max(jnp.abs(ref_k))))
    assert err_k < tol_k, f"kernel vs kernel-math reference mismatch: {err_k} > {tol_k}"

    # looser check: kernel vs the original f32 module semantics (bf16 quantization headroom)
    ref_m = reference_forward(x, params)
    err_m = float(jnp.max(jnp.abs(out - ref_m)))
    tol_m = 1e-1 * (1.0 + float(jnp.max(jnp.abs(ref_m))))
    assert err_m < tol_m, f"kernel vs f32 module reference: {err_m} > {tol_m}"

    print("KERNEL_OK")
</pallas_src>

<mosaic_0001>
module attributes {stable_mosaic.version = 11 : i64} {
  func.func @flowtron_kernel(%arg0: i32, %arg1: memref<8x1024xf32, #tpu.memory_space<vmem>>, %arg2: memref<1024x512xbf16, #tpu.memory_space<vmem>>, %arg3: memref<4x512xf32, #tpu.memory_space<vmem>>, %arg4: memref<512x512xbf16, #tpu.memory_space<vmem>>, %arg5: memref<8x512x512xbf16, #tpu.memory_space<vmem>>, %arg6: memref<8x512x512xbf16, #tpu.memory_space<vmem>>, %arg7: memref<8x4x512xf32, #tpu.memory_space<vmem>>, %arg8: memref<512x256xbf16, #tpu.memory_space<vmem>>, %arg9: memref<256x128xbf16, #tpu.memory_space<vmem>>, %arg10: memref<128x128xbf16, #tpu.memory_space<vmem>>, %arg11: memref<128x128xbf16, #tpu.memory_space<vmem>>, %arg12: memref<128x128xbf16, #tpu.memory_space<vmem>>, %arg13: memref<128x128xbf16, #tpu.memory_space<vmem>>, %arg14: memref<12x256xf32, #tpu.memory_space<vmem>>, %arg15: memref<8x128xf32, #tpu.memory_space<vmem>>) attributes {dimension_semantics = [#tpu.dimension_semantics<arbitrary>], iteration_bounds = array<i64: 1>, scalar_prefetch = 0 : i64, scratch_operands = 0 : i64, tpu.core_type = #tpu.core_type<tc>, window_params = [{pipeline_mode = #tpu.pipeline_mode<synchronous>, transform_indices = @transform_0, window_bounds = array<i64: 8, 1024>}, {pipeline_mode = #tpu.pipeline_mode<synchronous>, transform_indices = @transform_1, window_bounds = array<i64: 1024, 512>}, {pipeline_mode = #tpu.pipeline_mode<synchronous>, transform_indices = @transform_2, window_bounds = array<i64: 4, 512>}, {pipeline_mode = #tpu.pipeline_mode<synchronous>, transform_indices = @transform_3, window_bounds = array<i64: 512, 512>}, {pipeline_mode = #tpu.pipeline_mode<synchronous>, transform_indices = @transform_4, window_bounds = array<i64: 8, 512, 512>}, {pipeline_mode = #tpu.pipeline_mode<synchronous>, transform_indices = @transform_5, window_bounds = array<i64: 8, 512, 512>}, {pipeline_mode = #tpu.pipeline_mode<synchronous>, transform_indices = @transform_6, window_bounds = array<i64: 8, 4, 512>}, {pipeline_mode = #tpu.pipeline_mode<synchronous>, transform_indices = @transform_7, window_bounds = array<i64: 512, 256>}, {pipeline_mode = #tpu.pipeline_mode<synchronous>, transform_indices = @transform_8, window_bounds = array<i64: 256, 128>}, {pipeline_mode = #tpu.pipeline_mode<synchronous>, transform_indices = @transform_9, window_bounds = array<i64: 128, 128>}, {pipeline_mode = #tpu.pipeline_mode<synchronous>, transform_indices = @transform_10, window_bounds = array<i64: 128, 128>}, {pipeline_mode = #tpu.pipeline_mode<synchronous>, transform_indices = @transform_11, window_bounds = array<i64: 128, 128>}, {pipeline_mode = #tpu.pipeline_mode<synchronous>, transform_indices = @transform_12, window_bounds = array<i64: 128, 128>}, {pipeline_mode = #tpu.pipeline_mode<synchronous>, transform_indices = @transform_13, window_bounds = array<i64: 12, 256>}, {pipeline_mode = #tpu.pipeline_mode<synchronous>, transform_indices = @transform_14, window_bounds = array<i64: 8, 128>}]} {
    %c0 = arith.constant 0 : index
    %c0_0 = arith.constant 0 : index
    %0 = vector.load %arg3[%c0, %c0_0] : memref<4x512xf32, #tpu.memory_space<vmem>>, vector<4x512xf32>
    %c0_1 = arith.constant 0 : index
    %c0_2 = arith.constant 0 : index
    %1 = vector.load %arg1[%c0_1, %c0_2] : memref<8x1024xf32, #tpu.memory_space<vmem>>, vector<8x1024xf32>
    %2 = arith.truncf %1 : vector<8x1024xf32> to vector<8x1024xbf16>
    %c0_3 = arith.constant 0 : index
    %c0_4 = arith.constant 0 : index
    %3 = vector.load %arg2[%c0_3, %c0_4] : memref<1024x512xbf16, #tpu.memory_space<vmem>>, vector<1024x512xbf16>
    %cst = arith.constant dense<0.000000e+00> : vector<8x512xf32>
    %4 = tpu.matmul %2, %3, %cst {dimension_numbers = #tpu.dot_dimension_numbers<[1], [0], [0], [1], [0, 0, 1, 1], [], []>} : vector<8x1024xbf16>, vector<1024x512xbf16>, vector<8x512xf32> -> vector<8x512xf32>
    %5 = vector.extract_strided_slice %0 {offsets = [0, 0], sizes = [1, 512], strides = [1, 1]} : vector<4x512xf32> to vector<1x512xf32>
    %6 = vector.broadcast %5 : vector<1x512xf32> to vector<8x512xf32>
    %7 = arith.addf %4, %6 : vector<8x512xf32>
    %8 = vector.extract_strided_slice %0 {offsets = [1, 0], sizes = [1, 512], strides = [1, 1]} : vector<4x512xf32> to vector<1x512xf32>
    %cst_5 = arith.constant 0.000000e+00 : f32
    %9 = vector.broadcast %cst_5 : f32 to vector<8x512xf32>
    %10 = arith.cmpf oge, %7, %9 : vector<8x512xf32>
    %11 = vector.broadcast %8 : vector<1x512xf32> to vector<8x512xf32>
    %12 = arith.mulf %11, %7 : vector<8x512xf32>
    %13 = arith.select %10, %7, %12 : vector<8x512xi1>, vector<8x512xf32>
    %14 = arith.truncf %13 : vector<8x512xf32> to vector<8x512xbf16>
    %c0_6 = arith.constant 0 : index
    %c0_7 = arith.constant 0 : index
    %15 = vector.load %arg4[%c0_6, %c0_7] : memref<512x512xbf16, #tpu.memory_space<vmem>>, vector<512x512xbf16>
    %cst_8 = arith.constant dense<0.000000e+00> : vector<8x512xf32>
    %16 = tpu.matmul %14, %15, %cst_8 {dimension_numbers = #tpu.dot_dimension_numbers<[1], [0], [0], [1], [0, 0, 1, 1], [], []>} : vector<8x512xbf16>, vector<512x512xbf16>, vector<8x512xf32> -> vector<8x512xf32>
    %17 = vector.extract_strided_slice %0 {offsets = [2, 0], sizes = [1, 512], strides = [1, 1]} : vector<4x512xf32> to vector<1x512xf32>
    %18 = vector.broadcast %17 : vector<1x512xf32> to vector<8x512xf32>
    %19 = arith.addf %16, %18 : vector<8x512xf32>
    %20 = vector.extract_strided_slice %0 {offsets = [3, 0], sizes = [1, 512], strides = [1, 1]} : vector<4x512xf32> to vector<1x512xf32>
    %cst_9 = arith.constant 0.000000e+00 : f32
    %21 = vector.broadcast %cst_9 : f32 to vector<8x512xf32>
    %22 = arith.cmpf oge, %19, %21 : vector<8x512xf32>
    %23 = vector.broadcast %20 : vector<1x512xf32> to vector<8x512xf32>
    %24 = arith.mulf %23, %19 : vector<8x512xf32>
    %25 = arith.select %22, %19, %24 : vector<8x512xi1>, vector<8x512xf32>
    %c0_i32 = arith.constant 0 : i32
    %c8_i32 = arith.constant 8 : i32
    %26 = arith.addi %c0_i32, %c8_i32 : i32
    %c1_i32 = arith.constant 1 : i32
    %27 = scf.for %arg16 = %c0_i32 to %26 step %c1_i32 iter_args(%arg17 = %25) -> (vector<8x512xf32>)  : i32 {
      %102 = arith.index_cast %arg16 : i32 to index
      %c0_39 = arith.constant 0 : index
      %c0_40 = arith.constant 0 : index
      %103 = vector.load %arg7[%102, %c0_39, %c0_40] : memref<8x4x512xf32, #tpu.memory_space<vmem>>, vector<1x4x512xf32>
      %104 = vector.shape_cast %103 : vector<1x4x512xf32> to vector<4x512xf32>
      %105 = arith.truncf %arg17 : vector<8x512xf32> to vector<8x512xbf16>
      %106 = arith.index_cast %arg16 : i32 to index
      %c0_41 = arith.constant 0 : index
      %c0_42 = arith.constant 0 : index
      %107 = vector.load %arg5[%106, %c0_41, %c0_42] : memref<8x512x512xbf16, #tpu.memory_space<vmem>>, vector<1x512x512xbf16>
      %108 = vector.shape_cast %107 : vector<1x512x512xbf16> to vector<512x512xbf16>
      %cst_43 = arith.constant dense<0.000000e+00> : vector<8x512xf32>
      %109 = tpu.matmul %105, %108, %cst_43 {dimension_numbers = #tpu.dot_dimension_numbers<[1], [0], [0], [1], [0, 0, 1, 1], [], []>} : vector<8x512xbf16>, vector<512x512xbf16>, vector<8x512xf32> -> vector<8x512xf32>
      %110 = vector.extract_strided_slice %104 {offsets = [0, 0], sizes = [1, 512], strides = [1, 1]} : vector<4x512xf32> to vector<1x512xf32>
      %111 = vector.broadcast %110 : vector<1x512xf32> to vector<8x512xf32>
      %112 = arith.addf %109, %111 : vector<8x512xf32>
      %113 = vector.extract_strided_slice %104 {offsets = [1, 0], sizes = [1, 512], strides = [1, 1]} : vector<4x512xf32> to vector<1x512xf32>
      %cst_44 = arith.constant 0.000000e+00 : f32
      %114 = vector.broadcast %cst_44 : f32 to vector<8x512xf32>
      %115 = arith.cmpf oge, %112, %114 : vector<8x512xf32>
      %116 = vector.broadcast %113 : vector<1x512xf32> to vector<8x512xf32>
      %117 = arith.mulf %116, %112 : vector<8x512xf32>
      %118 = arith.select %115, %112, %117 : vector<8x512xi1>, vector<8x512xf32>
      %119 = arith.truncf %118 : vector<8x512xf32> to vector<8x512xbf16>
      %120 = arith.index_cast %arg16 : i32 to index
      %c0_45 = arith.constant 0 : index
      %c0_46 = arith.constant 0 : index
      %121 = vector.load %arg6[%120, %c0_45, %c0_46] : memref<8x512x512xbf16, #tpu.memory_space<vmem>>, vector<1x512x512xbf16>
      %122 = vector.shape_cast %121 : vector<1x512x512xbf16> to vector<512x512xbf16>
      %cst_47 = arith.constant dense<0.000000e+00> : vector<8x512xf32>
      %123 = tpu.matmul %119, %122, %cst_47 {dimension_numbers = #tpu.dot_dimension_numbers<[1], [0], [0], [1], [0, 0, 1, 1], [], []>} : vector<8x512xbf16>, vector<512x512xbf16>, vector<8x512xf32> -> vector<8x512xf32>
      %124 = vector.extract_strided_slice %104 {offsets = [2, 0], sizes = [1, 512], strides = [1, 1]} : vector<4x512xf32> to vector<1x512xf32>
      %125 = vector.broadcast %124 : vector<1x512xf32> to vector<8x512xf32>
      %126 = arith.addf %123, %125 : vector<8x512xf32>
      %127 = vector.extract_strided_slice %104 {offsets = [3, 0], sizes = [1, 512], strides = [1, 1]} : vector<4x512xf32> to vector<1x512xf32>
      %cst_48 = arith.constant 0.000000e+00 : f32
      %128 = vector.broadcast %cst_48 : f32 to vector<8x512xf32>
      %129 = arith.cmpf oge, %126, %128 : vector<8x512xf32>
      %130 = vector.broadcast %127 : vector<1x512xf32> to vector<8x512xf32>
      %131 = arith.mulf %130, %126 : vector<8x512xf32>
      %132 = arith.select %129, %126, %131 : vector<8x512xi1>, vector<8x512xf32>
      scf.yield %132 : vector<8x512xf32>
    }
    %c8_i32_10 = arith.constant 8 : i32
    %c0_11 = arith.constant 0 : index
    %c0_12 = arith.constant 0 : index
    %28 = vector.load %arg14[%c0_11, %c0_12] : memref<12x256xf32, #tpu.memory_space<vmem>>, vector<12x256xf32>
    %29 = arith.truncf %27 : vector<8x512xf32> to vector<8x512xbf16>
    %c0_13 = arith.constant 0 : index
    %c0_14 = arith.constant 0 : index
    %30 = vector.load %arg8[%c0_13, %c0_14] : memref<512x256xbf16, #tpu.memory_space<vmem>>, vector<512x256xbf16>
    %cst_15 = arith.constant dense<0.000000e+00> : vector<8x256xf32>
    %31 = tpu.matmul %29, %30, %cst_15 {dimension_numbers = #tpu.dot_dimension_numbers<[1], [0], [0], [1], [0, 0, 1, 1], [], []>} : vector<8x512xbf16>, vector<512x256xbf16>, vector<8x256xf32> -> vector<8x256xf32>
    %32 = vector.extract_strided_slice %28 {offsets = [0, 0], sizes = [1, 256], strides = [1, 1]} : vector<12x256xf32> to vector<1x256xf32>
    %33 = vector.broadcast %32 : vector<1x256xf32> to vector<8x256xf32>
    %34 = arith.addf %31, %33 : vector<8x256xf32>
    %35 = vector.extract_strided_slice %28 {offsets = [1, 0], sizes = [1, 256], strides = [1, 1]} : vector<12x256xf32> to vector<1x256xf32>
    %cst_16 = arith.constant 0.000000e+00 : f32
    %36 = vector.broadcast %cst_16 : f32 to vector<8x256xf32>
    %37 = arith.cmpf oge, %34, %36 : vector<8x256xf32>
    %38 = vector.broadcast %35 : vector<1x256xf32> to vector<8x256xf32>
    %39 = arith.mulf %38, %34 : vector<8x256xf32>
    %40 = arith.select %37, %34, %39 : vector<8x256xi1>, vector<8x256xf32>
    %41 = arith.truncf %40 : vector<8x256xf32> to vector<8x256xbf16>
    %c0_17 = arith.constant 0 : index
    %c0_18 = arith.constant 0 : index
    %42 = vector.load %arg9[%c0_17, %c0_18] : memref<256x128xbf16, #tpu.memory_space<vmem>>, vector<256x128xbf16>
    %cst_19 = arith.constant dense<0.000000e+00> : vector<8x128xf32>
    %43 = tpu.matmul %41, %42, %cst_19 {dimension_numbers = #tpu.dot_dimension_numbers<[1], [0], [0], [1], [0, 0, 1, 1], [], []>} : vector<8x256xbf16>, vector<256x128xbf16>, vector<8x128xf32> -> vector<8x128xf32>
    %44 = vector.extract_strided_slice %28 {offsets = [2, 0], sizes = [1, 128], strides = [1, 1]} : vector<12x256xf32> to vector<1x128xf32>
    %45 = vector.broadcast %44 : vector<1x128xf32> to vector<8x128xf32>
    %46 = arith.addf %43, %45 : vector<8x128xf32>
    %47 = vector.extract_strided_slice %28 {offsets = [3, 0], sizes = [1, 128], strides = [1, 1]} : vector<12x256xf32> to vector<1x128xf32>
    %cst_20 = arith.constant 0.000000e+00 : f32
    %48 = vector.broadcast %cst_20 : f32 to vector<8x128xf32>
    %49 = arith.cmpf oge, %46, %48 : vector<8x128xf32>
    %50 = vector.broadcast %47 : vector<1x128xf32> to vector<8x128xf32>
    %51 = arith.mulf %50, %46 : vector<8x128xf32>
    %52 = arith.select %49, %46, %51 : vector<8x128xi1>, vector<8x128xf32>
    %53 = arith.truncf %52 : vector<8x128xf32> to vector<8x128xbf16>
    %c0_21 = arith.constant 0 : index
    %c0_22 = arith.constant 0 : index
    %54 = vector.load %arg10[%c0_21, %c0_22] : memref<128x128xbf16, #tpu.memory_space<vmem>>, vector<128x128xbf16>
    %cst_23 = arith.constant dense<0.000000e+00> : vector<8x128xf32>
    %55 = tpu.matmul %53, %54, %cst_23 {dimension_numbers = #tpu.dot_dimension_numbers<[1], [0], [0], [1], [0, 0, 1, 1], [], []>} : vector<8x128xbf16>, vector<128x128xbf16>, vector<8x128xf32> -> vector<8x128xf32>
    %56 = vector.extract_strided_slice %28 {offsets = [4, 0], sizes = [1, 128], strides = [1, 1]} : vector<12x256xf32> to vector<1x128xf32>
    %57 = vector.broadcast %56 : vector<1x128xf32> to vector<8x128xf32>
    %58 = arith.addf %55, %57 : vector<8x128xf32>
    %59 = vector.extract_strided_slice %28 {offsets = [5, 0], sizes = [1, 128], strides = [1, 1]} : vector<12x256xf32> to vector<1x128xf32>
    %cst_24 = arith.constant 0.000000e+00 : f32
    %60 = vector.broadcast %cst_24 : f32 to vector<8x128xf32>
    %61 = arith.cmpf oge, %58, %60 : vector<8x128xf32>
    %62 = vector.broadcast %59 : vector<1x128xf32> to vector<8x128xf32>
    %63 = arith.mulf %62, %58 : vector<8x128xf32>
    %64 = arith.select %61, %58, %63 : vector<8x128xi1>, vector<8x128xf32>
    %65 = arith.truncf %64 : vector<8x128xf32> to vector<8x128xbf16>
    %c0_25 = arith.constant 0 : index
    %c0_26 = arith.constant 0 : index
    %66 = vector.load %arg11[%c0_25, %c0_26] : memref<128x128xbf16, #tpu.memory_space<vmem>>, vector<128x128xbf16>
    %cst_27 = arith.constant dense<0.000000e+00> : vector<8x128xf32>
    %67 = tpu.matmul %65, %66, %cst_27 {dimension_numbers = #tpu.dot_dimension_numbers<[1], [0], [0], [1], [0, 0, 1, 1], [], []>} : vector<8x128xbf16>, vector<128x128xbf16>, vector<8x128xf32> -> vector<8x128xf32>
    %68 = vector.extract_strided_slice %28 {offsets = [6, 0], sizes = [1, 128], strides = [1, 1]} : vector<12x256xf32> to vector<1x128xf32>
    %69 = vector.broadcast %68 : vector<1x128xf32> to vector<8x128xf32>
    %70 = arith.addf %67, %69 : vector<8x128xf32>
    %71 = vector.extract_strided_slice %28 {offsets = [7, 0], sizes = [1, 128], strides = [1, 1]} : vector<12x256xf32> to vector<1x128xf32>
    %cst_28 = arith.constant 0.000000e+00 : f32
    %72 = vector.broadcast %cst_28 : f32 to vector<8x128xf32>
    %73 = arith.cmpf oge, %70, %72 : vector<8x128xf32>
    %74 = vector.broadcast %71 : vector<1x128xf32> to vector<8x128xf32>
    %75 = arith.mulf %74, %70 : vector<8x128xf32>
    %76 = arith.select %73, %70, %75 : vector<8x128xi1>, vector<8x128xf32>
    %77 = arith.truncf %76 : vector<8x128xf32> to vector<8x128xbf16>
    %c0_29 = arith.constant 0 : index
    %c0_30 = arith.constant 0 : index
    %78 = vector.load %arg12[%c0_29, %c0_30] : memref<128x128xbf16, #tpu.memory_space<vmem>>, vector<128x128xbf16>
    %cst_31 = arith.constant dense<0.000000e+00> : vector<8x128xf32>
    %79 = tpu.matmul %77, %78, %cst_31 {dimension_numbers = #tpu.dot_dimension_numbers<[1], [0], [0], [1], [0, 0, 1, 1], [], []>} : vector<8x128xbf16>, vector<128x128xbf16>, vector<8x128xf32> -> vector<8x128xf32>
    %80 = vector.extract_strided_slice %28 {offsets = [8, 0], sizes = [1, 128], strides = [1, 1]} : vector<12x256xf32> to vector<1x128xf32>
    %81 = vector.broadcast %80 : vector<1x128xf32> to vector<8x128xf32>
    %82 = arith.addf %79, %81 : vector<8x128xf32>
    %83 = vector.extract_strided_slice %28 {offsets = [9, 0], sizes = [1, 128], strides = [1, 1]} : vector<12x256xf32> to vector<1x128xf32>
    %cst_32 = arith.constant 0.000000e+00 : f32
    %84 = vector.broadcast %cst_32 : f32 to vector<8x128xf32>
    %85 = arith.cmpf oge, %82, %84 : vector<8x128xf32>
    %86 = vector.broadcast %83 : vector<1x128xf32> to vector<8x128xf32>
    %87 = arith.mulf %86, %82 : vector<8x128xf32>
    %88 = arith.select %85, %82, %87 : vector<8x128xi1>, vector<8x128xf32>
    %89 = arith.truncf %88 : vector<8x128xf32> to vector<8x128xbf16>
    %c0_33 = arith.constant 0 : index
    %c0_34 = arith.constant 0 : index
    %90 = vector.load %arg13[%c0_33, %c0_34] : memref<128x128xbf16, #tpu.memory_space<vmem>>, vector<128x128xbf16>
    %cst_35 = arith.constant dense<0.000000e+00> : vector<8x128xf32>
    %91 = tpu.matmul %89, %90, %cst_35 {dimension_numbers = #tpu.dot_dimension_numbers<[1], [0], [0], [1], [0, 0, 1, 1], [], []>} : vector<8x128xbf16>, vector<128x128xbf16>, vector<8x128xf32> -> vector<8x128xf32>
    %92 = vector.extract_strided_slice %28 {offsets = [10, 0], sizes = [1, 128], strides = [1, 1]} : vector<12x256xf32> to vector<1x128xf32>
    %93 = vector.broadcast %92 : vector<1x128xf32> to vector<8x128xf32>
    %94 = arith.addf %91, %93 : vector<8x128xf32>
    %95 = vector.extract_strided_slice %28 {offsets = [11, 0], sizes = [1, 128], strides = [1, 1]} : vector<12x256xf32> to vector<1x128xf32>
    %cst_36 = arith.constant 0.000000e+00 : f32
    %96 = vector.broadcast %cst_36 : f32 to vector<8x128xf32>
    %97 = arith.cmpf oge, %94, %96 : vector<8x128xf32>
    %98 = vector.broadcast %95 : vector<1x128xf32> to vector<8x128xf32>
    %99 = arith.mulf %98, %94 : vector<8x128xf32>
    %100 = arith.select %97, %94, %99 : vector<8x128xi1>, vector<8x128xf32>
    %c0_37 = arith.constant 0 : index
    %c0_38 = arith.constant 0 : index
    %101 = vector.load %arg15[%c0_37, %c0_38] : memref<8x128xf32, #tpu.memory_space<vmem>>, vector<8x128xf32>
    tpu.vector_store %arg15[%c0_37, %c0_38], %100 {strides = array<i32>} : memref<8x128xf32, #tpu.memory_space<vmem>>, vector<8x128xf32>,
    return
  }
  func.func @transform_0(%arg0: i32) -> (i32, i32) {
    %c0_i32 = arith.constant 0 : i32
    %c0_i32_0 = arith.constant 0 : i32
    %c0_i32_1 = arith.constant 0 : i32
    return %c0_i32, %c0_i32_0 : i32, i32
  }
  func.func @transform_1(%arg0: i32) -> (i32, i32) {
    %c0_i32 = arith.constant 0 : i32
    %c0_i32_0 = arith.constant 0 : i32
    %c0_i32_1 = arith.constant 0 : i32
    return %c0_i32, %c0_i32_0 : i32, i32
  }
  func.func @transform_2(%arg0: i32) -> (i32, i32) {
    %c0_i32 = arith.constant 0 : i32
    %c0_i32_0 = arith.constant 0 : i32
    %c0_i32_1 = arith.constant 0 : i32
    return %c0_i32, %c0_i32_0 : i32, i32
  }
  func.func @transform_3(%arg0: i32) -> (i32, i32) {
    %c0_i32 = arith.constant 0 : i32
    %c0_i32_0 = arith.constant 0 : i32
    %c0_i32_1 = arith.constant 0 : i32
    return %c0_i32, %c0_i32_0 : i32, i32
  }
  func.func @transform_4(%arg0: i32) -> (i32, i32, i32) {
    %c0_i32 = arith.constant 0 : i32
    %c0_i32_0 = arith.constant 0 : i32
    %c0_i32_1 = arith.constant 0 : i32
    %c0_i32_2 = arith.constant 0 : i32
    return %c0_i32, %c0_i32_0, %c0_i32_1 : i32, i32, i32
  }
  func.func @transform_5(%arg0: i32) -> (i32, i32, i32) {
    %c0_i32 = arith.constant 0 : i32
    %c0_i32_0 = arith.constant 0 : i32
    %c0_i32_1 = arith.constant 0 : i32
    %c0_i32_2 = arith.constant 0 : i32
    return %c0_i32, %c0_i32_0, %c0_i32_1 : i32, i32, i32
  }
  func.func @transform_6(%arg0: i32) -> (i32, i32, i32) {
    %c0_i32 = arith.constant 0 : i32
    %c0_i32_0 = arith.constant 0 : i32
    %c0_i32_1 = arith.constant 0 : i32
    %c0_i32_2 = arith.constant 0 : i32
    return %c0_i32, %c0_i32_0, %c0_i32_1 : i32, i32, i32
  }
  func.func @transform_7(%arg0: i32) -> (i32, i32) {
    %c0_i32 = arith.constant 0 : i32
    %c0_i32_0 = arith.constant 0 : i32
    %c0_i32_1 = arith.constant 0 : i32
    return %c0_i32, %c0_i32_0 : i32, i32
  }
  func.func @transform_8(%arg0: i32) -> (i32, i32) {
    %c0_i32 = arith.constant 0 : i32
    %c0_i32_0 = arith.constant 0 : i32
    %c0_i32_1 = arith.constant 0 : i32
    return %c0_i32, %c0_i32_0 : i32, i32
  }
  func.func @transform_9(%arg0: i32) -> (i32, i32) {
    %c0_i32 = arith.constant 0 : i32
    %c0_i32_0 = arith.constant 0 : i32
    %c0_i32_1 = arith.constant 0 : i32
    return %c0_i32, %c0_i32_0 : i32, i32
  }
  func.func @transform_10(%arg0: i32) -> (i32, i32) {
    %c0_i32 = arith.constant 0 : i32
    %c0_i32_0 = arith.constant 0 : i32
    %c0_i32_1 = arith.constant 0 : i32
    return %c0_i32, %c0_i32_0 : i32, i32
  }
  func.func @transform_11(%arg0: i32) -> (i32, i32) {
    %c0_i32 = arith.constant 0 : i32
    %c0_i32_0 = arith.constant 0 : i32
    %c0_i32_1 = arith.constant 0 : i32
    return %c0_i32, %c0_i32_0 : i32, i32
  }
  func.func @transform_12(%arg0: i32) -> (i32, i32) {
    %c0_i32 = arith.constant 0 : i32
    %c0_i32_0 = arith.constant 0 : i32
    %c0_i32_1 = arith.constant 0 : i32
    return %c0_i32, %c0_i32_0 : i32, i32
  }
  func.func @transform_13(%arg0: i32) -> (i32, i32) {
    %c0_i32 = arith.constant 0 : i32
    %c0_i32_0 = arith.constant 0 : i32
    %c0_i32_1 = arith.constant 0 : i32
    return %c0_i32, %c0_i32_0 : i32, i32
  }
  func.func @transform_14(%arg0: i32) -> (i32, i32) {
    %c0_i32 = arith.constant 0 : i32
    %c0_i32_0 = arith.constant 0 : i32
    %c0_i32_1 = arith.constant 0 : i32
    return %c0_i32, %c0_i32_0 : i32, i32
  }
}

</mosaic_0001>

<llo_original>
// kernel: flowtron_forward.1
$region0: #{flowtron_forward.1}
  #allocation0 [shape = 'u32[]', space=smem, size = 0x4, offset = 0x4, fixed_abs, tag = 'smem constant byte address 0x4 - core index']
  #allocation1 [shape = 'u32[144,128]{1,0:T(1,128)}', space=vmem, size = 0x12000, scoped, tag = 'internal scratch']
  %s0 = inlined_call_operand.vmem [shape: f32[8,1024], index: 0, kind: input, shape index: {}]
  %s1 = inlined_call_operand.hbm [shape: bf16[1024,512], index: 1, kind: input, shape index: {}]
  %s2 = inlined_call_operand.hbm [shape: f32[4,512], index: 2, kind: input, shape index: {}]
  %s3 = inlined_call_operand.hbm [shape: bf16[512,512], index: 3, kind: input, shape index: {}]
  %s4 = inlined_call_operand.hbm [shape: bf16[8,512,512], index: 4, kind: input, shape index: {}]
  %s5 = inlined_call_operand.hbm [shape: bf16[8,512,512], index: 5, kind: input, shape index: {}]
  %s6 = inlined_call_operand.hbm [shape: f32[8,4,512], index: 6, kind: input, shape index: {}]
  %s7 = inlined_call_operand.hbm [shape: bf16[512,256], index: 7, kind: input, shape index: {}]
  %s8 = inlined_call_operand.hbm [shape: bf16[256,128], index: 8, kind: input, shape index: {}]
  %s9 = inlined_call_operand.hbm [shape: bf16[128,128], index: 9, kind: input, shape index: {}]
  %s10 = inlined_call_operand.hbm [shape: bf16[128,128], index: 10, kind: input, shape index: {}]
  %s11 = inlined_call_operand.hbm [shape: bf16[128,128], index: 11, kind: input, shape index: {}]
  %s12 = inlined_call_operand.hbm [shape: bf16[128,128], index: 12, kind: input, shape index: {}]
  %s13 = inlined_call_operand.hbm [shape: f32[12,256], index: 13, kind: input, shape index: {}]
  %s14 = inlined_call_operand.vmem [shape: f32[8,128], index: 14, kind: output, shape index: {}]
  %s15 = sld [smem:[#allocation0]]
  $region125: #{flowtron_forward.1} parent=0
    _
  %s17 = ssub.s32 1, %s15
  %s18 = scalar_select 0, %s17, %s15
  $region1: #{flowtron_forward.1} parent=0
    #allocation2 [shape = 'u8[1048576]{0}', space=vmem, size = 0x100000, scoped, tag = 'input window, operand 1, single buffered']
    #allocation3 [shape = 's32[1]{0}', space=sflag, size = 0x4, scoped, tag = 'scoped memory for flowtron_forward.1']
    #allocation4 [shape = 'u8[8192]{0}', space=vmem, size = 0x2000, scoped, tag = 'input window, operand 2, single buffered']
    #allocation5 [shape = 's32[1]{0}', space=sflag, size = 0x4, scoped, tag = 'scoped memory for flowtron_forward.1']
    #allocation6 [shape = 'u8[524288]{0}', space=vmem, size = 0x80000, scoped, tag = 'input window, operand 3, single buffered']
    #allocation7 [shape = 'u8[4194304]{0}', space=vmem, size = 0x400000, scoped, tag = 'input window, operand 4, single buffered']
    #allocation8 [shape = 's32[1]{0}', space=sflag, size = 0x4, scoped, tag = 'scoped memory for flowtron_forward.1']
    #allocation9 [shape = 'u8[4194304]{0}', space=vmem, size = 0x400000, scoped, tag = 'input window, operand 5, single buffered']
    #allocation10 [shape = 'u8[65536]{0}', space=vmem, size = 0x10000, scoped, tag = 'input window, operand 6, single buffered']
    #allocation11 [shape = 's32[1]{0}', space=sflag, size = 0x4, scoped, tag = 'scoped memory for flowtron_forward.1']
    #allocation12 [shape = 'u8[262144]{0}', space=vmem, size = 0x40000, scoped, tag = 'input window, operand 7, single buffered']
    #allocation13 [shape = 'u8[65536]{0}', space=vmem, size = 0x10000, scoped, tag = 'input window, operand 8, single buffered']
    #allocation14 [shape = 's32[1]{0}', space=sflag, size = 0x4, scoped, tag = 'scoped memory for flowtron_forward.1']
    #allocation15 [shape = 'u8[32768]{0}', space=vmem, size = 0x8000, scoped, tag = 'input window, operand 9, single buffered']
    #allocation16 [shape = 'u8[32768]{0}', space=vmem, size = 0x8000, scoped, tag = 'input window, operand 10, single buffered']
    #allocation17 [shape = 's32[1]{0}', space=sflag, size = 0x4, scoped, tag = 'scoped memory for flowtron_forward.1']
    #allocation18 [shape = 'u8[32768]{0}', space=vmem, size = 0x8000, scoped, tag = 'input window, operand 11, single buffered']
    #allocation19 [shape = 'u8[32768]{0}', space=vmem, size = 0x8000, scoped, tag = 'input window, operand 12, single buffered']
    #allocation20 [shape = 's32[1]{0}', space=sflag, size = 0x4, scoped, tag = 'scoped memory for flowtron_forward.1']
    #allocation21 [shape = 'u8[16384]{0}', space=vmem, size = 0x4000, scoped, tag = 'input window, operand 13, single buffered']
    %19 = vsyncpa [#allocation3], 0
    %20 = vsyncpa [#allocation5], 0
    %21 = vsyncpa [#allocation8], 0
    %22 = vsyncpa [#allocation11], 0
    %23 = vsyncpa [#allocation14], 0
    %24 = vsyncpa [#allocation17], 0
    %25 = vsyncpa [#allocation20], 0
    // Predicated region
    $region2: #{flowtron_forward.1} parent=1 // pred_check
      _
    $region3: #{flowtron_forward.1} parent=1 // pred_check_branch
      %27 = sbr.rel (0) target = $region5
    $region4: #{flowtron_forward.1} parent=1 // pred_region
      _
    $region5: #{flowtron_forward.1} parent=1 // pred_fallthru
      _
    // Predicated region
    $region6: #{flowtron_forward.1} parent=1 // pred_check
      _
    $region7: #{flowtron_forward.1} parent=1 // pred_check_branch
      %29 = sbr.rel (0) target = $region9
    $region8: #{flowtron_forward.1} parent=1 // pred_region
      %s31 = ssub.s32 32768, 32768
      %32 = vsyncadd [#allocation3], %s31
      %s33 = sshll.u32 [#allocation2], 4
      %s34 = int_to_ptr.vmem [resolvable:$true] %s33
      %39 = dma.hbm_to_vmem [thread:$0]  %s1, 32768, %s34, [#allocation3], 256, 256, 16
    $region9: #{flowtron_forward.1} parent=1 // pred_fallthru
      _
    // Predicated region
    $region10: #{flowtron_forward.1} parent=1 // pred_check
      _
    $region11: #{flowtron_forward.1} parent=1 // pred_check_branch
      %41 = sbr.rel (0) target = $region13
    $region12: #{flowtron_forward.1} parent=1 // pred_region
      %s43 = ssub.s32 256, 256
      %44 = vsyncadd [#allocation5], %s43
      %s46 = sshll.u32 [#allocation4], 4
      %s47 = int_to_ptr.vmem [resolvable:$true] %s46
      %49 = dma.hbm_to_vmem [thread:$0]  %s2, 256, %s47, [#allocation5]
    $region13: #{flowtron_forward.1} parent=1 // pred_fallthru
      _
    // Predicated region
    $region14: #{flowtron_forward.1} parent=1 // pred_check
      _
    $region15: #{flowtron_forward.1} parent=1 // pred_check_branch
      %51 = sbr.rel (0) target = $region17
    $region16: #{flowtron_forward.1} parent=1 // pred_region
      %s53 = ssub.s32 16384, 16384
      %54 = vsyncadd [#allocation5], %s53
      %s55 = sshll.u32 [#allocation6], 4
      %s56 = int_to_ptr.vmem [resolvable:$true] %s55
      %61 = dma.hbm_to_vmem [thread:$0]  %s3, 16384, %s56, [#allocation5], 256, 256, 16
    $region17: #{flowtron_forward.1} parent=1 // pred_fallthru
      _
    // Predicated region
    $region18: #{flowtron_forward.1} parent=1 // pred_check
      _
    $region19: #{flowtron_forward.1} parent=1 // pred_check_branch
      %63 = sbr.rel (0) target = $region21
    $region20: #{flowtron_forward.1} parent=1 // pred_region
      %s65 = ssub.s32 131072, 131072
      %66 = vsyncadd [#allocation8], %s65
      %s67 = sshll.u32 [#allocation7], 4
      %s68 = int_to_ptr.vmem [resolvable:$true] %s67
      %73 = dma.hbm_to_vmem [thread:$0]  %s4, 131072, %s68, [#allocation8], 256, 256, 16
    $region21: #{flowtron_forward.1} parent=1 // pred_fallthru
      _
    // Predicated region
    $region22: #{flowtron_forward.1} parent=1 // pred_check
      _
    $region23: #{flowtron_forward.1} parent=1 // pred_check_branch
      %75 = sbr.rel (0) target = $region25
    $region24: #{flowtron_forward.1} parent=1 // pred_region
      %s77 = ssub.s32 131072, 131072
      %78 = vsyncadd [#allocation8], %s77
      %s79 = sshll.u32 [#allocation9], 4
      %s80 = int_to_ptr.vmem [resolvable:$true] %s79
      %85 = dma.hbm_to_vmem [thread:$0]  %s5, 131072, %s80, [#allocation8], 256, 256, 16
    $region25: #{flowtron_forward.1} parent=1 // pred_fallthru
      _
    // Predicated region
    $region26: #{flowtron_forward.1} parent=1 // pred_check
      _
    $region27: #{flowtron_forward.1} parent=1 // pred_check_branch
      %87 = sbr.rel (0) target = $region29
    $region28: #{flowtron_forward.1} parent=1 // pred_region
      %s89 = ssub.s32 2048, 2048
      %90 = vsyncadd [#allocation11], %s89
      %s91 = sshll.u32 [#allocation10], 4
      %s92 = int_to_ptr.vmem [resolvable:$true] %s91
      %97 = dma.hbm_to_vmem [thread:$0]  %s6, 2048, %s92, [#allocation11], 256, 256, 16
    $region29: #{flowtron_forward.1} parent=1 // pred_fallthru
      _
    // Predicated region
    $region30: #{flowtron_forward.1} parent=1 // pred_check
      _
    $region31: #{flowtron_forward.1} parent=1 // pred_check_branch
      %99 = sbr.rel (0) target = $region33
    $region32: #{flowtron_forward.1} parent=1 // pred_region
      %s101 = ssub.s32 8192, 8192
      %102 = vsyncadd [#allocation11], %s101
      %s103 = sshll.u32 [#allocation12], 4
      %s104 = int_to_ptr.vmem [resolvable:$true] %s103
      %109 = dma.hbm_to_vmem [thread:$0]  %s7, 8192, %s104, [#allocation11], 128, 128, 8
    $region33: #{flowtron_forward.1} parent=1 // pred_fallthru
      _
    // Predicated region
    $region34: #{flowtron_forward.1} parent=1 // pred_check
      _
    $region35: #{flowtron_forward.1} parent=1 // pred_check_branch
      %111 = sbr.rel (0) target = $region37
    $region36: #{flowtron_forward.1} parent=1 // pred_region
      %s113 = ssub.s32 2048, 2048
      %114 = vsyncadd [#allocation14], %s113
      %s115 = sshll.u32 [#allocation13], 4
      %s116 = int_to_ptr.vmem [resolvable:$true] %s115
      %121 = dma.hbm_to_vmem [thread:$0]  %s8, 2048, %s116, [#allocation14], 64, 64, 4
    $region37: #{flowtron_forward.1} parent=1 // pred_fallthru
      _
    // Predicated region
    $region38: #{flowtron_forward.1} parent=1 // pred_check
      _
    $region39: #{flowtron_forward.1} parent=1 // pred_check_branch
      %123 = sbr.rel (0) target = $region41
    $region40: #{flowtron_forward.1} parent=1 // pred_region
      %s125 = ssub.s32 1024, 1024
      %126 = vsyncadd [#allocation14], %s125
      %s127 = sshll.u32 [#allocation15], 4
      %s128 = int_to_ptr.vmem [resolvable:$true] %s127
      %133 = dma.hbm_to_vmem [thread:$0]  %s9, 1024, %s128, [#allocation14], 64, 64, 4
    $region41: #{flowtron_forward.1} parent=1 // pred_fallthru
      _
    // Predicated region
    $region42: #{flowtron_forward.1} parent=1 // pred_check
      _
    $region43: #{flowtron_forward.1} parent=1 // pred_check_branch
      %135 = sbr.rel (0) target = $region45
    $region44: #{flowtron_forward.1} parent=1 // pred_region
      %s137 = ssub.s32 1024, 1024
      %138 = vsyncadd [#allocation17], %s137
      %s139 = sshll.u32 [#allocation16], 4
      %s140 = int_to_ptr.vmem [resolvable:$true] %s139
      %145 = dma.hbm_to_vmem [thread:$0]  %s10, 1024, %s140, [#allocation17], 64, 64, 4
    $region45: #{flowtron_forward.1} parent=1 // pred_fallthru
      _
    // Predicated region
    $region46: #{flowtron_forward.1} parent=1 // pred_check
      _
    $region47: #{flowtron_forward.1} parent=1 // pred_check_branch
      %147 = sbr.rel (0) target = $region49
    $region48: #{flowtron_forward.1} parent=1 // pred_region
      %s149 = ssub.s32 1024, 1024
      %150 = vsyncadd [#allocation17], %s149
      %s151 = sshll.u32 [#allocation18], 4
      %s152 = int_to_ptr.vmem [resolvable:$true] %s151
      %157 = dma.hbm_to_vmem [thread:$0]  %s11, 1024, %s152, [#allocation17], 64, 64, 4
    $region49: #{flowtron_forward.1} parent=1 // pred_fallthru
      _
    // Predicated region
    $region50: #{flowtron_forward.1} parent=1 // pred_check
      _
    $region51: #{flowtron_forward.1} parent=1 // pred_check_branch
      %159 = sbr.rel (0) target = $region53
    $region52: #{flowtron_forward.1} parent=1 // pred_region
      %s161 = ssub.s32 1024, 1024
      %162 = vsyncadd [#allocation20], %s161
      %s163 = sshll.u32 [#allocation19], 4
      %s164 = int_to_ptr.vmem [resolvable:$true] %s163
      %169 = dma.hbm_to_vmem [thread:$0]  %s12, 1024, %s164, [#allocation20], 64, 64, 4
    $region53: #{flowtron_forward.1} parent=1 // pred_fallthru
      _
    // Predicated region
    $region54: #{flowtron_forward.1} parent=1 // pred_check
      _
    $region55: #{flowtron_forward.1} parent=1 // pred_check_branch
      %171 = sbr.rel (0) target = $region57
    $region56: #{flowtron_forward.1} parent=1 // pred_region
      %s173 = ssub.s32 512, 512
      %174 = vsyncadd [#allocation20], %s173
      %s175 = sshll.u32 [#allocation21], 4
      %s176 = int_to_ptr.vmem [resolvable:$true] %s175
      %181 = dma.hbm_to_vmem [thread:$0]  %s13, 512, %s176, [#allocation20], 256, 256, 16
    $region57: #{flowtron_forward.1} parent=1 // pred_fallthru
      _
    // Predicated region
    $region58: #{flowtron_forward.1} parent=1 // pred_check
      _
    $region59: #{flowtron_forward.1} parent=1 // pred_check_branch
      %183 = sbr.rel (0) target = $region61
    $region60: #{flowtron_forward.1} parent=1 // pred_region
      %184 = dma.done [#allocation3], 32768
    $region61: #{flowtron_forward.1} parent=1 // pred_fallthru
      _
    // Predicated region
    $region62: #{flowtron_forward.1} parent=1 // pred_check
      _
    $region63: #{flowtron_forward.1} parent=1 // pred_check_branch
      %186 = sbr.rel (0) target = $region65
    $region64: #{flowtron_forward.1} parent=1 // pred_region
      %187 = dma.done [#allocation5], 256
    $region65: #{flowtron_forward.1} parent=1 // pred_fallthru
      _
    // Predicated region
    $region66: #{flowtron_forward.1} parent=1 // pred_check
      _
    $region67: #{flowtron_forward.1} parent=1 // pred_check_branch
      %189 = sbr.rel (0) target = $region69
    $region68: #{flowtron_forward.1} parent=1 // pred_region
      %190 = dma.done [#allocation5], 16384
    $region69: #{flowtron_forward.1} parent=1 // pred_fallthru
      _
    // Predicated region
    $region70: #{flowtron_forward.1} parent=1 // pred_check
      _
    $region71: #{flowtron_forward.1} parent=1 // pred_check_branch
      %192 = sbr.rel (0) target = $region73
    $region72: #{flowtron_forward.1} parent=1 // pred_region
      %193 = dma.done [#allocation8], 131072
    $region73: #{flowtron_forward.1} parent=1 // pred_fallthru
      _
    // Predicated region
    $region74: #{flowtron_forward.1} parent=1 // pred_check
      _
    $region75: #{flowtron_forward.1} parent=1 // pred_check_branch
      %195 = sbr.rel (0) target = $region77
    $region76: #{flowtron_forward.1} parent=1 // pred_region
      %196 = dma.done [#allocation8], 131072
    $region77: #{flowtron_forward.1} parent=1 // pred_fallthru
      _
    // Predicated region
    $region78: #{flowtron_forward.1} parent=1 // pred_check
      _
    $region79: #{flowtron_forward.1} parent=1 // pred_check_branch
      %198 = sbr.rel (0) target = $region81
    $region80: #{flowtron_forward.1} parent=1 // pred_region
      %199 = dma.done [#allocation11], 2048
    $region81: #{flowtron_forward.1} parent=1 // pred_fallthru
      _
    // Predicated region
    $region82: #{flowtron_forward.1} parent=1 // pred_check
      _
    $region83: #{flowtron_forward.1} parent=1 // pred_check_branch
      %201 = sbr.rel (0) target = $region85
    $region84: #{flowtron_forward.1} parent=1 // pred_region
      %202 = dma.done [#allocation11], 8192
    $region85: #{flowtron_forward.1} parent=1 // pred_fallthru
      _
    // Predicated region
    $region86: #{flowtron_forward.1} parent=1 // pred_check
      _
    $region87: #{flowtron_forward.1} parent=1 // pred_check_branch
      %204 = sbr.rel (0) target = $region89
    $region88: #{flowtron_forward.1} parent=1 // pred_region
      %205 = dma.done [#allocation14], 2048
    $region89: #{flowtron_forward.1} parent=1 // pred_fallthru
      _
    // Predicated region
    $region90: #{flowtron_forward.1} parent=1 // pred_check
      _
    $region91: #{flowtron_forward.1} parent=1 // pred_check_branch
      %207 = sbr.rel (0) target = $region93
    $region92: #{flowtron_forward.1} parent=1 // pred_region
      %208 = dma.done [#allocation14], 1024
    $region93: #{flowtron_forward.1} parent=1 // pred_fallthru
      _
    // Predicated region
    $region94: #{flowtron_forward.1} parent=1 // pred_check
      _
    $region95: #{flowtron_forward.1} parent=1 // pred_check_branch
      %210 = sbr.rel (0) target = $region97
    $region96: #{flowtron_forward.1} parent=1 // pred_region
      %211 = dma.done [#allocation17], 1024
    $region97: #{flowtron_forward.1} parent=1 // pred_fallthru
      _
    // Predicated region
    $region98: #{flowtron_forward.1} parent=1 // pred_check
      _
    $region99: #{flowtron_forward.1} parent=1 // pred_check_branch
      %213 = sbr.rel (0) target = $region101
    $region100: #{flowtron_forward.1} parent=1 // pred_region
      %214 = dma.done [#allocation17], 1024
    $region101: #{flowtron_forward.1} parent=1 // pred_fallthru
      _
    // Predicated region
    $region102: #{flowtron_forward.1} parent=1 // pred_check
      _
    $region103: #{flowtron_forward.1} parent=1 // pred_check_branch
      %216 = sbr.rel (0) target = $region105
    $region104: #{flowtron_forward.1} parent=1 // pred_region
      %217 = dma.done [#allocation20], 1024
    $region105: #{flowtron_forward.1} parent=1 // pred_fallthru
      _
    // Predicated region
    $region106: #{flowtron_forward.1} parent=1 // pred_check
      _
    $region107: #{flowtron_forward.1} parent=1 // pred_check_branch
      %219 = sbr.rel (0) target = $region109
    $region108: #{flowtron_forward.1} parent=1 // pred_region
      %220 = dma.done [#allocation20], 512
    $region109: #{flowtron_forward.1} parent=1 // pred_fallthru
      _
    %v222 = vld [vmem:[#allocation4] sm:$0xff]
    %v223 = vld [vmem:[#allocation4 + $0x8] sm:$0xff]
    %v224 = vld [vmem:[%s0] sm:$0xff]
    %v225 = vld [vmem:[%s0 + $0x8] sm:$0xff]
    %v226 = vld [vmem:[%s0 + $0x10] sm:$0xff]
    %v227 = vld [vmem:[%s0 + $0x18] sm:$0xff]
    %v228 = vld [vmem:[%s0 + $0x20] sm:$0xff]
    %v229 = vld [vmem:[%s0 + $0x28] sm:$0xff]
    %v230 = vld [vmem:[%s0 + $0x30] sm:$0xff]
    %v231 = vld [vmem:[%s0 + $0x38] sm:$0xff]
    %v232 = vpack.c.bf16 %v224, %v224
    %v233 = vpack.c.bf16 %v225, %v225
    %v234 = vpack.c.bf16 %v226, %v226
    %v235 = vpack.c.bf16 %v227, %v227
    %v236 = vpack.c.bf16 %v228, %v228
    %v237 = vpack.c.bf16 %v229, %v229
    %v238 = vpack.c.bf16 %v230, %v230
    %v239 = vpack.c.bf16 %v231, %v231
    %v240 = vld [vmem:[#allocation2] sm:$0xff]
    %v241 = vld [vmem:[#allocation2 + $0x8] sm:$0xff]
    %v242 = vld [vmem:[#allocation2 + $0x10] sm:$0xff]
    %v243 = vld [vmem:[#allocation2 + $0x18] sm:$0xff]
    %v244 = vld [vmem:[#allocation2 + $0x20] sm:$0xff]
    %v245 = vld [vmem:[#allocation2 + $0x28] sm:$0xff]
    %v246 = vld [vmem:[#allocation2 + $0x30] sm:$0xff]
    %v247 = vld [vmem:[#allocation2 + $0x38] sm:$0xff]
    %v248 = vld [vmem:[#allocation2 + $0x40] sm:$0xff]
    %v249 = vld [vmem:[#allocation2 + $0x48] sm:$0xff]
    %v250 = vld [vmem:[#allocation2 + $0x50] sm:$0xff]
    %v251 = vld [vmem:[#allocation2 + $0x58] sm:$0xff]
    %v252 = vld [vmem:[#allocation2 + $0x60] sm:$0xff]
    %v253 = vld [vmem:[#allocation2 + $0x68] sm:$0xff]
    %v254 = vld [vmem:[#allocation2 + $0x70] sm:$0xff]
    %v255 = vld [vmem:[#allocation2 + $0x78] sm:$0xff]
    %v256 = vld [vmem:[#allocation2 + $0x80] sm:$0xff]
    %v257 = vld [vmem:[#allocation2 + $0x88] sm:$0xff]
    %v258 = vld [vmem:[#allocation2 + $0x90] sm:$0xff]
    %v259 = vld [vmem:[#allocation2 + $0x98] sm:$0xff]
    %v260 = vld [vmem:[#allocation2 + $0xa0] sm:$0xff]
    %v261 = vld [vmem:[#allocation2 + $0xa8] sm:$0xff]
    %v262 = vld [vmem:[#allocation2 + $0xb0] sm:$0xff]
    %v263 = vld [vmem:[#allocation2 + $0xb8] sm:$0xff]
    %v264 = vld [vmem:[#allocation2 + $0xc0] sm:$0xff]
    %v265 = vld [vmem:[#allocation2 + $0xc8] sm:$0xff]
    %v266 = vld [vmem:[#allocation2 + $0xd0] sm:$0xff]
    %v267 = vld [vmem:[#allocation2 + $0xd8] sm:$0xff]
    %v268 = vld [vmem:[#allocation2 + $0xe0] sm:$0xff]
    %v269 = vld [vmem:[#allocation2 + $0xe8] sm:$0xff]
    %v270 = vld [vmem:[#allocation2 + $0xf0] sm:$0xff]
    %v271 = vld [vmem:[#allocation2 + $0xf8] sm:$0xff]
    %v272 = vld [vmem:[#allocation2 + $0x100] sm:$0xff]
    %v273 = vld [vmem:[#allocation2 + $0x108] sm:$0xff]
    %v274 = vld [vmem:[#allocation2 + $0x110] sm:$0xff]
    %v275 = vld [vmem:[#allocation2 + $0x118] sm:$0xff]
    %v276 = vld [vmem:[#allocation2 + $0x120] sm:$0xff]
    %v277 = vld [vmem:[#allocation2 + $0x128] sm:$0xff]
    %v278 = vld [vmem:[#allocation2 + $0x130] sm:$0xff]
    %v279 = vld [vmem:[#allocation2 + $0x138] sm:$0xff]
    %v280 = vld [vmem:[#allocation2 + $0x140] sm:$0xff]
    %v281 = vld [vmem:[#allocation2 + $0x148] sm:$0xff]
    %v282 = vld [vmem:[#allocation2 + $0x150] sm:$0xff]
    %v283 = vld [vmem:[#allocation2 + $0x158] sm:$0xff]
    %v284 = vld [vmem:[#allocation2 + $0x160] sm:$0xff]
    %v285 = vld [vmem:[#allocation2 + $0x168] sm:$0xff]
    %v286 = vld [vmem:[#allocation2 + $0x170] sm:$0xff]
    %v287 = vld [vmem:[#allocation2 + $0x178] sm:$0xff]
    %v288 = vld [vmem:[#allocation2 + $0x180] sm:$0xff]
    %v289 = vld [vmem:[#allocation2 + $0x188] sm:$0xff]
    %v290 = vld [vmem:[#allocation2 + $0x190] sm:$0xff]
    %v291 = vld [vmem:[#allocation2 + $0x198] sm:$0xff]
    %v292 = vld [vmem:[#allocation2 + $0x1a0] sm:$0xff]
    %v293 = vld [vmem:[#allocation2 + $0x1a8] sm:$0xff]
    %v294 = vld [vmem:[#allocation2 + $0x1b0] sm:$0xff]
    %v295 = vld [vmem:[#allocation2 + $0x1b8] sm:$0xff]
    %v296 = vld [vmem:[#allocation2 + $0x1c0] sm:$0xff]
    %v297 = vld [vmem:[#allocation2 + $0x1c8] sm:$0xff]
    %v298 = vld [vmem:[#allocation2 + $0x1d0] sm:$0xff]
    %v299 = vld [vmem:[#allocation2 + $0x1d8] sm:$0xff]
    %v300 = vld [vmem:[#allocation2 + $0x1e0] sm:$0xff]
    %v301 = vld [vmem:[#allocation2 + $0x1e8] sm:$0xff]
    %v302 = vld [vmem:[#allocation2 + $0x1f0] sm:$0xff]
    %v303 = vld [vmem:[#allocation2 + $0x1f8] sm:$0xff]
    %v304 = vld [vmem:[#allocation2 + $0x200] sm:$0xff]
    %v305 = vld [vmem:[#allocation2 + $0x208] sm:$0xff]
    %v306 = vld [vmem:[#allocation2 + $0x210] sm:$0xff]
    %v307 = vld [vmem:[#allocation2 + $0x218] sm:$0xff]
    %v308 = vld [vmem:[#allocation2 + $0x220] sm:$0xff]
    %v309 = vld [vmem:[#allocation2 + $0x228] sm:$0xff]
    %v310 = vld [vmem:[#allocation2 + $0x230] sm:$0xff]
    %v311 = vld [vmem:[#allocation2 + $0x238] sm:$0xff]
    %v312 = vld [vmem:[#allocation2 + $0x240] sm:$0xff]
    %v313 = vld [vmem:[#allocation2 + $0x248] sm:$0xff]
    %v314 = vld [vmem:[#allocation2 + $0x250] sm:$0xff]
    %v315 = vld [vmem:[#allocation2 + $0x258] sm:$0xff]
    %v316 = vld [vmem:[#allocation2 + $0x260] sm:$0xff]
    %v317 = vld [vmem:[#allocation2 + $0x268] sm:$0xff]
    %v318 = vld [vmem:[#allocation2 + $0x270] sm:$0xff]
    %v319 = vld [vmem:[#allocation2 + $0x278] sm:$0xff]
    %v320 = vld [vmem:[#allocation2 + $0x280] sm:$0xff]
    %v321 = vld [vmem:[#allocation2 + $0x288] sm:$0xff]
    %v322 = vld [vmem:[#allocation2 + $0x290] sm:$0xff]
    %v323 = vld [vmem:[#allocation2 + $0x298] sm:$0xff]
    %v324 = vld [vmem:[#allocation2 + $0x2a0] sm:$0xff]
    %v325 = vld [vmem:[#allocation2 + $0x2a8] sm:$0xff]
    %v326 = vld [vmem:[#allocation2 + $0x2b0] sm:$0xff]
    %v327 = vld [vmem:[#allocation2 + $0x2b8] sm:$0xff]
    %v328 = vld [vmem:[#allocation2 + $0x2c0] sm:$0xff]
    %v329 = vld [vmem:[#allocation2 + $0x2c8] sm:$0xff]
    %v330 = vld [vmem:[#allocation2 + $0x2d0] sm:$0xff]
    %v331 = vld [vmem:[#allocation2 + $0x2d8] sm:$0xff]
    %v332 = vld [vmem:[#allocation2 + $0x2e0] sm:$0xff]
    %v333 = vld [vmem:[#allocation2 + $0x2e8] sm:$0xff]
    %v334 = vld [vmem:[#allocation2 + $0x2f0] sm:$0xff]
    %v335 = vld [vmem:[#allocation2 + $0x2f8] sm:$0xff]
    %v336 = vld [vmem:[#allocation2 + $0x300] sm:$0xff]
    %v337 = vld [vmem:[#allocation2 + $0x308] sm:$0xff]
    %v338 = vld [vmem:[#allocation2 + $0x310] sm:$0xff]
    %v339 = vld [vmem:[#allocation2 + $0x318] sm:$0xff]
    %v340 = vld [vmem:[#allocation2 + $0x320] sm:$0xff]
    %v341 = vld [vmem:[#allocation2 + $0x328] sm:$0xff]
    %v342 = vld [vmem:[#allocation2 + $0x330] sm:$0xff]
    %v343 = vld [vmem:[#allocation2 + $0x338] sm:$0xff]
    %v344 = vld [vmem:[#allocation2 + $0x340] sm:$0xff]
    %v345 = vld [vmem:[#allocation2 + $0x348] sm:$0xff]
    %v346 = vld [vmem:[#allocation2 + $0x350] sm:$0xff]
    %v347 = vld [vmem:[#allocation2 + $0x358] sm:$0xff]
    %v348 = vld [vmem:[#allocation2 + $0x360] sm:$0xff]
    %v349 = vld [vmem:[#allocation2 + $0x368] sm:$0xff]
    %v350 = vld [vmem:[#allocation2 + $0x370] sm:$0xff]
    %v351 = vld [vmem:[#allocation2 + $0x378] sm:$0xff]
    %v352 = vld [vmem:[#allocation2 + $0x380] sm:$0xff]
    %v353 = vld [vmem:[#allocation2 + $0x388] sm:$0xff]
    %v354 = vld [vmem:[#allocation2 + $0x390] sm:$0xff]
    %v355 = vld [vmem:[#allocation2 + $0x398] sm:$0xff]
    %v356 = vld [vmem:[#allocation2 + $0x3a0] sm:$0xff]
    %v357 = vld [vmem:[#allocation2 + $0x3a8] sm:$0xff]
    %v358 = vld [vmem:[#allocation2 + $0x3b0] sm:$0xff]
    %v359 = vld [vmem:[#allocation2 + $0x3b8] sm:$0xff]
    %v360 = vld [vmem:[#allocation2 + $0x3c0] sm:$0xff]
    %v361 = vld [vmem:[#allocation2 + $0x3c8] sm:$0xff]
    %v362 = vld [vmem:[#allocation2 + $0x3d0] sm:$0xff]
    %v363 = vld [vmem:[#allocation2 + $0x3d8] sm:$0xff]
    %v364 = vld [vmem:[#allocation2 + $0x3e0] sm:$0xff]
    %v365 = vld [vmem:[#allocation2 + $0x3e8] sm:$0xff]
    %v366 = vld [vmem:[#allocation2 + $0x3f0] sm:$0xff]
    %v367 = vld [vmem:[#allocation2 + $0x3f8] sm:$0xff]
    %v368 = vld [vmem:[#allocation2 + $0x400] sm:$0xff]
    %v369 = vld [vmem:[#allocation2 + $0x408] sm:$0xff]
    %v370 = vld [vmem:[#allocation2 + $0x410] sm:$0xff]
    %v371 = vld [vmem:[#allocation2 + $0x418] sm:$0xff]
    %v372 = vld [vmem:[#allocation2 + $0x420] sm:$0xff]
    %v373 = vld [vmem:[#allocation2 + $0x428] sm:$0xff]
    %v374 = vld [vmem:[#allocation2 + $0x430] sm:$0xff]
    %v375 = vld [vmem:[#allocation2 + $0x438] sm:$0xff]
    %v376 = vld [vmem:[#allocation2 + $0x440] sm:$0xff]
    %v377 = vld [vmem:[#allocation2 + $0x448] sm:$0xff]
    %v378 = vld [vmem:[#allocation2 + $0x450] sm:$0xff]
    %v379 = vld [vmem:[#allocation2 + $0x458] sm:$0xff]
    %v380 = vld [vmem:[#allocation2 + $0x460] sm:$0xff]
    %v381 = vld [vmem:[#allocation2 + $0x468] sm:$0xff]
    %v382 = vld [vmem:[#allocation2 + $0x470] sm:$0xff]
    %v383 = vld [vmem:[#allocation2 + $0x478] sm:$0xff]
    %v384 = vld [vmem:[#allocation2 + $0x480] sm:$0xff]
    %v385 = vld [vmem:[#allocation2 + $0x488] sm:$0xff]
    %v386 = vld [vmem:[#allocation2 + $0x490] sm:$0xff]
    %v387 = vld [vmem:[#allocation2 + $0x498] sm:$0xff]
    %v388 = vld [vmem:[#allocation2 + $0x4a0] sm:$0xff]
    %v389 = vld [vmem:[#allocation2 + $0x4a8] sm:$0xff]
    %v390 = vld [vmem:[#allocation2 + $0x4b0] sm:$0xff]
    %v391 = vld [vmem:[#allocation2 + $0x4b8] sm:$0xff]
    %v392 = vld [vmem:[#allocation2 + $0x4c0] sm:$0xff]
    %v393 = vld [vmem:[#allocation2 + $0x4c8] sm:$0xff]
    %v394 = vld [vmem:[#allocation2 + $0x4d0] sm:$0xff]
    %v395 = vld [vmem:[#allocation2 + $0x4d8] sm:$0xff]
    %v396 = vld [vmem:[#allocation2 + $0x4e0] sm:$0xff]
    %v397 = vld [vmem:[#allocation2 + $0x4e8] sm:$0xff]
    %v398 = vld [vmem:[#allocation2 + $0x4f0] sm:$0xff]
    %v399 = vld [vmem:[#allocation2 + $0x4f8] sm:$0xff]
    %v400 = vld [vmem:[#allocation2 + $0x500] sm:$0xff]
    %v401 = vld [vmem:[#allocation2 + $0x508] sm:$0xff]
    %v402 = vld [vmem:[#allocation2 + $0x510] sm:$0xff]
    %v403 = vld [vmem:[#allocation2 + $0x518] sm:$0xff]
    %v404 = vld [vmem:[#allocation2 + $0x520] sm:$0xff]
    %v405 = vld [vmem:[#allocation2 + $0x528] sm:$0xff]
    %v406 = vld [vmem:[#allocation2 + $0x530] sm:$0xff]
    %v407 = vld [vmem:[#allocation2 + $0x538] sm:$0xff]
    %v408 = vld [vmem:[#allocation2 + $0x540] sm:$0xff]
    %v409 = vld [vmem:[#allocation2 + $0x548] sm:$0xff]
    %v410 = vld [vmem:[#allocation2 + $0x550] sm:$0xff]
    %v411 = vld [vmem:[#allocation2 + $0x558] sm:$0xff]
    %v412 = vld [vmem:[#allocation2 + $0x560] sm:$0xff]
    %v413 = vld [vmem:[#allocation2 + $0x568] sm:$0xff]
    %v414 = vld [vmem:[#allocation2 + $0x570] sm:$0xff]
    %v415 = vld [vmem:[#allocation2 + $0x578] sm:$0xff]
    %v416 = vld [vmem:[#allocation2 + $0x580] sm:$0xff]
    %v417 = vld [vmem:[#allocation2 + $0x588] sm:$0xff]
    %v418 = vld [vmem:[#allocation2 + $0x590] sm:$0xff]
    %v419 = vld [vmem:[#allocation2 + $0x598] sm:$0xff]
    %v420 = vld [vmem:[#allocation2 + $0x5a0] sm:$0xff]
    %v421 = vld [vmem:[#allocation2 + $0x5a8] sm:$0xff]
    %v422 = vld [vmem:[#allocation2 + $0x5b0] sm:$0xff]
    %v423 = vld [vmem:[#allocation2 + $0x5b8] sm:$0xff]
    %v424 = vld [vmem:[#allocation2 + $0x5c0] sm:$0xff]
    %v425 = vld [vmem:[#allocation2 + $0x5c8] sm:$0xff]
    %v426 = vld [vmem:[#allocation2 + $0x5d0] sm:$0xff]
    %v427 = vld [vmem:[#allocation2 + $0x5d8] sm:$0xff]
    %v428 = vld [vmem:[#allocation2 + $0x5e0] sm:$0xff]
    %v429 = vld [vmem:[#allocation2 + $0x5e8] sm:$0xff]
    %v430 = vld [vmem:[#allocation2 + $0x5f0] sm:$0xff]
    %v431 = vld [vmem:[#allocation2 + $0x5f8] sm:$0xff]
    %v432 = vld [vmem:[#allocation2 + $0x600] sm:$0xff]
    %v433 = vld [vmem:[#allocation2 + $0x608] sm:$0xff]
    %v434 = vld [vmem:[#allocation2 + $0x610] sm:$0xff]
    %v435 = vld [vmem:[#allocation2 + $0x618] sm:$0xff]
    %v436 = vld [vmem:[#allocation2 + $0x620] sm:$0xff]
    %v437 = vld [vmem:[#allocation2 + $0x628] sm:$0xff]
    %v438 = vld [vmem:[#allocation2 + $0x630] sm:$0xff]
    %v439 = vld [vmem:[#allocation2 + $0x638] sm:$0xff]
    %v440 = vld [vmem:[#allocation2 + $0x640] sm:$0xff]
    %v441 = vld [vmem:[#allocation2 + $0x648] sm:$0xff]
    %v442 = vld [vmem:[#allocation2 + $0x650] sm:$0xff]
    %v443 = vld [vmem:[#allocation2 + $0x658] sm:$0xff]
    %v444 = vld [vmem:[#allocation2 + $0x660] sm:$0xff]
    %v445 = vld [vmem:[#allocation2 + $0x668] sm:$0xff]
    %v446 = vld [vmem:[#allocation2 + $0x670] sm:$0xff]
    %v447 = vld [vmem:[#allocation2 + $0x678] sm:$0xff]
    %v448 = vld [vmem:[#allocation2 + $0x680] sm:$0xff]
    %v449 = vld [vmem:[#allocation2 + $0x688] sm:$0xff]
    %v450 = vld [vmem:[#allocation2 + $0x690] sm:$0xff]
    %v451 = vld [vmem:[#allocation2 + $0x698] sm:$0xff]
    %v452 = vld [vmem:[#allocation2 + $0x6a0] sm:$0xff]
    %v453 = vld [vmem:[#allocation2 + $0x6a8] sm:$0xff]
    %v454 = vld [vmem:[#allocation2 + $0x6b0] sm:$0xff]
    %v455 = vld [vmem:[#allocation2 + $0x6b8] sm:$0xff]
    %v456 = vld [vmem:[#allocation2 + $0x6c0] sm:$0xff]
    %v457 = vld [vmem:[#allocation2 + $0x6c8] sm:$0xff]
    %v458 = vld [vmem:[#allocation2 + $0x6d0] sm:$0xff]
    %v459 = vld [vmem:[#allocation2 + $0x6d8] sm:$0xff]
    %v460 = vld [vmem:[#allocation2 + $0x6e0] sm:$0xff]
    %v461 = vld [vmem:[#allocation2 + $0x6e8] sm:$0xff]
    %v462 = vld [vmem:[#allocation2 + $0x6f0] sm:$0xff]
    %v463 = vld [vmem:[#allocation2 + $0x6f8] sm:$0xff]
    %v464 = vld [vmem:[#allocation2 + $0x700] sm:$0xff]
    %v465 = vld [vmem:[#allocation2 + $0x708] sm:$0xff]
    %v466 = vld [vmem:[#allocation2 + $0x710] sm:$0xff]
    %v467 = vld [vmem:[#allocation2 + $0x718] sm:$0xff]
    %v468 = vld [vmem:[#allocation2 + $0x720] sm:$0xff]
    %v469 = vld [vmem:[#allocation2 + $0x728] sm:$0xff]
    %v470 = vld [vmem:[#allocation2 + $0x730] sm:$0xff]
    %v471 = vld [vmem:[#allocation2 + $0x738] sm:$0xff]
    %v472 = vld [vmem:[#allocation2 + $0x740] sm:$0xff]
    %v473 = vld [vmem:[#allocation2 + $0x748] sm:$0xff]
    %v474 = vld [vmem:[#allocation2 + $0x750] sm:$0xff]
    %v475 = vld [vmem:[#allocation2 + $0x758] sm:$0xff]
    %v476 = vld [vmem:[#allocation2 + $0x760] sm:$0xff]
    %v477 = vld [vmem:[#allocation2 + $0x768] sm:$0xff]
    %v478 = vld [vmem:[#allocation2 + $0x770] sm:$0xff]
    %v479 = vld [vmem:[#allocation2 + $0x778] sm:$0xff]
    %v480 = vld [vmem:[#allocation2 + $0x780] sm:$0xff]
    %v481 = vld [vmem:[#allocation2 + $0x788] sm:$0xff]
    %v482 = vld [vmem:[#allocation2 + $0x790] sm:$0xff]
    %v483 = vld [vmem:[#allocation2 + $0x798] sm:$0xff]
    %v484 = vld [vmem:[#allocation2 + $0x7a0] sm:$0xff]
    %v485 = vld [vmem:[#allocation2 + $0x7a8] sm:$0xff]
    %v486 = vld [vmem:[#allocation2 + $0x7b0] sm:$0xff]
    %v487 = vld [vmem:[#allocation2 + $0x7b8] sm:$0xff]
    %v488 = vld [vmem:[#allocation2 + $0x7c0] sm:$0xff]
    %v489 = vld [vmem:[#allocation2 + $0x7c8] sm:$0xff]
    %v490 = vld [vmem:[#allocation2 + $0x7d0] sm:$0xff]
    %v491 = vld [vmem:[#allocation2 + $0x7d8] sm:$0xff]
    %v492 = vld [vmem:[#allocation2 + $0x7e0] sm:$0xff]
    %v493 = vld [vmem:[#allocation2 + $0x7e8] sm:$0xff]
    %v494 = vld [vmem:[#allocation2 + $0x7f0] sm:$0xff]
    %v495 = vld [vmem:[#allocation2 + $0x7f8] sm:$0xff]
    %v498 = vlaneseq
    %v499 = vshrl.u32 %v498, 7
    %v500 = vsub.s32 0, %v499
    %v501 = vrot.slane %v222, %v500
    %v502 = vlaneseq
    %v503 = vshrl.u32 %v502, 7
    %v504 = vsub.s32 4, %v503
    %v505 = vrot.slane %v222, %v504
    %v506 = vlaneseq
    %v507 = vshrl.u32 %v506, 7
    %v508 = vsub.s32 0, %v507
    %v509 = vrot.slane %v223, %v508
    %v510 = vlaneseq
    %v511 = vshrl.u32 %v510, 7
    %v512 = vsub.s32 4, %v511
    %v513 = vrot.slane %v223, %v512
    %v518 = vlaneseq
    %v519 = vshrl.u32 %v518, 7
    %v520 = vsub.s32 0, %v519
    %v521 = vrot.slane %v501, %v520
    %v522 = vlaneseq
    %v523 = vshrl.u32 %v522, 7
    %v524 = vsub.s32 0, %v523
    %v525 = vrot.slane %v505, %v524
    %v526 = vlaneseq
    %v527 = vshrl.u32 %v526, 7
    %v528 = vsub.s32 0, %v527
    %v529 = vrot.slane %v509, %v528
    %v530 = vlaneseq
    %v531 = vshrl.u32 %v530, 7
    %v532 = vsub.s32 0, %v531
    %v533 = vrot.slane %v513, %v532
    %v790 = vunpack.c.l.b16 %v240
    %v791 = vunpack.c.h.b16 %v240
    %v792 = vunpack.c.l.b16 %v241
    %v793 = vunpack.c.h.b16 %v241
    %v794 = vunpack.c.l.b16 %v242
    %v795 = vunpack.c.h.b16 %v242
    %v796 = vunpack.c.l.b16 %v243
    %v797 = vunpack.c.h.b16 %v243
    %v798 = vunpack.c.l.b16 %v244
    %v799 = vunpack.c.h.b16 %v244
    %v800 = vunpack.c.l.b16 %v245
    %v801 = vunpack.c.h.b16 %v245
    %v802 = vunpack.c.l.b16 %v246
    %v803 = vunpack.c.h.b16 %v246
    %v804 = vunpack.c.l.b16 %v247
    %v805 = vunpack.c.h.b16 %v247
    %v806 = vunpack.c.l.b16 %v248
    %v807 = vunpack.c.h.b16 %v248
    %v808 = vunpack.c.l.b16 %v249
    %v809 = vunpack.c.h.b16 %v249
    %v810 = vunpack.c.l.b16 %v250
    %v811 = vunpack.c.h.b16 %v250
    %v812 = vunpack.c.l.b16 %v251
    %v813 = vunpack.c.h.b16 %v251
    %v814 = vunpack.c.l.b16 %v252
    %v815 = vunpack.c.h.b16 %v252
    %v816 = vunpack.c.l.b16 %v253
    %v817 = vunpack.c.h.b16 %v253
    %v818 = vunpack.c.l.b16 %v254
    %v819 = vunpack.c.h.b16 %v254
    %v820 = vunpack.c.l.b16 %v255
    %v821 = vunpack.c.h.b16 %v255
    %v822 = vunpack.c.l.b16 %v256
    %v823 = vunpack.c.h.b16 %v256
    %v824 = vunpack.c.l.b16 %v257
    %v825 = vunpack.c.h.b16 %v257
    %v826 = vunpack.c.l.b16 %v258
    %v827 = vunpack.c.h.b16 %v258
    %v828 = vunpack.c.l.b16 %v259
    %v829 = vunpack.c.h.b16 %v259
    %v830 = vunpack.c.l.b16 %v260
    %v831 = vunpack.c.h.b16 %v260
    %v832 = vunpack.c.l.b16 %v261
    %v833 = vunpack.c.h.b16 %v261
    %v834 = vunpack.c.l.b16 %v262
    %v835 = vunpack.c.h.b16 %v262
    %v836 = vunpack.c.l.b16 %v263
    %v837 = vunpack.c.h.b16 %v263
    %v838 = vunpack.c.l.b16 %v264
    %v839 = vunpack.c.h.b16 %v264
    %v840 = vunpack.c.l.b16 %v265
    %v841 = vunpack.c.h.b16 %v265
    %v842 = vunpack.c.l.b16 %v266
    %v843 = vunpack.c.h.b16 %v266
    %v844 = vunpack.c.l.b16 %v267
    %v845 = vunpack.c.h.b16 %v267
    %v846 = vunpack.c.l.b16 %v268
    %v847 = vunpack.c.h.b16 %v268
    %v848 = vunpack.c.l.b16 %v269
    %v849 = vunpack.c.h.b16 %v269
    %v850 = vunpack.c.l.b16 %v270
    %v851 = vunpack.c.h.b16 %v270
    %v852 = vunpack.c.l.b16 %v271
    %v853 = vunpack.c.h.b16 %v271
    %v854 = vunpack.c.l.b16 %v272
    %v855 = vunpack.c.h.b16 %v272
    %v856 = vunpack.c.l.b16 %v273
    %v857 = vunpack.c.h.b16 %v273
    %v858 = vunpack.c.l.b16 %v274
    %v859 = vunpack.c.h.b16 %v274
    %v860 = vunpack.c.l.b16 %v275
    %v861 = vunpack.c.h.b16 %v275
    %v862 = vunpack.c.l.b16 %v276
    %v863 = vunpack.c.h.b16 %v276
    %v864 = vunpack.c.l.b16 %v277
    %v865 = vunpack.c.h.b16 %v277
    %v866 = vunpack.c.l.b16 %v278
    %v867 = vunpack.c.h.b16 %v278
    %v868 = vunpack.c.l.b16 %v279
    %v869 = vunpack.c.h.b16 %v279
    %v870 = vunpack.c.l.b16 %v280
    %v871 = vunpack.c.h.b16 %v280
    %v872 = vunpack.c.l.b16 %v281
    %v873 = vunpack.c.h.b16 %v281
    %v874 = vunpack.c.l.b16 %v282
    %v875 = vunpack.c.h.b16 %v282
    %v876 = vunpack.c.l.b16 %v283
    %v877 = vunpack.c.h.b16 %v283
    %v878 = vunpack.c.l.b16 %v284
    %v879 = vunpack.c.h.b16 %v284
    %v880 = vunpack.c.l.b16 %v285
    %v881 = vunpack.c.h.b16 %v285
    %v882 = vunpack.c.l.b16 %v286
    %v883 = vunpack.c.h.b16 %v286
    %v884 = vunpack.c.l.b16 %v287
    %v885 = vunpack.c.h.b16 %v287
    %v886 = vunpack.c.l.b16 %v288
    %v887 = vunpack.c.h.b16 %v288
    %v888 = vunpack.c.l.b16 %v289
    %v889 = vunpack.c.h.b16 %v289
    %v890 = vunpack.c.l.b16 %v290
    %v891 = vunpack.c.h.b16 %v290
    %v892 = vunpack.c.l.b16 %v291
    %v893 = vunpack.c.h.b16 %v291
    %v894 = vunpack.c.l.b16 %v292
    %v895 = vunpack.c.h.b16 %v292
    %v896 = vunpack.c.l.b16 %v293
    %v897 = vunpack.c.h.b16 %v293
    %v898 = vunpack.c.l.b16 %v294
    %v899 = vunpack.c.h.b16 %v294
    %v900 = vunpack.c.l.b16 %v295
    %v901 = vunpack.c.h.b16 %v295
    %v902 = vunpack.c.l.b16 %v296
    %v903 = vunpack.c.h.b16 %v296
    %v904 = vunpack.c.l.b16 %v297
    %v905 = vunpack.c.h.b16 %v297
    %v906 = vunpack.c.l.b16 %v298
    %v907 = vunpack.c.h.b16 %v298
    %v908 = vunpack.c.l.b16 %v299
    %v909 = vunpack.c.h.b16 %v299
    %v910 = vunpack.c.l.b16 %v300
    %v911 = vunpack.c.h.b16 %v300
    %v912 = vunpack.c.l.b16 %v301
    %v913 = vunpack.c.h.b16 %v301
    %v914 = vunpack.c.l.b16 %v302
    %v915 = vunpack.c.h.b16 %v302
    %v916 = vunpack.c.l.b16 %v303
    %v917 = vunpack.c.h.b16 %v303
    %v918 = vunpack.c.l.b16 %v304
    %v919 = vunpack.c.h.b16 %v304
    %v920 = vunpack.c.l.b16 %v305
    %v921 = vunpack.c.h.b16 %v305
    %v922 = vunpack.c.l.b16 %v306
    %v923 = vunpack.c.h.b16 %v306
    %v924 = vunpack.c.l.b16 %v307
    %v925 = vunpack.c.h.b16 %v307
    %v926 = vunpack.c.l.b16 %v308
    %v927 = vunpack.c.h.b16 %v308
    %v928 = vunpack.c.l.b16 %v309
    %v929 = vunpack.c.h.b16 %v309
    %v930 = vunpack.c.l.b16 %v310
    %v931 = vunpack.c.h.b16 %v310
    %v932 = vunpack.c.l.b16 %v311
    %v933 = vunpack.c.h.b16 %v311
    %v934 = vunpack.c.l.b16 %v312
    %v935 = vunpack.c.h.b16 %v312
    %v936 = vunpack.c.l.b16 %v313
    %v937 = vunpack.c.h.b16 %v313
    %v938 = vunpack.c.l.b16 %v314
    %v939 = vunpack.c.h.b16 %v314
    %v940 = vunpack.c.l.b16 %v315
    %v941 = vunpack.c.h.b16 %v315
    %v942 = vunpack.c.l.b16 %v316
    %v943 = vunpack.c.h.b16 %v316
    %v944 = vunpack.c.l.b16 %v317
    %v945 = vunpack.c.h.b16 %v317
    %v946 = vunpack.c.l.b16 %v318
    %v947 = vunpack.c.h.b16 %v318
    %v948 = vunpack.c.l.b16 %v319
    %v949 = vunpack.c.h.b16 %v319
    %v950 = vunpack.c.l.b16 %v320
    %v951 = vunpack.c.h.b16 %v320
    %v952 = vunpack.c.l.b16 %v321
    %v953 = vunpack.c.h.b16 %v321
    %v954 = vunpack.c.l.b16 %v322
    %v955 = vunpack.c.h.b16 %v322
    %v956 = vunpack.c.l.b16 %v323
    %v957 = vunpack.c.h.b16 %v323
    %v958 = vunpack.c.l.b16 %v324
    %v959 = vunpack.c.h.b16 %v324
    %v960 = vunpack.c.l.b16 %v325
    %v961 = vunpack.c.h.b16 %v325
    %v962 = vunpack.c.l.b16 %v326
    %v963 = vunpack.c.h.b16 %v326
    %v964 = vunpack.c.l.b16 %v327
    %v965 = vunpack.c.h.b16 %v327
    %v966 = vunpack.c.l.b16 %v328
    %v967 = vunpack.c.h.b16 %v328
    %v968 = vunpack.c.l.b16 %v329
    %v969 = vunpack.c.h.b16 %v329
    %v970 = vunpack.c.l.b16 %v330
    %v971 = vunpack.c.h.b16 %v330
    %v972 = vunpack.c.l.b16 %v331
    %v973 = vunpack.c.h.b16 %v331
    %v974 = vunpack.c.l.b16 %v332
    %v975 = vunpack.c.h.b16 %v332
    %v976 = vunpack.c.l.b16 %v333
    %v977 = vunpack.c.h.b16 %v333
    %v978 = vunpack.c.l.b16 %v334
    %v979 = vunpack.c.h.b16 %v334
    %v980 = vunpack.c.l.b16 %v335
    %v981 = vunpack.c.h.b16 %v335
    %v982 = vunpack.c.l.b16 %v336
    %v983 = vunpack.c.h.b16 %v336
    %v984 = vunpack.c.l.b16 %v337
    %v985 = vunpack.c.h.b16 %v337
    %v986 = vunpack.c.l.b16 %v338
    %v987 = vunpack.c.h.b16 %v338
    %v988 = vunpack.c.l.b16 %v339
    %v989 = vunpack.c.h.b16 %v339
    %v990 = vunpack.c.l.b16 %v340
    %v991 = vunpack.c.h.b16 %v340
    %v992 = vunpack.c.l.b16 %v341
    %v993 = vunpack.c.h.b16 %v341
    %v994 = vunpack.c.l.b16 %v342
    %v995 = vunpack.c.h.b16 %v342
    %v996 = vunpack.c.l.b16 %v343
    %v997 = vunpack.c.h.b16 %v343
    %v998 = vunpack.c.l.b16 %v344
    %v999 = vunpack.c.h.b16 %v344
    %v1000 = vunpack.c.l.b16 %v345
    %v1001 = vunpack.c.h.b16 %v345
    %v1002 = vunpack.c.l.b16 %v346
    %v1003 = vunpack.c.h.b16 %v346
    %v1004 = vunpack.c.l.b16 %v347
    %v1005 = vunpack.c.h.b16 %v347
    %v1006 = vunpack.c.l.b16 %v348
    %v1007 = vunpack.c.h.b16 %v348
    %v1008 = vunpack.c.l.b16 %v349
    %v1009 = vunpack.c.h.b16 %v349
    %v1010 = vunpack.c.l.b16 %v350
    %v1011 = vunpack.c.h.b16 %v350
    %v1012 = vunpack.c.l.b16 %v351
    %v1013 = vunpack.c.h.b16 %v351
    %v1014 = vunpack.c.l.b16 %v352
    %v1015 = vunpack.c.h.b16 %v352
    %v1016 = vunpack.c.l.b16 %v353
    %v1017 = vunpack.c.h.b16 %v353
    %v1018 = vunpack.c.l.b16 %v354
    %v1019 = vunpack.c.h.b16 %v354
    %v1020 = vunpack.c.l.b16 %v355
    %v1021 = vunpack.c.h.b16 %v355
    %v1022 = vunpack.c.l.b16 %v356
    %v1023 = vunpack.c.h.b16 %v356
    %v1024 = vunpack.c.l.b16 %v357
    %v1025 = vunpack.c.h.b16 %v357
    %v1026 = vunpack.c.l.b16 %v358
    %v1027 = vunpack.c.h.b16 %v358
    %v1028 = vunpack.c.l.b16 %v359
    %v1029 = vunpack.c.h.b16 %v359
    %v1030 = vunpack.c.l.b16 %v360
    %v1031 = vunpack.c.h.b16 %v360
    %v1032 = vunpack.c.l.b16 %v361
    %v1033 = vunpack.c.h.b16 %v361
    %v1034 = vunpack.c.l.b16 %v362
    %v1035 = vunpack.c.h.b16 %v362
    %v1036 = vunpack.c.l.b16 %v363
    %v1037 = vunpack.c.h.b16 %v363
    %v1038 = vunpack.c.l.b16 %v364
    %v1039 = vunpack.c.h.b16 %v364
    %v1040 = vunpack.c.l.b16 %v365
    %v1041 = vunpack.c.h.b16 %v365
    %v1042 = vunpack.c.l.b16 %v366
    %v1043 = vunpack.c.h.b16 %v366
    %v1044 = vunpack.c.l.b16 %v367
    %v1045 = vunpack.c.h.b16 %v367
    %v1046 = vunpack.c.l.b16 %v368
    %v1047 = vunpack.c.h.b16 %v368
    %v1048 = vunpack.c.l.b16 %v369
    %v1049 = vunpack.c.h.b16 %v369
    %v1050 = vunpack.c.l.b16 %v370
    %v1051 = vunpack.c.h.b16 %v370
    %v1052 = vunpack.c.l.b16 %v371
    %v1053 = vunpack.c.h.b16 %v371
    %v1054 = vunpack.c.l.b16 %v372
    %v1055 = vunpack.c.h.b16 %v372
    %v1056 = vunpack.c.l.b16 %v373
    %v1057 = vunpack.c.h.b16 %v373
    %v1058 = vunpack.c.l.b16 %v374
    %v1059 = vunpack.c.h.b16 %v374
    %v1060 = vunpack.c.l.b16 %v375
    %v1061 = vunpack.c.h.b16 %v375
    %v1062 = vunpack.c.l.b16 %v376
    %v1063 = vunpack.c.h.b16 %v376
    %v1064 = vunpack.c.l.b16 %v377
    %v1065 = vunpack.c.h.b16 %v377
    %v1066 = vunpack.c.l.b16 %v378
    %v1067 = vunpack.c.h.b16 %v378
    %v1068 = vunpack.c.l.b16 %v379
    %v1069 = vunpack.c.h.b16 %v379
    %v1070 = vunpack.c.l.b16 %v380
    %v1071 = vunpack.c.h.b16 %v380
    %v1072 = vunpack.c.l.b16 %v381
    %v1073 = vunpack.c.h.b16 %v381
    %v1074 = vunpack.c.l.b16 %v382
    %v1075 = vunpack.c.h.b16 %v382
    %v1076 = vunpack.c.l.b16 %v383
    %v1077 = vunpack.c.h.b16 %v383
    %v1078 = vunpack.c.l.b16 %v384
    %v1079 = vunpack.c.h.b16 %v384
    %v1080 = vunpack.c.l.b16 %v385
    %v1081 = vunpack.c.h.b16 %v385
    %v1082 = vunpack.c.l.b16 %v386
    %v1083 = vunpack.c.h.b16 %v386
    %v1084 = vunpack.c.l.b16 %v387
    %v1085 = vunpack.c.h.b16 %v387
    %v1086 = vunpack.c.l.b16 %v388
    %v1087 = vunpack.c.h.b16 %v388
    %v1088 = vunpack.c.l.b16 %v389
    %v1089 = vunpack.c.h.b16 %v389
    %v1090 = vunpack.c.l.b16 %v390
    %v1091 = vunpack.c.h.b16 %v390
    %v1092 = vunpack.c.l.b16 %v391
    %v1093 = vunpack.c.h.b16 %v391
    %v1094 = vunpack.c.l.b16 %v392
    %v1095 = vunpack.c.h.b16 %v392
    %v1096 = vunpack.c.l.b16 %v393
    %v1097 = vunpack.c.h.b16 %v393
    %v1098 = vunpack.c.l.b16 %v394
    %v1099 = vunpack.c.h.b16 %v394
    %v1100 = vunpack.c.l.b16 %v395
    %v1101 = vunpack.c.h.b16 %v395
    %v1102 = vunpack.c.l.b16 %v396
    %v1103 = vunpack.c.h.b16 %v396
    %v1104 = vunpack.c.l.b16 %v397
    %v1105 = vunpack.c.h.b16 %v397
    %v1106 = vunpack.c.l.b16 %v398
    %v1107 = vunpack.c.h.b16 %v398
    %v1108 = vunpack.c.l.b16 %v399
    %v1109 = vunpack.c.h.b16 %v399
    %v1110 = vunpack.c.l.b16 %v400
    %v1111 = vunpack.c.h.b16 %v400
    %v1112 = vunpack.c.l.b16 %v401
    %v1113 = vunpack.c.h.b16 %v401
    %v1114 = vunpack.c.l.b16 %v402
    %v1115 = vunpack.c.h.b16 %v402
    %v1116 = vunpack.c.l.b16 %v403
    %v1117 = vunpack.c.h.b16 %v403
    %v1118 = vunpack.c.l.b16 %v404
    %v1119 = vunpack.c.h.b16 %v404
    %v1120 = vunpack.c.l.b16 %v405
    %v1121 = vunpack.c.h.b16 %v405
    %v1122 = vunpack.c.l.b16 %v406
    %v1123 = vunpack.c.h.b16 %v406
    %v1124 = vunpack.c.l.b16 %v407
    %v1125 = vunpack.c.h.b16 %v407
    %v1126 = vunpack.c.l.b16 %v408
    %v1127 = vunpack.c.h.b16 %v408
    %v1128 = vunpack.c.l.b16 %v409
    %v1129 = vunpack.c.h.b16 %v409
    %v1130 = vunpack.c.l.b16 %v410
    %v1131 = vunpack.c.h.b16 %v410
    %v1132 = vunpack.c.l.b16 %v411
    %v1133 = vunpack.c.h.b16 %v411
    %v1134 = vunpack.c.l.b16 %v412
    %v1135 = vunpack.c.h.b16 %v412
    %v1136 = vunpack.c.l.b16 %v413
    %v1137 = vunpack.c.h.b16 %v413
    %v1138 = vunpack.c.l.b16 %v414
    %v1139 = vunpack.c.h.b16 %v414
    %v1140 = vunpack.c.l.b16 %v415
    %v1141 = vunpack.c.h.b16 %v415
    %v1142 = vunpack.c.l.b16 %v416
    %v1143 = vunpack.c.h.b16 %v416
    %v1144 = vunpack.c.l.b16 %v417
    %v1145 = vunpack.c.h.b16 %v417
    %v1146 = vunpack.c.l.b16 %v418
    %v1147 = vunpack.c.h.b16 %v418
    %v1148 = vunpack.c.l.b16 %v419
    %v1149 = vunpack.c.h.b16 %v419
    %v1150 = vunpack.c.l.b16 %v420
    %v1151 = vunpack.c.h.b16 %v420
    %v1152 = vunpack.c.l.b16 %v421
    %v1153 = vunpack.c.h.b16 %v421
    %v1154 = vunpack.c.l.b16 %v422
    %v1155 = vunpack.c.h.b16 %v422
    %v1156 = vunpack.c.l.b16 %v423
    %v1157 = vunpack.c.h.b16 %v423
    %v1158 = vunpack.c.l.b16 %v424
    %v1159 = vunpack.c.h.b16 %v424
    %v1160 = vunpack.c.l.b16 %v425
    %v1161 = vunpack.c.h.b16 %v425
    %v1162 = vunpack.c.l.b16 %v426
    %v1163 = vunpack.c.h.b16 %v426
    %v1164 = vunpack.c.l.b16 %v427
    %v1165 = vunpack.c.h.b16 %v427
    %v1166 = vunpack.c.l.b16 %v428
    %v1167 = vunpack.c.h.b16 %v428
    %v1168 = vunpack.c.l.b16 %v429
    %v1169 = vunpack.c.h.b16 %v429
    %v1170 = vunpack.c.l.b16 %v430
    %v1171 = vunpack.c.h.b16 %v430
    %v1172 = vunpack.c.l.b16 %v431
    %v1173 = vunpack.c.h.b16 %v431
    %v1174 = vunpack.c.l.b16 %v432
    %v1175 = vunpack.c.h.b16 %v432
    %v1176 = vunpack.c.l.b16 %v433
    %v1177 = vunpack.c.h.b16 %v433
    %v1178 = vunpack.c.l.b16 %v434
    %v1179 = vunpack.c.h.b16 %v434
    %v1180 = vunpack.c.l.b16 %v435
    %v1181 = vunpack.c.h.b16 %v435
    %v1182 = vunpack.c.l.b16 %v436
    %v1183 = vunpack.c.h.b16 %v436
    %v1184 = vunpack.c.l.b16 %v437
    %v1185 = vunpack.c.h.b16 %v437
    %v1186 = vunpack.c.l.b16 %v438
    %v1187 = vunpack.c.h.b16 %v438
    %v1188 = vunpack.c.l.b16 %v439
    %v1189 = vunpack.c.h.b16 %v439
    %v1190 = vunpack.c.l.b16 %v440
    %v1191 = vunpack.c.h.b16 %v440
    %v1192 = vunpack.c.l.b16 %v441
    %v1193 = vunpack.c.h.b16 %v441
    %v1194 = vunpack.c.l.b16 %v442
    %v1195 = vunpack.c.h.b16 %v442
    %v1196 = vunpack.c.l.b16 %v443
    %v1197 = vunpack.c.h.b16 %v443
    %v1198 = vunpack.c.l.b16 %v444
    %v1199 = vunpack.c.h.b16 %v444
    %v1200 = vunpack.c.l.b16 %v445
    %v1201 = vunpack.c.h.b16 %v445
    %v1202 = vunpack.c.l.b16 %v446
    %v1203 = vunpack.c.h.b16 %v446
    %v1204 = vunpack.c.l.b16 %v447
    %v1205 = vunpack.c.h.b16 %v447
    %v1206 = vunpack.c.l.b16 %v448
    %v1207 = vunpack.c.h.b16 %v448
    %v1208 = vunpack.c.l.b16 %v449
    %v1209 = vunpack.c.h.b16 %v449
    %v1210 = vunpack.c.l.b16 %v450
    %v1211 = vunpack.c.h.b16 %v450
    %v1212 = vunpack.c.l.b16 %v451
    %v1213 = vunpack.c.h.b16 %v451
    %v1214 = vunpack.c.l.b16 %v452
    %v1215 = vunpack.c.h.b16 %v452
    %v1216 = vunpack.c.l.b16 %v453
    %v1217 = vunpack.c.h.b16 %v453
    %v1218 = vunpack.c.l.b16 %v454
    %v1219 = vunpack.c.h.b16 %v454
    %v1220 = vunpack.c.l.b16 %v455
    %v1221 = vunpack.c.h.b16 %v455
    %v1222 = vunpack.c.l.b16 %v456
    %v1223 = vunpack.c.h.b16 %v456
    %v1224 = vunpack.c.l.b16 %v457
    %v1225 = vunpack.c.h.b16 %v457
    %v1226 = vunpack.c.l.b16 %v458
    %v1227 = vunpack.c.h.b16 %v458
    %v1228 = vunpack.c.l.b16 %v459
    %v1229 = vunpack.c.h.b16 %v459
    %v1230 = vunpack.c.l.b16 %v460
    %v1231 = vunpack.c.h.b16 %v460
    %v1232 = vunpack.c.l.b16 %v461
    %v1233 = vunpack.c.h.b16 %v461
    %v1234 = vunpack.c.l.b16 %v462
    %v1235 = vunpack.c.h.b16 %v462
    %v1236 = vunpack.c.l.b16 %v463
    %v1237 = vunpack.c.h.b16 %v463
    %v1238 = vunpack.c.l.b16 %v464
    %v1239 = vunpack.c.h.b16 %v464
    %v1240 = vunpack.c.l.b16 %v465
    %v1241 = vunpack.c.h.b16 %v465
    %v1242 = vunpack.c.l.b16 %v466
    %v1243 = vunpack.c.h.b16 %v466
    %v1244 = vunpack.c.l.b16 %v467
    %v1245 = vunpack.c.h.b16 %v467
    %v1246 = vunpack.c.l.b16 %v468
    %v1247 = vunpack.c.h.b16 %v468
    %v1248 = vunpack.c.l.b16 %v469
    %v1249 = vunpack.c.h.b16 %v469
    %v1250 = vunpack.c.l.b16 %v470
    %v1251 = vunpack.c.h.b16 %v470
    %v1252 = vunpack.c.l.b16 %v471
    %v1253 = vunpack.c.h.b16 %v471
    %v1254 = vunpack.c.l.b16 %v472
    %v1255 = vunpack.c.h.b16 %v472
    %v1256 = vunpack.c.l.b16 %v473
    %v1257 = vunpack.c.h.b16 %v473
    %v1258 = vunpack.c.l.b16 %v474
    %v1259 = vunpack.c.h.b16 %v474
    %v1260 = vunpack.c.l.b16 %v475
    %v1261 = vunpack.c.h.b16 %v475
    %v1262 = vunpack.c.l.b16 %v476
    %v1263 = vunpack.c.h.b16 %v476
    %v1264 = vunpack.c.l.b16 %v477
    %v1265 = vunpack.c.h.b16 %v477
    %v1266 = vunpack.c.l.b16 %v478
    %v1267 = vunpack.c.h.b16 %v478
    %v1268 = vunpack.c.l.b16 %v479
    %v1269 = vunpack.c.h.b16 %v479
    %v1270 = vunpack.c.l.b16 %v480
    %v1271 = vunpack.c.h.b16 %v480
    %v1272 = vunpack.c.l.b16 %v481
    %v1273 = vunpack.c.h.b16 %v481
    %v1274 = vunpack.c.l.b16 %v482
    %v1275 = vunpack.c.h.b16 %v482
    %v1276 = vunpack.c.l.b16 %v483
    %v1277 = vunpack.c.h.b16 %v483
    %v1278 = vunpack.c.l.b16 %v484
    %v1279 = vunpack.c.h.b16 %v484
    %v1280 = vunpack.c.l.b16 %v485
    %v1281 = vunpack.c.h.b16 %v485
    %v1282 = vunpack.c.l.b16 %v486
    %v1283 = vunpack.c.h.b16 %v486
    %v1284 = vunpack.c.l.b16 %v487
    %v1285 = vunpack.c.h.b16 %v487
    %v1286 = vunpack.c.l.b16 %v488
    %v1287 = vunpack.c.h.b16 %v488
    %v1288 = vunpack.c.l.b16 %v489
    %v1289 = vunpack.c.h.b16 %v489
    %v1290 = vunpack.c.l.b16 %v490
    %v1291 = vunpack.c.h.b16 %v490
    %v1292 = vunpack.c.l.b16 %v491
    %v1293 = vunpack.c.h.b16 %v491
    %v1294 = vunpack.c.l.b16 %v492
    %v1295 = vunpack.c.h.b16 %v492
    %v1296 = vunpack.c.l.b16 %v493
    %v1297 = vunpack.c.h.b16 %v493
    %v1298 = vunpack.c.l.b16 %v494
    %v1299 = vunpack.c.h.b16 %v494
    %v1300 = vunpack.c.l.b16 %v495
    %v1301 = vunpack.c.h.b16 %v495
    %v1302 = vpack.c.b16 %v794, %v790
    %v1303 = vpack.c.b16 %v795, %v791
    %v1304 = vpack.c.b16 %v796, %v792
    %v1305 = vpack.c.b16 %v797, %v793
    %v1306 = vpack.c.b16 %v802, %v798
    %v1307 = vpack.c.b16 %v803, %v799
    %v1308 = vpack.c.b16 %v804, %v800
    %v1309 = vpack.c.b16 %v805, %v801
    %v1310 = vpack.c.b16 %v810, %v806
    %v1311 = vpack.c.b16 %v811, %v807
    %v1312 = vpack.c.b16 %v812, %v808
    %v1313 = vpack.c.b16 %v813, %v809
    %v1314 = vpack.c.b16 %v818, %v814
    %v1315 = vpack.c.b16 %v819, %v815
    %v1316 = vpack.c.b16 %v820, %v816
    %v1317 = vpack.c.b16 %v821, %v817
    %v1318 = vpack.c.b16 %v826, %v822
    %v1319 = vpack.c.b16 %v827, %v823
    %v1320 = vpack.c.b16 %v828, %v824
    %v1321 = vpack.c.b16 %v829, %v825
    %v1322 = vpack.c.b16 %v834, %v830
    %v1323 = vpack.c.b16 %v835, %v831
    %v1324 = vpack.c.b16 %v836, %v832
    %v1325 = vpack.c.b16 %v837, %v833
    %v1326 = vpack.c.b16 %v842, %v838
    %v1327 = vpack.c.b16 %v843, %v839
    %v1328 = vpack.c.b16 %v844, %v840
    %v1329 = vpack.c.b16 %v845, %v841
    %v1330 = vpack.c.b16 %v850, %v846
    %v1331 = vpack.c.b16 %v851, %v847
    %v1332 = vpack.c.b16 %v852, %v848
    %v1333 = vpack.c.b16 %v853, %v849
    %v1334 = vpack.c.b16 %v858, %v854
    %v1335 = vpack.c.b16 %v859, %v855
    %v1336 = vpack.c.b16 %v860, %v856
    %v1337 = vpack.c.b16 %v861, %v857
    %v1338 = vpack.c.b16 %v866, %v862
    %v1339 = vpack.c.b16 %v867, %v863
    %v1340 = vpack.c.b16 %v868, %v864
    %v1341 = vpack.c.b16 %v869, %v865
    %v1342 = vpack.c.b16 %v874, %v870
    %v1343 = vpack.c.b16 %v875, %v871
    %v1344 = vpack.c.b16 %v876, %v872
    %v1345 = vpack.c.b16 %v877, %v873
    %v1346 = vpack.c.b16 %v882, %v878
    %v1347 = vpack.c.b16 %v883, %v879
    %v1348 = vpack.c.b16 %v884, %v880
    %v1349 = vpack.c.b16 %v885, %v881
    %v1350 = vpack.c.b16 %v890, %v886
    %v1351 = vpack.c.b16 %v891, %v887
    %v1352 = vpack.c.b16 %v892, %v888
    %v1353 = vpack.c.b16 %v893, %v889
    %v1354 = vpack.c.b16 %v898, %v894
    %v1355 = vpack.c.b16 %v899, %v895
    %v1356 = vpack.c.b16 %v900, %v896
    %v1357 = vpack.c.b16 %v901, %v897
    %v1358 = vpack.c.b16 %v906, %v902
    %v1359 = vpack.c.b16 %v907, %v903
    %v1360 = vpack.c.b16 %v908, %v904
    %v1361 = vpack.c.b16 %v909, %v905
    %v1362 = vpack.c.b16 %v914, %v910
    %v1363 = vpack.c.b16 %v915, %v911
    %v1364 = vpack.c.b16 %v916, %v912
    %v1365 = vpack.c.b16 %v917, %v913
    %v1366 = vpack.c.b16 %v922, %v918
    %v1367 = vpack.c.b16 %v923, %v919
    %v1368 = vpack.c.b16 %v924, %v920
    %v1369 = vpack.c.b16 %v925, %v921
    %v1370 = vpack.c.b16 %v930, %v926
    %v1371 = vpack.c.b16 %v931, %v927
    %v1372 = vpack.c.b16 %v932, %v928
    %v1373 = vpack.c.b16 %v933, %v929
    %v1374 = vpack.c.b16 %v938, %v934
    %v1375 = vpack.c.b16 %v939, %v935
    %v1376 = vpack.c.b16 %v940, %v936
    %v1377 = vpack.c.b16 %v941, %v937
    %v1378 = vpack.c.b16 %v946, %v942
    %v1379 = vpack.c.b16 %v947, %v943
    %v1380 = vpack.c.b16 %v948, %v944
    %v1381 = vpack.c.b16 %v949, %v945
    %v1382 = vpack.c.b16 %v954, %v950
    %v1383 = vpack.c.b16 %v955, %v951
    %v1384 = vpack.c.b16 %v956, %v952
    %v1385 = vpack.c.b16 %v957, %v953
    %v1386 = vpack.c.b16 %v962, %v958
    %v1387 = vpack.c.b16 %v963, %v959
    %v1388 = vpack.c.b16 %v964, %v960
    %v1389 = vpack.c.b16 %v965, %v961
    %v1390 = vpack.c.b16 %v970, %v966
    %v1391 = vpack.c.b16 %v971, %v967
    %v1392 = vpack.c.b16 %v972, %v968
    %v1393 = vpack.c.b16 %v973, %v969
    %v1394 = vpack.c.b16 %v978, %v974
    %v1395 = vpack.c.b16 %v979, %v975
    %v1396 = vpack.c.b16 %v980, %v976
    %v1397 = vpack.c.b16 %v981, %v977
    %v1398 = vpack.c.b16 %v986, %v982
    %v1399 = vpack.c.b16 %v987, %v983
    %v1400 = vpack.c.b16 %v988, %v984
    %v1401 = vpack.c.b16 %v989, %v985
    %v1402 = vpack.c.b16 %v994, %v990
    %v1403 = vpack.c.b16 %v995, %v991
    %v1404 = vpack.c.b16 %v996, %v992
    %v1405 = vpack.c.b16 %v997, %v993
    %v1406 = vpack.c.b16 %v1002, %v998
    %v1407 = vpack.c.b16 %v1003, %v999
    %v1408 = vpack.c.b16 %v1004, %v1000
    %v1409 = vpack.c.b16 %v1005, %v1001
    %v1410 = vpack.c.b16 %v1010, %v1006
    %v1411 = vpack.c.b16 %v1011, %v1007
    %v1412 = vpack.c.b16 %v1012, %v1008
    %v1413 = vpack.c.b16 %v1013, %v1009
    %v1414 = vpack.c.b16 %v1018, %v1014
    %v1415 = vpack.c.b16 %v1019, %v1015
    %v1416 = vpack.c.b16 %v1020, %v1016
    %v1417 = vpack.c.b16 %v1021, %v1017
    %v1418 = vpack.c.b16 %v1026, %v1022
    %v1419 = vpack.c.b16 %v1027, %v1023
    %v1420 = vpack.c.b16 %v1028, %v1024
    %v1421 = vpack.c.b16 %v1029, %v1025
    %v1422 = vpack.c.b16 %v1034, %v1030
    %v1423 = vpack.c.b16 %v1035, %v1031
    %v1424 = vpack.c.b16 %v1036, %v1032
    %v1425 = vpack.c.b16 %v1037, %v1033
    %v1426 = vpack.c.b16 %v1042, %v1038
    %v1427 = vpack.c.b16 %v1043, %v1039
    %v1428 = vpack.c.b16 %v1044, %v1040
    %v1429 = vpack.c.b16 %v1045, %v1041
    %v1430 = vpack.c.b16 %v1050, %v1046
    %v1431 = vpack.c.b16 %v1051, %v1047
    %v1432 = vpack.c.b16 %v1052, %v1048
    %v1433 = vpack.c.b16 %v1053, %v1049
    %v1434 = vpack.c.b16 %v1058, %v1054
    %v1435 = vpack.c.b16 %v1059, %v1055
    %v1436 = vpack.c.b16 %v1060, %v1056
    %v1437 = vpack.c.b16 %v1061, %v1057
    %v1438 = vpack.c.b16 %v1066, %v1062
    %v1439 = vpack.c.b16 %v1067, %v1063
    %v1440 = vpack.c.b16 %v1068, %v1064
    %v1441 = vpack.c.b16 %v1069, %v1065
    %v1442 = vpack.c.b16 %v1074, %v1070
    %v1443 = vpack.c.b16 %v1075, %v1071
    %v1444 = vpack.c.b16 %v1076, %v1072
    %v1445 = vpack.c.b16 %v1077, %v1073
    %v1446 = vpack.c.b16 %v1082, %v1078
    %v1447 = vpack.c.b16 %v1083, %v1079
    %v1448 = vpack.c.b16 %v1084, %v1080
    %v1449 = vpack.c.b16 %v1085, %v1081
    %v1450 = vpack.c.b16 %v1090, %v1086
    %v1451 = vpack.c.b16 %v1091, %v1087
    %v1452 = vpack.c.b16 %v1092, %v1088
    %v1453 = vpack.c.b16 %v1093, %v1089
    %v1454 = vpack.c.b16 %v1098, %v1094
    %v1455 = vpack.c.b16 %v1099, %v1095
    %v1456 = vpack.c.b16 %v1100, %v1096
    %v1457 = vpack.c.b16 %v1101, %v1097
    %v1458 = vpack.c.b16 %v1106, %v1102
    %v1459 = vpack.c.b16 %v1107, %v1103
    %v1460 = vpack.c.b16 %v1108, %v1104
    %v1461 = vpack.c.b16 %v1109, %v1105
    %v1462 = vpack.c.b16 %v1114, %v1110
    %v1463 = vpack.c.b16 %v1115, %v1111
    %v1464 = vpack.c.b16 %v1116, %v1112
    %v1465 = vpack.c.b16 %v1117, %v1113
    %v1466 = vpack.c.b16 %v1122, %v1118
    %v1467 = vpack.c.b16 %v1123, %v1119
    %v1468 = vpack.c.b16 %v1124, %v1120
    %v1469 = vpack.c.b16 %v1125, %v1121
    %v1470 = vpack.c.b16 %v1130, %v1126
    %v1471 = vpack.c.b16 %v1131, %v1127
    %v1472 = vpack.c.b16 %v1132, %v1128
    %v1473 = vpack.c.b16 %v1133, %v1129
    %v1474 = vpack.c.b16 %v1138, %v1134
    %v1475 = vpack.c.b16 %v1139, %v1135
    %v1476 = vpack.c.b16 %v1140, %v1136
    %v1477 = vpack.c.b16 %v1141, %v1137
    %v1478 = vpack.c.b16 %v1146, %v1142
    %v1479 = vpack.c.b16 %v1147, %v1143
    %v1480 = vpack.c.b16 %v1148, %v1144
    %v1481 = vpack.c.b16 %v1149, %v1145
    %v1482 = vpack.c.b16 %v1154, %v1150
    %v1483 = vpack.c.b16 %v1155, %v1151
    %v1484 = vpack.c.b16 %v1156, %v1152
    %v1485 = vpack.c.b16 %v1157, %v1153
    %v1486 = vpack.c.b16 %v1162, %v1158
    %v1487 = vpack.c.b16 %v1163, %v1159
    %v1488 = vpack.c.b16 %v1164, %v1160
    %v1489 = vpack.c.b16 %v1165, %v1161
    %v1490 = vpack.c.b16 %v1170, %v1166
    %v1491 = vpack.c.b16 %v1171, %v1167
    %v1492 = vpack.c.b16 %v1172, %v1168
    %v1493 = vpack.c.b16 %v1173, %v1169
    %v1494 = vpack.c.b16 %v1178, %v1174
    %v1495 = vpack.c.b16 %v1179, %v1175
    %v1496 = vpack.c.b16 %v1180, %v1176
    %v1497 = vpack.c.b16 %v1181, %v1177
    %v1498 = vpack.c.b16 %v1186, %v1182
    %v1499 = vpack.c.b16 %v1187, %v1183
    %v1500 = vpack.c.b16 %v1188, %v1184
    %v1501 = vpack.c.b16 %v1189, %v1185
    %v1502 = vpack.c.b16 %v1194, %v1190
    %v1503 = vpack.c.b16 %v1195, %v1191
    %v1504 = vpack.c.b16 %v1196, %v1192
    %v1505 = vpack.c.b16 %v1197, %v1193
    %v1506 = vpack.c.b16 %v1202, %v1198
    %v1507 = vpack.c.b16 %v1203, %v1199
    %v1508 = vpack.c.b16 %v1204, %v1200
    %v1509 = vpack.c.b16 %v1205, %v1201
    %v1510 = vpack.c.b16 %v1210, %v1206
    %v1511 = vpack.c.b16 %v1211, %v1207
    %v1512 = vpack.c.b16 %v1212, %v1208
    %v1513 = vpack.c.b16 %v1213, %v1209
    %v1514 = vpack.c.b16 %v1218, %v1214
    %v1515 = vpack.c.b16 %v1219, %v1215
    %v1516 = vpack.c.b16 %v1220, %v1216
    %v1517 = vpack.c.b16 %v1221, %v1217
    %v1518 = vpack.c.b16 %v1226, %v1222
    %v1519 = vpack.c.b16 %v1227, %v1223
    %v1520 = vpack.c.b16 %v1228, %v1224
    %v1521 = vpack.c.b16 %v1229, %v1225
    %v1522 = vpack.c.b16 %v1234, %v1230
    %v1523 = vpack.c.b16 %v1235, %v1231
    %v1524 = vpack.c.b16 %v1236, %v1232
    %v1525 = vpack.c.b16 %v1237, %v1233
    %v1526 = vpack.c.b16 %v1242, %v1238
    %v1527 = vpack.c.b16 %v1243, %v1239
    %v1528 = vpack.c.b16 %v1244, %v1240
    %v1529 = vpack.c.b16 %v1245, %v1241
    %v1530 = vpack.c.b16 %v1250, %v1246
    %v1531 = vpack.c.b16 %v1251, %v1247
    %v1532 = vpack.c.b16 %v1252, %v1248
    %v1533 = vpack.c.b16 %v1253, %v1249
    %v1534 = vpack.c.b16 %v1258, %v1254
    %v1535 = vpack.c.b16 %v1259, %v1255
    %v1536 = vpack.c.b16 %v1260, %v1256
    %v1537 = vpack.c.b16 %v1261, %v1257
    %v1538 = vpack.c.b16 %v1266, %v1262
    %v1539 = vpack.c.b16 %v1267, %v1263
    %v1540 = vpack.c.b16 %v1268, %v1264
    %v1541 = vpack.c.b16 %v1269, %v1265
    %v1542 = vpack.c.b16 %v1274, %v1270
    %v1543 = vpack.c.b16 %v1275, %v1271
    %v1544 = vpack.c.b16 %v1276, %v1272
    %v1545 = vpack.c.b16 %v1277, %v1273
    %v1546 = vpack.c.b16 %v1282, %v1278
    %v1547 = vpack.c.b16 %v1283, %v1279
    %v1548 = vpack.c.b16 %v1284, %v1280
    %v1549 = vpack.c.b16 %v1285, %v1281
    %v1550 = vpack.c.b16 %v1290, %v1286
    %v1551 = vpack.c.b16 %v1291, %v1287
    %v1552 = vpack.c.b16 %v1292, %v1288
    %v1553 = vpack.c.b16 %v1293, %v1289
    %v1554 = vpack.c.b16 %v1298, %v1294
    %v1555 = vpack.c.b16 %v1299, %v1295
    %v1556 = vpack.c.b16 %v1300, %v1296
    %v1557 = vpack.c.b16 %v1301, %v1297
    %1814 = vmatprep.subr.bf16.mxu0 %v1331
    %1815 = vmatpush1.bf16.msra.mxu0 %v1330
    %1816 = vmatprep.subr.bf16.mxu0 %v1327
    %1817 = vmatpush1.bf16.msra.mxu0 %v1326
    %1818 = vmatprep.subr.bf16.mxu0 %v1323
    %1819 = vmatpush1.bf16.msra.mxu0 %v1322
    %1820 = vmatprep.subr.bf16.mxu0 %v1319
    %1821 = vmatpush1.bf16.msra.mxu0 %v1318
    %1822 = vmatprep.subr.bf16.mxu0 %v1315
    %1823 = vmatpush1.bf16.msra.mxu0 %v1314
    %1824 = vmatprep.subr.bf16.mxu0 %v1311
    %1825 = vmatpush1.bf16.msra.mxu0 %v1310
    %1826 = vmatprep.subr.bf16.mxu0 %v1307
    %1827 = vmatpush1.bf16.msra.mxu0 %v1306
    %1828 = vmatprep.subr.bf16.mxu0 %v1303
    %1829 = vmatpush1.bf16.msra.mxu0 %v1302
    %1830 = vmatprep.subr.bf16.mxu0 %v1363
    %1831 = vmatpush2.bf16.msra.mxu0 %v1362
    %1832 = vmatprep.subr.bf16.mxu0 %v1359
    %1833 = vmatpush2.bf16.msra.mxu0 %v1358
    %1834 = vmatprep.subr.bf16.mxu0 %v1355
    %1835 = vmatpush2.bf16.msra.mxu0 %v1354
    %1836 = vmatprep.subr.bf16.mxu0 %v1351
    %1837 = vmatpush2.bf16.msra.mxu0 %v1350
    %1838 = vmatprep.subr.bf16.mxu0 %v1347
    %1839 = vmatpush2.bf16.msra.mxu0 %v1346
    %1840 = vmatprep.subr.bf16.mxu0 %v1343
    %1841 = vmatpush2.bf16.msra.mxu0 %v1342
    %1842 = vmatprep.subr.bf16.mxu0 %v1339
    %1843 = vmatpush2.bf16.msra.mxu0 %v1338
    %1844 = vmatprep.subr.bf16.mxu0 %v1335
    %1845 = vmatpush2.bf16.msra.mxu0 %v1334
    %1846 = vmatprep.mubr.bf16.mxu0 %v233
    %1847 = vmatmul.mubr.bf16.gmra.mxu0 %v232
    %v1848 = vpop.f32.mrf.mxu0
    %v1849 = vadd.f32 %v521, %v1848
    %v1850 = vpop.f32.mrf.mxu0
    %v1851 = vadd.f32 %v525, %v1850
    %v1852 = vpop.f32.mrf.mxu0
    %v1853 = vpop.f32.mrf.mxu0
    %1854 = vdwg.mxu0
    %1855 = vmatprep.subr.bf16.mxu0 %v1395
    %1856 = vmatpush1.bf16.msra.mxu0 %v1394
    %1857 = vmatprep.subr.bf16.mxu0 %v1391
    %1858 = vmatpush1.bf16.msra.mxu0 %v1390
    %1859 = vmatprep.subr.bf16.mxu0 %v1387
    %1860 = vmatpush1.bf16.msra.mxu0 %v1386
    %1861 = vmatprep.subr.bf16.mxu0 %v1383
    %1862 = vmatpush1.bf16.msra.mxu0 %v1382
    %1863 = vmatprep.subr.bf16.mxu0 %v1379
    %1864 = vmatpush1.bf16.msra.mxu0 %v1378
    %1865 = vmatprep.subr.bf16.mxu0 %v1375
    %1866 = vmatpush1.bf16.msra.mxu0 %v1374
    %1867 = vmatprep.subr.bf16.mxu0 %v1371
    %1868 = vmatpush1.bf16.msra.mxu0 %v1370
    %1869 = vmatprep.subr.bf16.mxu0 %v1367
    %1870 = vmatpush1.bf16.msra.mxu0 %v1366
    %1871 = vmatprep.subr.bf16.mxu0 %v1427
    %1872 = vmatpush2.bf16.msra.mxu0 %v1426
    %1873 = vmatprep.subr.bf16.mxu0 %v1423
    %1874 = vmatpush2.bf16.msra.mxu0 %v1422
    %1875 = vmatprep.subr.bf16.mxu0 %v1419
    %1876 = vmatpush2.bf16.msra.mxu0 %v1418
    %1877 = vmatprep.subr.bf16.mxu0 %v1415
    %1878 = vmatpush2.bf16.msra.mxu0 %v1414
    %1879 = vmatprep.subr.bf16.mxu0 %v1411
    %1880 = vmatpush2.bf16.msra.mxu0 %v1410
    %1881 = vmatprep.subr.bf16.mxu0 %v1407
    %1882 = vmatpush2.bf16.msra.mxu0 %v1406
    %1883 = vmatprep.subr.bf16.mxu0 %v1403
    %1884 = vmatpush2.bf16.msra.mxu0 %v1402
    %1885 = vmatprep.subr.bf16.mxu0 %v1399
    %1886 = vmatpush2.bf16.msra.mxu0 %v1398
    %1887 = vmatprep.mubr.bf16.mxu0 %v235
    %1888 = vmatmul.mubr.bf16.gmra.mxu0 %v234
    %v1889 = vpop.f32.mrf.mxu0
    %v1890 = vadd.f32 %v1849, %v1889
    %v1891 = vpop.f32.mrf.mxu0
    %v1892 = vadd.f32 %v1851, %v1891
    %v1893 = vpop.f32.mrf.mxu0
    %v1894 = vpop.f32.mrf.mxu0
    %1895 = vdwg.mxu0
    %1896 = vmatprep.subr.bf16.mxu0 %v1459
    %1897 = vmatpush1.bf16.msra.mxu0 %v1458
    %1898 = vmatprep.subr.bf16.mxu0 %v1455
    %1899 = vmatpush1.bf16.msra.mxu0 %v1454
    %1900 = vmatprep.subr.bf16.mxu0 %v1451
    %1901 = vmatpush1.bf16.msra.mxu0 %v1450
    %1902 = vmatprep.subr.bf16.mxu0 %v1447
    %1903 = vmatpush1.bf16.msra.mxu0 %v1446
    %1904 = vmatprep.subr.bf16.mxu0 %v1443
    %1905 = vmatpush1.bf16.msra.mxu0 %v1442
    %1906 = vmatprep.subr.bf16.mxu0 %v1439
    %1907 = vmatpush1.bf16.msra.mxu0 %v1438
    %1908 = vmatprep.subr.bf16.mxu0 %v1435
    %1909 = vmatpush1.bf16.msra.mxu0 %v1434
    %1910 = vmatprep.subr.bf16.mxu0 %v1431
    %1911 = vmatpush1.bf16.msra.mxu0 %v1430
    %1912 = vmatprep.subr.bf16.mxu0 %v1491
    %1913 = vmatpush2.bf16.msra.mxu0 %v1490
    %1914 = vmatprep.subr.bf16.mxu0 %v1487
    %1915 = vmatpush2.bf16.msra.mxu0 %v1486
    %1916 = vmatprep.subr.bf16.mxu0 %v1483
    %1917 = vmatpush2.bf16.msra.mxu0 %v1482
    %1918 = vmatprep.subr.bf16.mxu0 %v1479
    %1919 = vmatpush2.bf16.msra.mxu0 %v1478
    %1920 = vmatprep.subr.bf16.mxu0 %v1475
    %1921 = vmatpush2.bf16.msra.mxu0 %v1474
    %1922 = vmatprep.subr.bf16.mxu0 %v1471
    %1923 = vmatpush2.bf16.msra.mxu0 %v1470
    %1924 = vmatprep.subr.bf16.mxu0 %v1467
    %1925 = vmatpush2.bf16.msra.mxu0 %v1466
    %1926 = vmatprep.subr.bf16.mxu0 %v1463
    %1927 = vmatpush2.bf16.msra.mxu0 %v1462
    %1928 = vmatprep.mubr.bf16.mxu0 %v237
    %1929 = vmatmul.mubr.bf16.gmra.mxu0 %v236
    %v1930 = vpop.f32.mrf.mxu0
    %v1931 = vadd.f32 %v1890, %v1930
    %v1932 = vpop.f32.mrf.mxu0
    %v1933 = vadd.f32 %v1892, %v1932
    %v1934 = vpop.f32.mrf.mxu0
    %v1935 = vpop.f32.mrf.mxu0
    %1936 = vdwg.mxu0
    %1937 = vmatprep.subr.bf16.mxu0 %v1523
    %1938 = vmatpush1.bf16.msra.mxu0 %v1522
    %1939 = vmatprep.subr.bf16.mxu0 %v1519
    %1940 = vmatpush1.bf16.msra.mxu0 %v1518
    %1941 = vmatprep.subr.bf16.mxu0 %v1515
    %1942 = vmatpush1.bf16.msra.mxu0 %v1514
    %1943 = vmatprep.subr.bf16.mxu0 %v1511
    %1944 = vmatpush1.bf16.msra.mxu0 %v1510
    %1945 = vmatprep.subr.bf16.mxu0 %v1507
    %1946 = vmatpush1.bf16.msra.mxu0 %v1506
    %1947 = vmatprep.subr.bf16.mxu0 %v1503
    %1948 = vmatpush1.bf16.msra.mxu0 %v1502
    %1949 = vmatprep.subr.bf16.mxu0 %v1499
    %1950 = vmatpush1.bf16.msra.mxu0 %v1498
    %1951 = vmatprep.subr.bf16.mxu0 %v1495
    %1952 = vmatpush1.bf16.msra.mxu0 %v1494
    %1953 = vmatprep.subr.bf16.mxu0 %v1555
    %1954 = vmatpush2.bf16.msra.mxu0 %v1554
    %1955 = vmatprep.subr.bf16.mxu0 %v1551
    %1956 = vmatpush2.bf16.msra.mxu0 %v1550
    %1957 = vmatprep.subr.bf16.mxu0 %v1547
    %1958 = vmatpush2.bf16.msra.mxu0 %v1546
    %1959 = vmatprep.subr.bf16.mxu0 %v1543
    %1960 = vmatpush2.bf16.msra.mxu0 %v1542
    %1961 = vmatprep.subr.bf16.mxu0 %v1539
    %1962 = vmatpush2.bf16.msra.mxu0 %v1538
    %1963 = vmatprep.subr.bf16.mxu0 %v1535
    %1964 = vmatpush2.bf16.msra.mxu0 %v1534
    %1965 = vmatprep.subr.bf16.mxu0 %v1531
    %1966 = vmatpush2.bf16.msra.mxu0 %v1530
    %1967 = vmatprep.subr.bf16.mxu0 %v1527
    %1968 = vmatpush2.bf16.msra.mxu0 %v1526
    %1969 = vmatprep.mubr.bf16.mxu0 %v239
    %1970 = vmatmul.mubr.bf16.gmra.mxu0 %v238
    %v1971 = vpop.f32.mrf.mxu0
    %v1972 = vadd.f32 %v1931, %v1971
    %v1973 = vpop.f32.mrf.mxu0
    %v1974 = vadd.f32 %v1933, %v1973
    %v1975 = vpop.f32.mrf.mxu0
    %v1976 = vpop.f32.mrf.mxu0
    %1977 = vdwg.mxu0
    %1978 = vmatprep.subr.bf16.mxu0 %v1333
    %1979 = vmatpush1.bf16.msra.mxu0 %v1332
    %1980 = vmatprep.subr.bf16.mxu0 %v1329
    %1981 = vmatpush1.bf16.msra.mxu0 %v1328
    %1982 = vmatprep.subr.bf16.mxu0 %v1325
    %1983 = vmatpush1.bf16.msra.mxu0 %v1324
    %1984 = vmatprep.subr.bf16.mxu0 %v1321
    %1985 = vmatpush1.bf16.msra.mxu0 %v1320
    %1986 = vmatprep.subr.bf16.mxu0 %v1317
    %1987 = vmatpush1.bf16.msra.mxu0 %v1316
    %1988 = vmatprep.subr.bf16.mxu0 %v1313
    %1989 = vmatpush1.bf16.msra.mxu0 %v1312
    %1990 = vmatprep.subr.bf16.mxu0 %v1309
    %1991 = vmatpush1.bf16.msra.mxu0 %v1308
    %1992 = vmatprep.subr.bf16.mxu0 %v1305
    %1993 = vmatpush1.bf16.msra.mxu0 %v1304
    %1994 = vmatprep.subr.bf16.mxu0 %v1365
    %1995 = vmatpush2.bf16.msra.mxu0 %v1364
    %1996 = vmatprep.subr.bf16.mxu0 %v1361
    %1997 = vmatpush2.bf16.msra.mxu0 %v1360
    %1998 = vmatprep.subr.bf16.mxu0 %v1357
    %1999 = vmatpush2.bf16.msra.mxu0 %v1356
    %2000 = vmatprep.subr.bf16.mxu0 %v1353
    %2001 = vmatpush2.bf16.msra.mxu0 %v1352
    %2002 = vmatprep.subr.bf16.mxu0 %v1349
    %2003 = vmatpush2.bf16.msra.mxu0 %v1348
    %2004 = vmatprep.subr.bf16.mxu0 %v1345
    %2005 = vmatpush2.bf16.msra.mxu0 %v1344
    %2006 = vmatprep.subr.bf16.mxu0 %v1341
    %2007 = vmatpush2.bf16.msra.mxu0 %v1340
    %2008 = vmatprep.subr.bf16.mxu0 %v1337
    %2009 = vmatpush2.bf16.msra.mxu0 %v1336
    %2010 = vmatprep.mubr.bf16.mxu0 %v233
    %2011 = vmatmul.mubr.bf16.gmra.mxu0 %v232
    %v2012 = vpop.f32.mrf.mxu0
    %v2013 = vadd.f32 %v529, %v2012
    %v2014 = vpop.f32.mrf.mxu0
    %v2015 = vadd.f32 %v533, %v2014
    %v2016 = vpop.f32.mrf.mxu0
    %v2017 = vpop.f32.mrf.mxu0
    %2018 = vdwg.mxu0
    %2019 = vmatprep.subr.bf16.mxu0 %v1397
    %2020 = vmatpush1.bf16.msra.mxu0 %v1396
    %2021 = vmatprep.subr.bf16.mxu0 %v1393
    %2022 = vmatpush1.bf16.msra.mxu0 %v1392
    %2023 = vmatprep.subr.bf16.mxu0 %v1389
    %2024 = vmatpush1.bf16.msra.mxu0 %v1388
    %2025 = vmatprep.subr.bf16.mxu0 %v1385
    %2026 = vmatpush1.bf16.msra.mxu0 %v1384
    %2027 = vmatprep.subr.bf16.mxu0 %v1381
    %2028 = vmatpush1.bf16.msra.mxu0 %v1380
    %2029 = vmatprep.subr.bf16.mxu0 %v1377
    %2030 = vmatpush1.bf16.msra.mxu0 %v1376
    %2031 = vmatprep.subr.bf16.mxu0 %v1373
    %2032 = vmatpush1.bf16.msra.mxu0 %v1372
    %2033 = vmatprep.subr.bf16.mxu0 %v1369
    %2034 = vmatpush1.bf16.msra.mxu0 %v1368
    %2035 = vmatprep.subr.bf16.mxu0 %v1429
    %2036 = vmatpush2.bf16.msra.mxu0 %v1428
    %2037 = vmatprep.subr.bf16.mxu0 %v1425
    %2038 = vmatpush2.bf16.msra.mxu0 %v1424
    %2039 = vmatprep.subr.bf16.mxu0 %v1421
    %2040 = vmatpush2.bf16.msra.mxu0 %v1420
    %2041 = vmatprep.subr.bf16.mxu0 %v1417
    %2042 = vmatpush2.bf16.msra.mxu0 %v1416
    %2043 = vmatprep.subr.bf16.mxu0 %v1413
    %2044 = vmatpush2.bf16.msra.mxu0 %v1412
    %2045 = vmatprep.subr.bf16.mxu0 %v1409
    %2046 = vmatpush2.bf16.msra.mxu0 %v1408
    %2047 = vmatprep.subr.bf16.mxu0 %v1405
    %2048 = vmatpush2.bf16.msra.mxu0 %v1404
    %2049 = vmatprep.subr.bf16.mxu0 %v1401
    %2050 = vmatpush2.bf16.msra.mxu0 %v1400
    %2051 = vmatprep.mubr.bf16.mxu0 %v235
    %2052 = vmatmul.mubr.bf16.gmra.mxu0 %v234
    %v2053 = vpop.f32.mrf.mxu0
    %v2054 = vadd.f32 %v2013, %v2053
    %v2055 = vpop.f32.mrf.mxu0
    %v2056 = vadd.f32 %v2015, %v2055
    %v2057 = vpop.f32.mrf.mxu0
    %v2058 = vpop.f32.mrf.mxu0
    %2059 = vdwg.mxu0
    %2060 = vmatprep.subr.bf16.mxu0 %v1461
    %2061 = vmatpush1.bf16.msra.mxu0 %v1460
    %2062 = vmatprep.subr.bf16.mxu0 %v1457
    %2063 = vmatpush1.bf16.msra.mxu0 %v1456
    %2064 = vmatprep.subr.bf16.mxu0 %v1453
    %2065 = vmatpush1.bf16.msra.mxu0 %v1452
    %2066 = vmatprep.subr.bf16.mxu0 %v1449
    %2067 = vmatpush1.bf16.msra.mxu0 %v1448
    %2068 = vmatprep.subr.bf16.mxu0 %v1445
    %2069 = vmatpush1.bf16.msra.mxu0 %v1444
    %2070 = vmatprep.subr.bf16.mxu0 %v1441
    %2071 = vmatpush1.bf16.msra.mxu0 %v1440
    %2072 = vmatprep.subr.bf16.mxu0 %v1437
    %2073 = vmatpush1.bf16.msra.mxu0 %v1436
    %2074 = vmatprep.subr.bf16.mxu0 %v1433
    %2075 = vmatpush1.bf16.msra.mxu0 %v1432
    %2076 = vmatprep.subr.bf16.mxu0 %v1493
    %2077 = vmatpush2.bf16.msra.mxu0 %v1492
    %2078 = vmatprep.subr.bf16.mxu0 %v1489
    %2079 = vmatpush2.bf16.msra.mxu0 %v1488
    %2080 = vmatprep.subr.bf16.mxu0 %v1485
    %2081 = vmatpush2.bf16.msra.mxu0 %v1484
    %2082 = vmatprep.subr.bf16.mxu0 %v1481
    %2083 = vmatpush2.bf16.msra.mxu0 %v1480
    %2084 = vmatprep.subr.bf16.mxu0 %v1477
    %2085 = vmatpush2.bf16.msra.mxu0 %v1476
    %2086 = vmatprep.subr.bf16.mxu0 %v1473
    %2087 = vmatpush2.bf16.msra.mxu0 %v1472
    %2088 = vmatprep.subr.bf16.mxu0 %v1469
    %2089 = vmatpush2.bf16.msra.mxu0 %v1468
    %2090 = vmatprep.subr.bf16.mxu0 %v1465
    %2091 = vmatpush2.bf16.msra.mxu0 %v1464
    %2092 = vmatprep.mubr.bf16.mxu0 %v237
    %2093 = vmatmul.mubr.bf16.gmra.mxu0 %v236
    %v2094 = vpop.f32.mrf.mxu0
    %v2095 = vadd.f32 %v2054, %v2094
    %v2096 = vpop.f32.mrf.mxu0
    %v2097 = vadd.f32 %v2056, %v2096
    %v2098 = vpop.f32.mrf.mxu0
    %v2099 = vpop.f32.mrf.mxu0
    %2100 = vdwg.mxu0
    %2101 = vmatprep.subr.bf16.mxu0 %v1525
    %2102 = vmatpush1.bf16.msra.mxu0 %v1524
    %2103 = vmatprep.subr.bf16.mxu0 %v1521
    %2104 = vmatpush1.bf16.msra.mxu0 %v1520
    %2105 = vmatprep.subr.bf16.mxu0 %v1517
    %2106 = vmatpush1.bf16.msra.mxu0 %v1516
    %2107 = vmatprep.subr.bf16.mxu0 %v1513
    %2108 = vmatpush1.bf16.msra.mxu0 %v1512
    %2109 = vmatprep.subr.bf16.mxu0 %v1509
    %2110 = vmatpush1.bf16.msra.mxu0 %v1508
    %2111 = vmatprep.subr.bf16.mxu0 %v1505
    %2112 = vmatpush1.bf16.msra.mxu0 %v1504
    %2113 = vmatprep.subr.bf16.mxu0 %v1501
    %2114 = vmatpush1.bf16.msra.mxu0 %v1500
    %2115 = vmatprep.subr.bf16.mxu0 %v1497
    %2116 = vmatpush1.bf16.msra.mxu0 %v1496
    %2117 = vmatprep.subr.bf16.mxu0 %v1557
    %2118 = vmatpush2.bf16.msra.mxu0 %v1556
    %2119 = vmatprep.subr.bf16.mxu0 %v1553
    %2120 = vmatpush2.bf16.msra.mxu0 %v1552
    %2121 = vmatprep.subr.bf16.mxu0 %v1549
    %2122 = vmatpush2.bf16.msra.mxu0 %v1548
    %2123 = vmatprep.subr.bf16.mxu0 %v1545
    %2124 = vmatpush2.bf16.msra.mxu0 %v1544
    %2125 = vmatprep.subr.bf16.mxu0 %v1541
    %2126 = vmatpush2.bf16.msra.mxu0 %v1540
    %2127 = vmatprep.subr.bf16.mxu0 %v1537
    %2128 = vmatpush2.bf16.msra.mxu0 %v1536
    %2129 = vmatprep.subr.bf16.mxu0 %v1533
    %2130 = vmatpush2.bf16.msra.mxu0 %v1532
    %2131 = vmatprep.subr.bf16.mxu0 %v1529
    %2132 = vmatpush2.bf16.msra.mxu0 %v1528
    %2133 = vmatprep.mubr.bf16.mxu0 %v239
    %2134 = vmatmul.mubr.bf16.gmra.mxu0 %v238
    %v2135 = vpop.f32.mrf.mxu0
    %v2136 = vadd.f32 %v2095, %v2135
    %v2137 = vpop.f32.mrf.mxu0
    %v2138 = vadd.f32 %v2097, %v2137
    %v2139 = vpop.f32.mrf.mxu0
    %v2140 = vpop.f32.mrf.mxu0
    %2141 = vdwg.mxu0
    %vm2142 = vcmp.ge.f32.partialorder %v1972, 0.0
    %vm2143 = vcmp.ge.f32.partialorder %v1974, 0.0
    %vm2144 = vcmp.ge.f32.partialorder %v2136, 0.0
    %vm2145 = vcmp.ge.f32.partialorder %v2138, 0.0
    %v2146 = vlaneseq
    %v2147 = vshrl.u32 %v2146, 7
    %v2148 = vsub.s32 1, %v2147
    %v2149 = vrot.slane %v222, %v2148
    %v2150 = vlaneseq
    %v2151 = vshrl.u32 %v2150, 7
    %v2152 = vsub.s32 5, %v2151
    %v2153 = vrot.slane %v222, %v2152
    %v2154 = vlaneseq
    %v2155 = vshrl.u32 %v2154, 7
    %v2156 = vsub.s32 1, %v2155
    %v2157 = vrot.slane %v223, %v2156
    %v2158 = vlaneseq
    %v2159 = vshrl.u32 %v2158, 7
    %v2160 = vsub.s32 5, %v2159
    %v2161 = vrot.slane %v223, %v2160
    %v2166 = vlaneseq
    %v2167 = vshrl.u32 %v2166, 7
    %v2168 = vsub.s32 1, %v2167
    %v2169 = vrot.slane %v2149, %v2168
    %v2170 = vlaneseq
    %v2171 = vshrl.u32 %v2170, 7
    %v2172 = vsub.s32 1, %v2171
    %v2173 = vrot.slane %v2153, %v2172
    %v2174 = vlaneseq
    %v2175 = vshrl.u32 %v2174, 7
    %v2176 = vsub.s32 1, %v2175
    %v2177 = vrot.slane %v2157, %v2176
    %v2178 = vlaneseq
    %v2179 = vshrl.u32 %v2178, 7
    %v2180 = vsub.s32 1, %v2179
    %v2181 = vrot.slane %v2161, %v2180
    %v2182 = vmul.f32 %v2169, %v1972
    %v2183 = vmul.f32 %v2173, %v1974
    %v2184 = vmul.f32 %v2177, %v2136
    %v2185 = vmul.f32 %v2181, %v2138
    %v2186 = vsel %vm2142, %v1972, %v2182
    %v2187 = vsel %vm2143, %v1974, %v2183
    %v2188 = vsel %vm2144, %v2136, %v2184
    %v2189 = vsel %vm2145, %v2138, %v2185
    %v2190 = vpack.c.bf16 %v2186, %v2186
    %v2191 = vpack.c.bf16 %v2187, %v2187
    %v2192 = vpack.c.bf16 %v2188, %v2188
    %v2193 = vpack.c.bf16 %v2189, %v2189
    %v2194 = vld [vmem:[#allocation6] sm:$0xff]
    %v2195 = vld [vmem:[#allocation6 + $0x8] sm:$0xff]
    %v2196 = vld [vmem:[#allocation6 + $0x10] sm:$0xff]
    %v2197 = vld [vmem:[#allocation6 + $0x18] sm:$0xff]
    %v2198 = vld [vmem:[#allocation6 + $0x20] sm:$0xff]
    %v2199 = vld [vmem:[#allocation6 + $0x28] sm:$0xff]
    %v2200 = vld [vmem:[#allocation6 + $0x30] sm:$0xff]
    %v2201 = vld [vmem:[#allocation6 + $0x38] sm:$0xff]
    %v2202 = vld [vmem:[#allocation6 + $0x40] sm:$0xff]
    %v2203 = vld [vmem:[#allocation6 + $0x48] sm:$0xff]
    %v2204 = vld [vmem:[#allocation6 + $0x50] sm:$0xff]
    %v2205 = vld [vmem:[#allocation6 + $0x58] sm:$0xff]
    %v2206 = vld [vmem:[#allocation6 + $0x60] sm:$0xff]
    %v2207 = vld [vmem:[#allocation6 + $0x68] sm:$0xff]
    %v2208 = vld [vmem:[#allocation6 + $0x70] sm:$0xff]
    %v2209 = vld [vmem:[#allocation6 + $0x78] sm:$0xff]
    %v2210 = vld [vmem:[#allocation6 + $0x80] sm:$0xff]
    %v2211 = vld [vmem:[#allocation6 + $0x88] sm:$0xff]
    %v2212 = vld [vmem:[#allocation6 + $0x90] sm:$0xff]
    %v2213 = vld [vmem:[#allocation6 + $0x98] sm:$0xff]
    %v2214 = vld [vmem:[#allocation6 + $0xa0] sm:$0xff]
    %v2215 = vld [vmem:[#allocation6 + $0xa8] sm:$0xff]
    %v2216 = vld [vmem:[#allocation6 + $0xb0] sm:$0xff]
    %v2217 = vld [vmem:[#allocation6 + $0xb8] sm:$0xff]
    %v2218 = vld [vmem:[#allocation6 + $0xc0] sm:$0xff]
    %v2219 = vld [vmem:[#allocation6 + $0xc8] sm:$0xff]
    %v2220 = vld [vmem:[#allocation6 + $0xd0] sm:$0xff]
    %v2221 = vld [vmem:[#allocation6 + $0xd8] sm:$0xff]
    %v2222 = vld [vmem:[#allocation6 + $0xe0] sm:$0xff]
    %v2223 = vld [vmem:[#allocation6 + $0xe8] sm:$0xff]
    %v2224 = vld [vmem:[#allocation6 + $0xf0] sm:$0xff]
    %v2225 = vld [vmem:[#allocation6 + $0xf8] sm:$0xff]
    %v2226 = vld [vmem:[#allocation6 + $0x100] sm:$0xff]
    %v2227 = vld [vmem:[#allocation6 + $0x108] sm:$0xff]
    %v2228 = vld [vmem:[#allocation6 + $0x110] sm:$0xff]
    %v2229 = vld [vmem:[#allocation6 + $0x118] sm:$0xff]
    %v2230 = vld [vmem:[#allocation6 + $0x120] sm:$0xff]
    %v2231 = vld [vmem:[#allocation6 + $0x128] sm:$0xff]
    %v2232 = vld [vmem:[#allocation6 + $0x130] sm:$0xff]
    %v2233 = vld [vmem:[#allocation6 + $0x138] sm:$0xff]
    %v2234 = vld [vmem:[#allocation6 + $0x140] sm:$0xff]
    %v2235 = vld [vmem:[#allocation6 + $0x148] sm:$0xff]
    %v2236 = vld [vmem:[#allocation6 + $0x150] sm:$0xff]
    %v2237 = vld [vmem:[#allocation6 + $0x158] sm:$0xff]
    %v2238 = vld [vmem:[#allocation6 + $0x160] sm:$0xff]
    %v2239 = vld [vmem:[#allocation6 + $0x168] sm:$0xff]
    %v2240 = vld [vmem:[#allocation6 + $0x170] sm:$0xff]
    %v2241 = vld [vmem:[#allocation6 + $0x178] sm:$0xff]
    %v2242 = vld [vmem:[#allocation6 + $0x180] sm:$0xff]
    %v2243 = vld [vmem:[#allocation6 + $0x188] sm:$0xff]
    %v2244 = vld [vmem:[#allocation6 + $0x190] sm:$0xff]
    %v2245 = vld [vmem:[#allocation6 + $0x198] sm:$0xff]
    %v2246 = vld [vmem:[#allocation6 + $0x1a0] sm:$0xff]
    %v2247 = vld [vmem:[#allocation6 + $0x1a8] sm:$0xff]
    %v2248 = vld [vmem:[#allocation6 + $0x1b0] sm:$0xff]
    %v2249 = vld [vmem:[#allocation6 + $0x1b8] sm:$0xff]
    %v2250 = vld [vmem:[#allocation6 + $0x1c0] sm:$0xff]
    %v2251 = vld [vmem:[#allocation6 + $0x1c8] sm:$0xff]
    %v2252 = vld [vmem:[#allocation6 + $0x1d0] sm:$0xff]
    %v2253 = vld [vmem:[#allocation6 + $0x1d8] sm:$0xff]
    %v2254 = vld [vmem:[#allocation6 + $0x1e0] sm:$0xff]
    %v2255 = vld [vmem:[#allocation6 + $0x1e8] sm:$0xff]
    %v2256 = vld [vmem:[#allocation6 + $0x1f0] sm:$0xff]
    %v2257 = vld [vmem:[#allocation6 + $0x1f8] sm:$0xff]
    %v2258 = vld [vmem:[#allocation6 + $0x200] sm:$0xff]
    %v2259 = vld [vmem:[#allocation6 + $0x208] sm:$0xff]
    %v2260 = vld [vmem:[#allocation6 + $0x210] sm:$0xff]
    %v2261 = vld [vmem:[#allocation6 + $0x218] sm:$0xff]
    %v2262 = vld [vmem:[#allocation6 + $0x220] sm:$0xff]
    %v2263 = vld [vmem:[#allocation6 + $0x228] sm:$0xff]
    %v2264 = vld [vmem:[#allocation6 + $0x230] sm:$0xff]
    %v2265 = vld [vmem:[#allocation6 + $0x238] sm:$0xff]
    %v2266 = vld [vmem:[#allocation6 + $0x240] sm:$0xff]
    %v2267 = vld [vmem:[#allocation6 + $0x248] sm:$0xff]
    %v2268 = vld [vmem:[#allocation6 + $0x250] sm:$0xff]
    %v2269 = vld [vmem:[#allocation6 + $0x258] sm:$0xff]
    %v2270 = vld [vmem:[#allocation6 + $0x260] sm:$0xff]
    %v2271 = vld [vmem:[#allocation6 + $0x268] sm:$0xff]
    %v2272 = vld [vmem:[#allocation6 + $0x270] sm:$0xff]
    %v2273 = vld [vmem:[#allocation6 + $0x278] sm:$0xff]
    %v2274 = vld [vmem:[#allocation6 + $0x280] sm:$0xff]
    %v2275 = vld [vmem:[#allocation6 + $0x288] sm:$0xff]
    %v2276 = vld [vmem:[#allocation6 + $0x290] sm:$0xff]
    %v2277 = vld [vmem:[#allocation6 + $0x298] sm:$0xff]
    %v2278 = vld [vmem:[#allocation6 + $0x2a0] sm:$0xff]
    %v2279 = vld [vmem:[#allocation6 + $0x2a8] sm:$0xff]
    %v2280 = vld [vmem:[#allocation6 + $0x2b0] sm:$0xff]
    %v2281 = vld [vmem:[#allocation6 + $0x2b8] sm:$0xff]
    %v2282 = vld [vmem:[#allocation6 + $0x2c0] sm:$0xff]
    %v2283 = vld [vmem:[#allocation6 + $0x2c8] sm:$0xff]
    %v2284 = vld [vmem:[#allocation6 + $0x2d0] sm:$0xff]
    %v2285 = vld [vmem:[#allocation6 + $0x2d8] sm:$0xff]
    %v2286 = vld [vmem:[#allocation6 + $0x2e0] sm:$0xff]
    %v2287 = vld [vmem:[#allocation6 + $0x2e8] sm:$0xff]
    %v2288 = vld [vmem:[#allocation6 + $0x2f0] sm:$0xff]
    %v2289 = vld [vmem:[#allocation6 + $0x2f8] sm:$0xff]
    %v2290 = vld [vmem:[#allocation6 + $0x300] sm:$0xff]
    %v2291 = vld [vmem:[#allocation6 + $0x308] sm:$0xff]
    %v2292 = vld [vmem:[#allocation6 + $0x310] sm:$0xff]
    %v2293 = vld [vmem:[#allocation6 + $0x318] sm:$0xff]
    %v2294 = vld [vmem:[#allocation6 + $0x320] sm:$0xff]
    %v2295 = vld [vmem:[#allocation6 + $0x328] sm:$0xff]
    %v2296 = vld [vmem:[#allocation6 + $0x330] sm:$0xff]
    %v2297 = vld [vmem:[#allocation6 + $0x338] sm:$0xff]
    %v2298 = vld [vmem:[#allocation6 + $0x340] sm:$0xff]
    %v2299 = vld [vmem:[#allocation6 + $0x348] sm:$0xff]
    %v2300 = vld [vmem:[#allocation6 + $0x350] sm:$0xff]
    %v2301 = vld [vmem:[#allocation6 + $0x358] sm:$0xff]
    %v2302 = vld [vmem:[#allocation6 + $0x360] sm:$0xff]
    %v2303 = vld [vmem:[#allocation6 + $0x368] sm:$0xff]
    %v2304 = vld [vmem:[#allocation6 + $0x370] sm:$0xff]
    %v2305 = vld [vmem:[#allocation6 + $0x378] sm:$0xff]
    %v2306 = vld [vmem:[#allocation6 + $0x380] sm:$0xff]
    %v2307 = vld [vmem:[#allocation6 + $0x388] sm:$0xff]
    %v2308 = vld [vmem:[#allocation6 + $0x390] sm:$0xff]
    %v2309 = vld [vmem:[#allocation6 + $0x398] sm:$0xff]
    %v2310 = vld [vmem:[#allocation6 + $0x3a0] sm:$0xff]
    %v2311 = vld [vmem:[#allocation6 + $0x3a8] sm:$0xff]
    %v2312 = vld [vmem:[#allocation6 + $0x3b0] sm:$0xff]
    %v2313 = vld [vmem:[#allocation6 + $0x3b8] sm:$0xff]
    %v2314 = vld [vmem:[#allocation6 + $0x3c0] sm:$0xff]
    %v2315 = vld [vmem:[#allocation6 + $0x3c8] sm:$0xff]
    %v2316 = vld [vmem:[#allocation6 + $0x3d0] sm:$0xff]
    %v2317 = vld [vmem:[#allocation6 + $0x3d8] sm:$0xff]
    %v2318 = vld [vmem:[#allocation6 + $0x3e0] sm:$0xff]
    %v2319 = vld [vmem:[#allocation6 + $0x3e8] sm:$0xff]
    %v2320 = vld [vmem:[#allocation6 + $0x3f0] sm:$0xff]
    %v2321 = vld [vmem:[#allocation6 + $0x3f8] sm:$0xff]
    %v2322 = vlaneseq
    %v2323 = vshrl.u32 %v2322, 7
    %v2324 = vsub.s32 2, %v2323
    %v2325 = vrot.slane %v222, %v2324
    %v2326 = vlaneseq
    %v2327 = vshrl.u32 %v2326, 7
    %v2328 = vsub.s32 6, %v2327
    %v2329 = vrot.slane %v222, %v2328
    %v2330 = vlaneseq
    %v2331 = vshrl.u32 %v2330, 7
    %v2332 = vsub.s32 2, %v2331
    %v2333 = vrot.slane %v223, %v2332
    %v2334 = vlaneseq
    %v2335 = vshrl.u32 %v2334, 7
    %v2336 = vsub.s32 6, %v2335
    %v2337 = vrot.slane %v223, %v2336
    %v2342 = vlaneseq
    %v2343 = vshrl.u32 %v2342, 7
    %v2344 = vsub.s32 2, %v2343
    %v2345 = vrot.slane %v2325, %v2344
    %v2346 = vlaneseq
    %v2347 = vshrl.u32 %v2346, 7
    %v2348 = vsub.s32 2, %v2347
    %v2349 = vrot.slane %v2329, %v2348
    %v2350 = vlaneseq
    %v2351 = vshrl.u32 %v2350, 7
    %v2352 = vsub.s32 2, %v2351
    %v2353 = vrot.slane %v2333, %v2352
    %v2354 = vlaneseq
    %v2355 = vshrl.u32 %v2354, 7
    %v2356 = vsub.s32 2, %v2355
    %v2357 = vrot.slane %v2337, %v2356
    %v2486 = vunpack.c.l.b16 %v2194
    %v2487 = vunpack.c.h.b16 %v2194
    %v2488 = vunpack.c.l.b16 %v2195
    %v2489 = vunpack.c.h.b16 %v2195
    %v2490 = vunpack.c.l.b16 %v2196
    %v2491 = vunpack.c.h.b16 %v2196
    %v2492 = vunpack.c.l.b16 %v2197
    %v2493 = vunpack.c.h.b16 %v2197
    %v2494 = vunpack.c.l.b16 %v2198
    %v2495 = vunpack.c.h.b16 %v2198
    %v2496 = vunpack.c.l.b16 %v2199
    %v2497 = vunpack.c.h.b16 %v2199
    %v2498 = vunpack.c.l.b16 %v2200
    %v2499 = vunpack.c.h.b16 %v2200
    %v2500 = vunpack.c.l.b16 %v2201
    %v2501 = vunpack.c.h.b16 %v2201
    %v2502 = vunpack.c.l.b16 %v2202
    %v2503 = vunpack.c.h.b16 %v2202
    %v2504 = vunpack.c.l.b16 %v2203
    %v2505 = vunpack.c.h.b16 %v2203
    %v2506 = vunpack.c.l.b16 %v2204
    %v2507 = vunpack.c.h.b16 %v2204
    %v2508 = vunpack.c.l.b16 %v2205
    %v2509 = vunpack.c.h.b16 %v2205
    %v2510 = vunpack.c.l.b16 %v2206
    %v2511 = vunpack.c.h.b16 %v2206
    %v2512 = vunpack.c.l.b16 %v2207
    %v2513 = vunpack.c.h.b16 %v2207
    %v2514 = vunpack.c.l.b16 %v2208
    %v2515 = vunpack.c.h.b16 %v2208
    %v2516 = vunpack.c.l.b16 %v2209
    %v2517 = vunpack.c.h.b16 %v2209
    %v2518 = vunpack.c.l.b16 %v2210
    %v2519 = vunpack.c.h.b16 %v2210
    %v2520 = vunpack.c.l.b16 %v2211
    %v2521 = vunpack.c.h.b16 %v2211
    %v2522 = vunpack.c.l.b16 %v2212
    %v2523 = vunpack.c.h.b16 %v2212
    %v2524 = vunpack.c.l.b16 %v2213
    %v2525 = vunpack.c.h.b16 %v2213
    %v2526 = vunpack.c.l.b16 %v2214
    %v2527 = vunpack.c.h.b16 %v2214
    %v2528 = vunpack.c.l.b16 %v2215
    %v2529 = vunpack.c.h.b16 %v2215
    %v2530 = vunpack.c.l.b16 %v2216
    %v2531 = vunpack.c.h.b16 %v2216
    %v2532 = vunpack.c.l.b16 %v2217
    %v2533 = vunpack.c.h.b16 %v2217
    %v2534 = vunpack.c.l.b16 %v2218
    %v2535 = vunpack.c.h.b16 %v2218
    %v2536 = vunpack.c.l.b16 %v2219
    %v2537 = vunpack.c.h.b16 %v2219
    %v2538 = vunpack.c.l.b16 %v2220
    %v2539 = vunpack.c.h.b16 %v2220
    %v2540 = vunpack.c.l.b16 %v2221
    %v2541 = vunpack.c.h.b16 %v2221
    %v2542 = vunpack.c.l.b16 %v2222
    %v2543 = vunpack.c.h.b16 %v2222
    %v2544 = vunpack.c.l.b16 %v2223
    %v2545 = vunpack.c.h.b16 %v2223
    %v2546 = vunpack.c.l.b16 %v2224
    %v2547 = vunpack.c.h.b16 %v2224
    %v2548 = vunpack.c.l.b16 %v2225
    %v2549 = vunpack.c.h.b16 %v2225
    %v2550 = vunpack.c.l.b16 %v2226
    %v2551 = vunpack.c.h.b16 %v2226
    %v2552 = vunpack.c.l.b16 %v2227
    %v2553 = vunpack.c.h.b16 %v2227
    %v2554 = vunpack.c.l.b16 %v2228
    %v2555 = vunpack.c.h.b16 %v2228
    %v2556 = vunpack.c.l.b16 %v2229
    %v2557 = vunpack.c.h.b16 %v2229
    %v2558 = vunpack.c.l.b16 %v2230
    %v2559 = vunpack.c.h.b16 %v2230
    %v2560 = vunpack.c.l.b16 %v2231
    %v2561 = vunpack.c.h.b16 %v2231
    %v2562 = vunpack.c.l.b16 %v2232
    %v2563 = vunpack.c.h.b16 %v2232
    %v2564 = vunpack.c.l.b16 %v2233
    %v2565 = vunpack.c.h.b16 %v2233
    %v2566 = vunpack.c.l.b16 %v2234
    %v2567 = vunpack.c.h.b16 %v2234
    %v2568 = vunpack.c.l.b16 %v2235
    %v2569 = vunpack.c.h.b16 %v2235
    %v2570 = vunpack.c.l.b16 %v2236
    %v2571 = vunpack.c.h.b16 %v2236
    %v2572 = vunpack.c.l.b16 %v2237
    %v2573 = vunpack.c.h.b16 %v2237
    %v2574 = vunpack.c.l.b16 %v2238
    %v2575 = vunpack.c.h.b16 %v2238
    %v2576 = vunpack.c.l.b16 %v2239
    %v2577 = vunpack.c.h.b16 %v2239
    %v2578 = vunpack.c.l.b16 %v2240
    %v2579 = vunpack.c.h.b16 %v2240
    %v2580 = vunpack.c.l.b16 %v2241
    %v2581 = vunpack.c.h.b16 %v2241
    %v2582 = vunpack.c.l.b16 %v2242
    %v2583 = vunpack.c.h.b16 %v2242
    %v2584 = vunpack.c.l.b16 %v2243
    %v2585 = vunpack.c.h.b16 %v2243
    %v2586 = vunpack.c.l.b16 %v2244
    %v2587 = vunpack.c.h.b16 %v2244
    %v2588 = vunpack.c.l.b16 %v2245
    %v2589 = vunpack.c.h.b16 %v2245
    %v2590 = vunpack.c.l.b16 %v2246
    %v2591 = vunpack.c.h.b16 %v2246
    %v2592 = vunpack.c.l.b16 %v2247
    %v2593 = vunpack.c.h.b16 %v2247
    %v2594 = vunpack.c.l.b16 %v2248
    %v2595 = vunpack.c.h.b16 %v2248
    %v2596 = vunpack.c.l.b16 %v2249
    %v2597 = vunpack.c.h.b16 %v2249
    %v2598 = vunpack.c.l.b16 %v2250
    %v2599 = vunpack.c.h.b16 %v2250
    %v2600 = vunpack.c.l.b16 %v2251
    %v2601 = vunpack.c.h.b16 %v2251
    %v2602 = vunpack.c.l.b16 %v2252
    %v2603 = vunpack.c.h.b16 %v2252
    %v2604 = vunpack.c.l.b16 %v2253
    %v2605 = vunpack.c.h.b16 %v2253
    %v2606 = vunpack.c.l.b16 %v2254
    %v2607 = vunpack.c.h.b16 %v2254
    %v2608 = vunpack.c.l.b16 %v2255
    %v2609 = vunpack.c.h.b16 %v2255
    %v2610 = vunpack.c.l.b16 %v2256
    %v2611 = vunpack.c.h.b16 %v2256
    %v2612 = vunpack.c.l.b16 %v2257
    %v2613 = vunpack.c.h.b16 %v2257
    %v2614 = vunpack.c.l.b16 %v2258
    %v2615 = vunpack.c.h.b16 %v2258
    %v2616 = vunpack.c.l.b16 %v2259
    %v2617 = vunpack.c.h.b16 %v2259
    %v2618 = vunpack.c.l.b16 %v2260
    %v2619 = vunpack.c.h.b16 %v2260
    %v2620 = vunpack.c.l.b16 %v2261
    %v2621 = vunpack.c.h.b16 %v2261
    %v2622 = vunpack.c.l.b16 %v2262
    %v2623 = vunpack.c.h.b16 %v2262
    %v2624 = vunpack.c.l.b16 %v2263
    %v2625 = vunpack.c.h.b16 %v2263
    %v2626 = vunpack.c.l.b16 %v2264
    %v2627 = vunpack.c.h.b16 %v2264
    %v2628 = vunpack.c.l.b16 %v2265
    %v2629 = vunpack.c.h.b16 %v2265
    %v2630 = vunpack.c.l.b16 %v2266
    %v2631 = vunpack.c.h.b16 %v2266
    %v2632 = vunpack.c.l.b16 %v2267
    %v2633 = vunpack.c.h.b16 %v2267
    %v2634 = vunpack.c.l.b16 %v2268
    %v2635 = vunpack.c.h.b16 %v2268
    %v2636 = vunpack.c.l.b16 %v2269
    %v2637 = vunpack.c.h.b16 %v2269
    %v2638 = vunpack.c.l.b16 %v2270
    %v2639 = vunpack.c.h.b16 %v2270
    %v2640 = vunpack.c.l.b16 %v2271
    %v2641 = vunpack.c.h.b16 %v2271
    %v2642 = vunpack.c.l.b16 %v2272
    %v2643 = vunpack.c.h.b16 %v2272
    %v2644 = vunpack.c.l.b16 %v2273
    %v2645 = vunpack.c.h.b16 %v2273
    %v2646 = vunpack.c.l.b16 %v2274
    %v2647 = vunpack.c.h.b16 %v2274
    %v2648 = vunpack.c.l.b16 %v2275
    %v2649 = vunpack.c.h.b16 %v2275
    %v2650 = vunpack.c.l.b16 %v2276
    %v2651 = vunpack.c.h.b16 %v2276
    %v2652 = vunpack.c.l.b16 %v2277
    %v2653 = vunpack.c.h.b16 %v2277
    %v2654 = vunpack.c.l.b16 %v2278
    %v2655 = vunpack.c.h.b16 %v2278
    %v2656 = vunpack.c.l.b16 %v2279
    %v2657 = vunpack.c.h.b16 %v2279
    %v2658 = vunpack.c.l.b16 %v2280
    %v2659 = vunpack.c.h.b16 %v2280
    %v2660 = vunpack.c.l.b16 %v2281
    %v2661 = vunpack.c.h.b16 %v2281
    %v2662 = vunpack.c.l.b16 %v2282
    %v2663 = vunpack.c.h.b16 %v2282
    %v2664 = vunpack.c.l.b16 %v2283
    %v2665 = vunpack.c.h.b16 %v2283
    %v2666 = vunpack.c.l.b16 %v2284
    %v2667 = vunpack.c.h.b16 %v2284
    %v2668 = vunpack.c.l.b16 %v2285
    %v2669 = vunpack.c.h.b16 %v2285
    %v2670 = vunpack.c.l.b16 %v2286
    %v2671 = vunpack.c.h.b16 %v2286
    %v2672 = vunpack.c.l.b16 %v2287
    %v2673 = vunpack.c.h.b16 %v2287
    %v2674 = vunpack.c.l.b16 %v2288
    %v2675 = vunpack.c.h.b16 %v2288
    %v2676 = vunpack.c.l.b16 %v2289
    %v2677 = vunpack.c.h.b16 %v2289
    %v2678 = vunpack.c.l.b16 %v2290
    %v2679 = vunpack.c.h.b16 %v2290
    %v2680 = vunpack.c.l.b16 %v2291
    %v2681 = vunpack.c.h.b16 %v2291
    %v2682 = vunpack.c.l.b16 %v2292
    %v2683 = vunpack.c.h.b16 %v2292
    %v2684 = vunpack.c.l.b16 %v2293
    %v2685 = vunpack.c.h.b16 %v2293
    %v2686 = vunpack.c.l.b16 %v2294
    %v2687 = vunpack.c.h.b16 %v2294
    %v2688 = vunpack.c.l.b16 %v2295
    %v2689 = vunpack.c.h.b16 %v2295
    %v2690 = vunpack.c.l.b16 %v2296
    %v2691 = vunpack.c.h.b16 %v2296
    %v2692 = vunpack.c.l.b16 %v2297
    %v2693 = vunpack.c.h.b16 %v2297
    %v2694 = vunpack.c.l.b16 %v2298
    %v2695 = vunpack.c.h.b16 %v2298
    %v2696 = vunpack.c.l.b16 %v2299
    %v2697 = vunpack.c.h.b16 %v2299
    %v2698 = vunpack.c.l.b16 %v2300
    %v2699 = vunpack.c.h.b16 %v2300
    %v2700 = vunpack.c.l.b16 %v2301
    %v2701 = vunpack.c.h.b16 %v2301
    %v2702 = vunpack.c.l.b16 %v2302
    %v2703 = vunpack.c.h.b16 %v2302
    %v2704 = vunpack.c.l.b16 %v2303
    %v2705 = vunpack.c.h.b16 %v2303
    %v2706 = vunpack.c.l.b16 %v2304
    %v2707 = vunpack.c.h.b16 %v2304
    %v2708 = vunpack.c.l.b16 %v2305
    %v2709 = vunpack.c.h.b16 %v2305
    %v2710 = vunpack.c.l.b16 %v2306
    %v2711 = vunpack.c.h.b16 %v2306
    %v2712 = vunpack.c.l.b16 %v2307
    %v2713 = vunpack.c.h.b16 %v2307
    %v2714 = vunpack.c.l.b16 %v2308
    %v2715 = vunpack.c.h.b16 %v2308
    %v2716 = vunpack.c.l.b16 %v2309
    %v2717 = vunpack.c.h.b16 %v2309
    %v2718 = vunpack.c.l.b16 %v2310
    %v2719 = vunpack.c.h.b16 %v2310
    %v2720 = vunpack.c.l.b16 %v2311
    %v2721 = vunpack.c.h.b16 %v2311
    %v2722 = vunpack.c.l.b16 %v2312
    %v2723 = vunpack.c.h.b16 %v2312
    %v2724 = vunpack.c.l.b16 %v2313
    %v2725 = vunpack.c.h.b16 %v2313
    %v2726 = vunpack.c.l.b16 %v2314
    %v2727 = vunpack.c.h.b16 %v2314
    %v2728 = vunpack.c.l.b16 %v2315
    %v2729 = vunpack.c.h.b16 %v2315
    %v2730 = vunpack.c.l.b16 %v2316
    %v2731 = vunpack.c.h.b16 %v2316
    %v2732 = vunpack.c.l.b16 %v2317
    %v2733 = vunpack.c.h.b16 %v2317
    %v2734 = vunpack.c.l.b16 %v2318
    %v2735 = vunpack.c.h.b16 %v2318
    %v2736 = vunpack.c.l.b16 %v2319
    %v2737 = vunpack.c.h.b16 %v2319
    %v2738 = vunpack.c.l.b16 %v2320
    %v2739 = vunpack.c.h.b16 %v2320
    %v2740 = vunpack.c.l.b16 %v2321
    %v2741 = vunpack.c.h.b16 %v2321
    %v2742 = vpack.c.b16 %v2490, %v2486
    %v2743 = vpack.c.b16 %v2491, %v2487
    %v2744 = vpack.c.b16 %v2492, %v2488
    %v2745 = vpack.c.b16 %v2493, %v2489
    %v2746 = vpack.c.b16 %v2498, %v2494
    %v2747 = vpack.c.b16 %v2499, %v2495
    %v2748 = vpack.c.b16 %v2500, %v2496
    %v2749 = vpack.c.b16 %v2501, %v2497
    %v2750 = vpack.c.b16 %v2506, %v2502
    %v2751 = vpack.c.b16 %v2507, %v2503
    %v2752 = vpack.c.b16 %v2508, %v2504
    %v2753 = vpack.c.b16 %v2509, %v2505
    %v2754 = vpack.c.b16 %v2514, %v2510
    %v2755 = vpack.c.b16 %v2515, %v2511
    %v2756 = vpack.c.b16 %v2516, %v2512
    %v2757 = vpack.c.b16 %v2517, %v2513
    %v2758 = vpack.c.b16 %v2522, %v2518
    %v2759 = vpack.c.b16 %v2523, %v2519
    %v2760 = vpack.c.b16 %v2524, %v2520
    %v2761 = vpack.c.b16 %v2525, %v2521
    %v2762 = vpack.c.b16 %v2530, %v2526
    %v2763 = vpack.c.b16 %v2531, %v2527
    %v2764 = vpack.c.b16 %v2532, %v2528
    %v2765 = vpack.c.b16 %v2533, %v2529
    %v2766 = vpack.c.b16 %v2538, %v2534
    %v2767 = vpack.c.b16 %v2539, %v2535
    %v2768 = vpack.c.b16 %v2540, %v2536
    %v2769 = vpack.c.b16 %v2541, %v2537
    %v2770 = vpack.c.b16 %v2546, %v2542
    %v2771 = vpack.c.b16 %v2547, %v2543
    %v2772 = vpack.c.b16 %v2548, %v2544
    %v2773 = vpack.c.b16 %v2549, %v2545
    %v2774 = vpack.c.b16 %v2554, %v2550
    %v2775 = vpack.c.b16 %v2555, %v2551
    %v2776 = vpack.c.b16 %v2556, %v2552
    %v2777 = vpack.c.b16 %v2557, %v2553
    %v2778 = vpack.c.b16 %v2562, %v2558
    %v2779 = vpack.c.b16 %v2563, %v2559
    %v2780 = vpack.c.b16 %v2564, %v2560
    %v2781 = vpack.c.b16 %v2565, %v2561
    %v2782 = vpack.c.b16 %v2570, %v2566
    %v2783 = vpack.c.b16 %v2571, %v2567
    %v2784 = vpack.c.b16 %v2572, %v2568
    %v2785 = vpack.c.b16 %v2573, %v2569
    %v2786 = vpack.c.b16 %v2578, %v2574
    %v2787 = vpack.c.b16 %v2579, %v2575
    %v2788 = vpack.c.b16 %v2580, %v2576
    %v2789 = vpack.c.b16 %v2581, %v2577
    %v2790 = vpack.c.b16 %v2586, %v2582
    %v2791 = vpack.c.b16 %v2587, %v2583
    %v2792 = vpack.c.b16 %v2588, %v2584
    %v2793 = vpack.c.b16 %v2589, %v2585
    %v2794 = vpack.c.b16 %v2594, %v2590
    %v2795 = vpack.c.b16 %v2595, %v2591
    %v2796 = vpack.c.b16 %v2596, %v2592
    %v2797 = vpack.c.b16 %v2597, %v2593
    %v2798 = vpack.c.b16 %v2602, %v2598
    %v2799 = vpack.c.b16 %v2603, %v2599
    %v2800 = vpack.c.b16 %v2604, %v2600
    %v2801 = vpack.c.b16 %v2605, %v2601
    %v2802 = vpack.c.b16 %v2610, %v2606
    %v2803 = vpack.c.b16 %v2611, %v2607
    %v2804 = vpack.c.b16 %v2612, %v2608
    %v2805 = vpack.c.b16 %v2613, %v2609
    %v2806 = vpack.c.b16 %v2618, %v2614
    %v2807 = vpack.c.b16 %v2619, %v2615
    %v2808 = vpack.c.b16 %v2620, %v2616
    %v2809 = vpack.c.b16 %v2621, %v2617
    %v2810 = vpack.c.b16 %v2626, %v2622
    %v2811 = vpack.c.b16 %v2627, %v2623
    %v2812 = vpack.c.b16 %v2628, %v2624
    %v2813 = vpack.c.b16 %v2629, %v2625
    %v2814 = vpack.c.b16 %v2634, %v2630
    %v2815 = vpack.c.b16 %v2635, %v2631
    %v2816 = vpack.c.b16 %v2636, %v2632
    %v2817 = vpack.c.b16 %v2637, %v2633
    %v2818 = vpack.c.b16 %v2642, %v2638
    %v2819 = vpack.c.b16 %v2643, %v2639
    %v2820 = vpack.c.b16 %v2644, %v2640
    %v2821 = vpack.c.b16 %v2645, %v2641
    %v2822 = vpack.c.b16 %v2650, %v2646
    %v2823 = vpack.c.b16 %v2651, %v2647
    %v2824 = vpack.c.b16 %v2652, %v2648
    %v2825 = vpack.c.b16 %v2653, %v2649
    %v2826 = vpack.c.b16 %v2658, %v2654
    %v2827 = vpack.c.b16 %v2659, %v2655
    %v2828 = vpack.c.b16 %v2660, %v2656
    %v2829 = vpack.c.b16 %v2661, %v2657
    %v2830 = vpack.c.b16 %v2666, %v2662
    %v2831 = vpack.c.b16 %v2667, %v2663
    %v2832 = vpack.c.b16 %v2668, %v2664
    %v2833 = vpack.c.b16 %v2669, %v2665
    %v2834 = vpack.c.b16 %v2674, %v2670
    %v2835 = vpack.c.b16 %v2675, %v2671
    %v2836 = vpack.c.b16 %v2676, %v2672
    %v2837 = vpack.c.b16 %v2677, %v2673
    %v2838 = vpack.c.b16 %v2682, %v2678
    %v2839 = vpack.c.b16 %v2683, %v2679
    %v2840 = vpack.c.b16 %v2684, %v2680
    %v2841 = vpack.c.b16 %v2685, %v2681
    %v2842 = vpack.c.b16 %v2690, %v2686
    %v2843 = vpack.c.b16 %v2691, %v2687
    %v2844 = vpack.c.b16 %v2692, %v2688
    %v2845 = vpack.c.b16 %v2693, %v2689
    %v2846 = vpack.c.b16 %v2698, %v2694
    %v2847 = vpack.c.b16 %v2699, %v2695
    %v2848 = vpack.c.b16 %v2700, %v2696
    %v2849 = vpack.c.b16 %v2701, %v2697
    %v2850 = vpack.c.b16 %v2706, %v2702
    %v2851 = vpack.c.b16 %v2707, %v2703
    %v2852 = vpack.c.b16 %v2708, %v2704
    %v2853 = vpack.c.b16 %v2709, %v2705
    %v2854 = vpack.c.b16 %v2714, %v2710
    %v2855 = vpack.c.b16 %v2715, %v2711
    %v2856 = vpack.c.b16 %v2716, %v2712
    %v2857 = vpack.c.b16 %v2717, %v2713
    %v2858 = vpack.c.b16 %v2722, %v2718
    %v2859 = vpack.c.b16 %v2723, %v2719
    %v2860 = vpack.c.b16 %v2724, %v2720
    %v2861 = vpack.c.b16 %v2725, %v2721
    %v2862 = vpack.c.b16 %v2730, %v2726
    %v2863 = vpack.c.b16 %v2731, %v2727
    %v2864 = vpack.c.b16 %v2732, %v2728
    %v2865 = vpack.c.b16 %v2733, %v2729
    %v2866 = vpack.c.b16 %v2738, %v2734
    %v2867 = vpack.c.b16 %v2739, %v2735
    %v2868 = vpack.c.b16 %v2740, %v2736
    %v2869 = vpack.c.b16 %v2741, %v2737
    %2998 = vmatprep.subr.bf16.mxu0 %v2771
    %2999 = vmatpush1.bf16.msra.mxu0 %v2770
    %3000 = vmatprep.subr.bf16.mxu0 %v2767
    %3001 = vmatpush1.bf16.msra.mxu0 %v2766
    %3002 = vmatprep.subr.bf16.mxu0 %v2763
    %3003 = vmatpush1.bf16.msra.mxu0 %v2762
    %3004 = vmatprep.subr.bf16.mxu0 %v2759
    %3005 = vmatpush1.bf16.msra.mxu0 %v2758
    %3006 = vmatprep.subr.bf16.mxu0 %v2755
    %3007 = vmatpush1.bf16.msra.mxu0 %v2754
    %3008 = vmatprep.subr.bf16.mxu0 %v2751
    %3009 = vmatpush1.bf16.msra.mxu0 %v2750
    %3010 = vmatprep.subr.bf16.mxu0 %v2747
    %3011 = vmatpush1.bf16.msra.mxu0 %v2746
    %3012 = vmatprep.subr.bf16.mxu0 %v2743
    %3013 = vmatpush1.bf16.msra.mxu0 %v2742
    %3014 = vmatprep.subr.bf16.mxu0 %v2803
    %3015 = vmatpush2.bf16.msra.mxu0 %v2802
    %3016 = vmatprep.subr.bf16.mxu0 %v2799
    %3017 = vmatpush2.bf16.msra.mxu0 %v2798
    %3018 = vmatprep.subr.bf16.mxu0 %v2795
    %3019 = vmatpush2.bf16.msra.mxu0 %v2794
    %3020 = vmatprep.subr.bf16.mxu0 %v2791
    %3021 = vmatpush2.bf16.msra.mxu0 %v2790
    %3022 = vmatprep.subr.bf16.mxu0 %v2787
    %3023 = vmatpush2.bf16.msra.mxu0 %v2786
    %3024 = vmatprep.subr.bf16.mxu0 %v2783
    %3025 = vmatpush2.bf16.msra.mxu0 %v2782
    %3026 = vmatprep.subr.bf16.mxu0 %v2779
    %3027 = vmatpush2.bf16.msra.mxu0 %v2778
    %3028 = vmatprep.subr.bf16.mxu0 %v2775
    %3029 = vmatpush2.bf16.msra.mxu0 %v2774
    %3030 = vmatprep.mubr.bf16.mxu0 %v2191
    %3031 = vmatmul.mubr.bf16.gmra.mxu0 %v2190
    %v3032 = vpop.f32.mrf.mxu0
    %v3033 = vadd.f32 %v2345, %v3032
    %v3034 = vpop.f32.mrf.mxu0
    %v3035 = vadd.f32 %v2349, %v3034
    %v3036 = vpop.f32.mrf.mxu0
    %v3037 = vpop.f32.mrf.mxu0
    %3038 = vdwg.mxu0
    %3039 = vmatprep.subr.bf16.mxu0 %v2835
    %3040 = vmatpush1.bf16.msra.mxu0 %v2834
    %3041 = vmatprep.subr.bf16.mxu0 %v2831
    %3042 = vmatpush1.bf16.msra.mxu0 %v2830
    %3043 = vmatprep.subr.bf16.mxu0 %v2827
    %3044 = vmatpush1.bf16.msra.mxu0 %v2826
    %3045 = vmatprep.subr.bf16.mxu0 %v2823
    %3046 = vmatpush1.bf16.msra.mxu0 %v2822
    %3047 = vmatprep.subr.bf16.mxu0 %v2819
    %3048 = vmatpush1.bf16.msra.mxu0 %v2818
    %3049 = vmatprep.subr.bf16.mxu0 %v2815
    %3050 = vmatpush1.bf16.msra.mxu0 %v2814
    %3051 = vmatprep.subr.bf16.mxu0 %v2811
    %3052 = vmatpush1.bf16.msra.mxu0 %v2810
    %3053 = vmatprep.subr.bf16.mxu0 %v2807
    %3054 = vmatpush1.bf16.msra.mxu0 %v2806
    %3055 = vmatprep.subr.bf16.mxu0 %v2867
    %3056 = vmatpush2.bf16.msra.mxu0 %v2866
    %3057 = vmatprep.subr.bf16.mxu0 %v2863
    %3058 = vmatpush2.bf16.msra.mxu0 %v2862
    %3059 = vmatprep.subr.bf16.mxu0 %v2859
    %3060 = vmatpush2.bf16.msra.mxu0 %v2858
    %3061 = vmatprep.subr.bf16.mxu0 %v2855
    %3062 = vmatpush2.bf16.msra.mxu0 %v2854
    %3063 = vmatprep.subr.bf16.mxu0 %v2851
    %3064 = vmatpush2.bf16.msra.mxu0 %v2850
    %3065 = vmatprep.subr.bf16.mxu0 %v2847
    %3066 = vmatpush2.bf16.msra.mxu0 %v2846
    %3067 = vmatprep.subr.bf16.mxu0 %v2843
    %3068 = vmatpush2.bf16.msra.mxu0 %v2842
    %3069 = vmatprep.subr.bf16.mxu0 %v2839
    %3070 = vmatpush2.bf16.msra.mxu0 %v2838
    %3071 = vmatprep.mubr.bf16.mxu0 %v2193
    %3072 = vmatmul.mubr.bf16.gmra.mxu0 %v2192
    %v3073 = vpop.f32.mrf.mxu0
    %v3074 = vadd.f32 %v3033, %v3073
    %v3075 = vpop.f32.mrf.mxu0
    %v3076 = vadd.f32 %v3035, %v3075
    %v3077 = vpop.f32.mrf.mxu0
    %v3078 = vpop.f32.mrf.mxu0
    %3079 = vdwg.mxu0
    %3080 = vmatprep.subr.bf16.mxu0 %v2773
    %3081 = vmatpush1.bf16.msra.mxu0 %v2772
    %3082 = vmatprep.subr.bf16.mxu0 %v2769
    %3083 = vmatpush1.bf16.msra.mxu0 %v2768
    %3084 = vmatprep.subr.bf16.mxu0 %v2765
    %3085 = vmatpush1.bf16.msra.mxu0 %v2764
    %3086 = vmatprep.subr.bf16.mxu0 %v2761
    %3087 = vmatpush1.bf16.msra.mxu0 %v2760
    %3088 = vmatprep.subr.bf16.mxu0 %v2757
    %3089 = vmatpush1.bf16.msra.mxu0 %v2756
    %3090 = vmatprep.subr.bf16.mxu0 %v2753
    %3091 = vmatpush1.bf16.msra.mxu0 %v2752
    %3092 = vmatprep.subr.bf16.mxu0 %v2749
    %3093 = vmatpush1.bf16.msra.mxu0 %v2748
    %3094 = vmatprep.subr.bf16.mxu0 %v2745
    %3095 = vmatpush1.bf16.msra.mxu0 %v2744
    %3096 = vmatprep.subr.bf16.mxu0 %v2805
    %3097 = vmatpush2.bf16.msra.mxu0 %v2804
    %3098 = vmatprep.subr.bf16.mxu0 %v2801
    %3099 = vmatpush2.bf16.msra.mxu0 %v2800
    %3100 = vmatprep.subr.bf16.mxu0 %v2797
    %3101 = vmatpush2.bf16.msra.mxu0 %v2796
    %3102 = vmatprep.subr.bf16.mxu0 %v2793
    %3103 = vmatpush2.bf16.msra.mxu0 %v2792
    %3104 = vmatprep.subr.bf16.mxu0 %v2789
    %3105 = vmatpush2.bf16.msra.mxu0 %v2788
    %3106 = vmatprep.subr.bf16.mxu0 %v2785
    %3107 = vmatpush2.bf16.msra.mxu0 %v2784
    %3108 = vmatprep.subr.bf16.mxu0 %v2781
    %3109 = vmatpush2.bf16.msra.mxu0 %v2780
    %3110 = vmatprep.subr.bf16.mxu0 %v2777
    %3111 = vmatpush2.bf16.msra.mxu0 %v2776
    %3112 = vmatprep.mubr.bf16.mxu0 %v2191
    %3113 = vmatmul.mubr.bf16.gmra.mxu0 %v2190
    %v3114 = vpop.f32.mrf.mxu0
    %v3115 = vadd.f32 %v2353, %v3114
    %v3116 = vpop.f32.mrf.mxu0
    %v3117 = vadd.f32 %v2357, %v3116
    %v3118 = vpop.f32.mrf.mxu0
    %v3119 = vpop.f32.mrf.mxu0
    %3120 = vdwg.mxu0
    %3121 = vmatprep.subr.bf16.mxu0 %v2837
    %3122 = vmatpush1.bf16.msra.mxu0 %v2836
    %3123 = vmatprep.subr.bf16.mxu0 %v2833
    %3124 = vmatpush1.bf16.msra.mxu0 %v2832
    %3125 = vmatprep.subr.bf16.mxu0 %v2829
    %3126 = vmatpush1.bf16.msra.mxu0 %v2828
    %3127 = vmatprep.subr.bf16.mxu0 %v2825
    %3128 = vmatpush1.bf16.msra.mxu0 %v2824
    %3129 = vmatprep.subr.bf16.mxu0 %v2821
    %3130 = vmatpush1.bf16.msra.mxu0 %v2820
    %3131 = vmatprep.subr.bf16.mxu0 %v2817
    %3132 = vmatpush1.bf16.msra.mxu0 %v2816
    %3133 = vmatprep.subr.bf16.mxu0 %v2813
    %3134 = vmatpush1.bf16.msra.mxu0 %v2812
    %3135 = vmatprep.subr.bf16.mxu0 %v2809
    %3136 = vmatpush1.bf16.msra.mxu0 %v2808
    %3137 = vmatprep.subr.bf16.mxu0 %v2869
    %3138 = vmatpush2.bf16.msra.mxu0 %v2868
    %3139 = vmatprep.subr.bf16.mxu0 %v2865
    %3140 = vmatpush2.bf16.msra.mxu0 %v2864
    %3141 = vmatprep.subr.bf16.mxu0 %v2861
    %3142 = vmatpush2.bf16.msra.mxu0 %v2860
    %3143 = vmatprep.subr.bf16.mxu0 %v2857
    %3144 = vmatpush2.bf16.msra.mxu0 %v2856
    %3145 = vmatprep.subr.bf16.mxu0 %v2853
    %3146 = vmatpush2.bf16.msra.mxu0 %v2852
    %3147 = vmatprep.subr.bf16.mxu0 %v2849
    %3148 = vmatpush2.bf16.msra.mxu0 %v2848
    %3149 = vmatprep.subr.bf16.mxu0 %v2845
    %3150 = vmatpush2.bf16.msra.mxu0 %v2844
    %3151 = vmatprep.subr.bf16.mxu0 %v2841
    %3152 = vmatpush2.bf16.msra.mxu0 %v2840
    %3153 = vmatprep.mubr.bf16.mxu0 %v2193
    %3154 = vmatmul.mubr.bf16.gmra.mxu0 %v2192
    %v3155 = vpop.f32.mrf.mxu0
    %v3156 = vadd.f32 %v3115, %v3155
    %v3157 = vpop.f32.mrf.mxu0
    %v3158 = vadd.f32 %v3117, %v3157
    %v3159 = vpop.f32.mrf.mxu0
    %v3160 = vpop.f32.mrf.mxu0
    %3161 = vdwg.mxu0
    %vm3162 = vcmp.ge.f32.partialorder %v3074, 0.0
    %vm3163 = vcmp.ge.f32.partialorder %v3076, 0.0
    %vm3164 = vcmp.ge.f32.partialorder %v3156, 0.0
    %vm3165 = vcmp.ge.f32.partialorder %v3158, 0.0
    %v3166 = vlaneseq
    %v3167 = vshrl.u32 %v3166, 7
    %v3168 = vsub.s32 3, %v3167
    %v3169 = vrot.slane %v222, %v3168
    %v3170 = vlaneseq
    %v3171 = vshrl.u32 %v3170, 7
    %v3172 = vsub.s32 7, %v3171
    %v3173 = vrot.slane %v222, %v3172
    %v3174 = vlaneseq
    %v3175 = vshrl.u32 %v3174, 7
    %v3176 = vsub.s32 3, %v3175
    %v3177 = vrot.slane %v223, %v3176
    %v3178 = vlaneseq
    %v3179 = vshrl.u32 %v3178, 7
    %v3180 = vsub.s32 7, %v3179
    %v3181 = vrot.slane %v223, %v3180
    %v3186 = vlaneseq
    %v3187 = vshrl.u32 %v3186, 7
    %v3188 = vsub.s32 3, %v3187
    %v3189 = vrot.slane %v3169, %v3188
    %v3190 = vlaneseq
    %v3191 = vshrl.u32 %v3190, 7
    %v3192 = vsub.s32 3, %v3191
    %v3193 = vrot.slane %v3173, %v3192
    %v3194 = vlaneseq
    %v3195 = vshrl.u32 %v3194, 7
    %v3196 = vsub.s32 3, %v3195
    %v3197 = vrot.slane %v3177, %v3196
    %v3198 = vlaneseq
    %v3199 = vshrl.u32 %v3198, 7
    %v3200 = vsub.s32 3, %v3199
    %v3201 = vrot.slane %v3181, %v3200
    %v3202 = vmul.f32 %v3189, %v3074
    %v3203 = vmul.f32 %v3193, %v3076
    %v3204 = vmul.f32 %v3197, %v3156
    %v3205 = vmul.f32 %v3201, %v3158
    %v3206 = vsel %vm3162, %v3074, %v3202
    %v3207 = vsel %vm3163, %v3076, %v3203
    %v3208 = vsel %vm3164, %v3156, %v3204
    %v3209 = vsel %vm3165, %v3158, %v3205
    loop: start=0, step=1, limit=8
    $region110: #{flowtron_forward.1} parent=1 // loop_pre_header
      _
    $region111: #{flowtron_forward.1} parent=1 // loop_header
      %s3211 = sphi 0, %s3215
      %p3212 = scmp.ge.s32.totalorder %s3211, 8
      %v3216 = vphi %v3206, %v5268
      %v3217 = vphi %v3207, %v5269
      %v3218 = vphi %v3208, %v5270
      %v3219 = vphi %v3209, %v5271
    $region112: #{flowtron_forward.1} parent=1 // loop_header_branch
      %3214 = sbr.rel (%p3212) target = $region116
    $region113: #{flowtron_forward.1} parent=1 // loop_body
      %s3220 = smul.u32 %s3211, 4
      %s3221 = smul.addr %s3220, 4
      %s3222 = scalar_lea.vmem [#allocation10], %s3221
      %v3223 = vld [vmem:[%s3222] sm:$0xff]
      %v3224 = vld [vmem:[%s3222 + $0x8] sm:$0xff]
      %v3225 = vpack.c.bf16 %v3216, %v3216
      %v3226 = vpack.c.bf16 %v3217, %v3217
      %v3227 = vpack.c.bf16 %v3218, %v3218
      %v3228 = vpack.c.bf16 %v3219, %v3219
      %s3229 = smul.u32 %s3211, 256
      %s3230 = smul.addr %s3229, 4
      %s3231 = scalar_lea.vmem [#allocation7], %s3230
      %v3232 = vld [vmem:[%s3231] sm:$0xff]
      %v3233 = vld [vmem:[%s3231 + $0x8] sm:$0xff]
      %v3234 = vld [vmem:[%s3231 + $0x10] sm:$0xff]
      %v3235 = vld [vmem:[%s3231 + $0x18] sm:$0xff]
      %v3236 = vld [vmem:[%s3231 + $0x20] sm:$0xff]
      %v3237 = vld [vmem:[%s3231 + $0x28] sm:$0xff]
      %v3238 = vld [vmem:[%s3231 + $0x30] sm:$0xff]
      %v3239 = vld [vmem:[%s3231 + $0x38] sm:$0xff]
      %v3240 = vld [vmem:[%s3231 + $0x40] sm:$0xff]
      %v3241 = vld [vmem:[%s3231 + $0x48] sm:$0xff]
      %v3242 = vld [vmem:[%s3231 + $0x50] sm:$0xff]
      %v3243 = vld [vmem:[%s3231 + $0x58] sm:$0xff]
      %v3244 = vld [vmem:[%s3231 + $0x60] sm:$0xff]
      %v3245 = vld [vmem:[%s3231 + $0x68] sm:$0xff]
      %v3246 = vld [vmem:[%s3231 + $0x70] sm:$0xff]
      %v3247 = vld [vmem:[%s3231 + $0x78] sm:$0xff]
      %v3248 = vld [vmem:[%s3231 + $0x80] sm:$0xff]
      %v3249 = vld [vmem:[%s3231 + $0x88] sm:$0xff]
      %v3250 = vld [vmem:[%s3231 + $0x90] sm:$0xff]
      %v3251 = vld [vmem:[%s3231 + $0x98] sm:$0xff]
      %v3252 = vld [vmem:[%s3231 + $0xa0] sm:$0xff]
      %v3253 = vld [vmem:[%s3231 + $0xa8] sm:$0xff]
      %v3254 = vld [vmem:[%s3231 + $0xb0] sm:$0xff]
      %v3255 = vld [vmem:[%s3231 + $0xb8] sm:$0xff]
      %v3256 = vld [vmem:[%s3231 + $0xc0] sm:$0xff]
      %v3257 = vld [vmem:[%s3231 + $0xc8] sm:$0xff]
      %v3258 = vld [vmem:[%s3231 + $0xd0] sm:$0xff]
      %v3259 = vld [vmem:[%s3231 + $0xd8] sm:$0xff]
      %v3260 = vld [vmem:[%s3231 + $0xe0] sm:$0xff]
      %v3261 = vld [vmem:[%s3231 + $0xe8] sm:$0xff]
      %v3262 = vld [vmem:[%s3231 + $0xf0] sm:$0xff]
      %v3263 = vld [vmem:[%s3231 + $0xf8] sm:$0xff]
      %v3264 = vld [vmem:[%s3231 + $0x100] sm:$0xff]
      %v3265 = vld [vmem:[%s3231 + $0x108] sm:$0xff]
      %v3266 = vld [vmem:[%s3231 + $0x110] sm:$0xff]
      %v3267 = vld [vmem:[%s3231 + $0x118] sm:$0xff]
      %v3268 = vld [vmem:[%s3231 + $0x120] sm:$0xff]
      %v3269 = vld [vmem:[%s3231 + $0x128] sm:$0xff]
      %v3270 = vld [vmem:[%s3231 + $0x130] sm:$0xff]
      %v3271 = vld [vmem:[%s3231 + $0x138] sm:$0xff]
      %v3272 = vld [vmem:[%s3231 + $0x140] sm:$0xff]
      %v3273 = vld [vmem:[%s3231 + $0x148] sm:$0xff]
      %v3274 = vld [vmem:[%s3231 + $0x150] sm:$0xff]
      %v3275 = vld [vmem:[%s3231 + $0x158] sm:$0xff]
      %v3276 = vld [vmem:[%s3231 + $0x160] sm:$0xff]
      %v3277 = vld [vmem:[%s3231 + $0x168] sm:$0xff]
      %v3278 = vld [vmem:[%s3231 + $0x170] sm:$0xff]
      %v3279 = vld [vmem:[%s3231 + $0x178] sm:$0xff]
      %v3280 = vld [vmem:[%s3231 + $0x180] sm:$0xff]
      %v3281 = vld [vmem:[%s3231 + $0x188] sm:$0xff]
      %v3282 = vld [vmem:[%s3231 + $0x190] sm:$0xff]
      %v3283 = vld [vmem:[%s3231 + $0x198] sm:$0xff]
      %v3284 = vld [vmem:[%s3231 + $0x1a0] sm:$0xff]
      %v3285 = vld [vmem:[%s3231 + $0x1a8] sm:$0xff]
      %v3286 = vld [vmem:[%s3231 + $0x1b0] sm:$0xff]
      %v3287 = vld [vmem:[%s3231 + $0x1b8] sm:$0xff]
      %v3288 = vld [vmem:[%s3231 + $0x1c0] sm:$0xff]
      %v3289 = vld [vmem:[%s3231 + $0x1c8] sm:$0xff]
      %v3290 = vld [vmem:[%s3231 + $0x1d0] sm:$0xff]
      %v3291 = vld [vmem:[%s3231 + $0x1d8] sm:$0xff]
      %v3292 = vld [vmem:[%s3231 + $0x1e0] sm:$0xff]
      %v3293 = vld [vmem:[%s3231 + $0x1e8] sm:$0xff]
      %v3294 = vld [vmem:[%s3231 + $0x1f0] sm:$0xff]
      %v3295 = vld [vmem:[%s3231 + $0x1f8] sm:$0xff]
      %v3296 = vld [vmem:[%s3231 + $0x200] sm:$0xff]
      %v3297 = vld [vmem:[%s3231 + $0x208] sm:$0xff]
      %v3298 = vld [vmem:[%s3231 + $0x210] sm:$0xff]
      %v3299 = vld [vmem:[%s3231 + $0x218] sm:$0xff]
      %v3300 = vld [vmem:[%s3231 + $0x220] sm:$0xff]
      %v3301 = vld [vmem:[%s3231 + $0x228] sm:$0xff]
      %v3302 = vld [vmem:[%s3231 + $0x230] sm:$0xff]
      %v3303 = vld [vmem:[%s3231 + $0x238] sm:$0xff]
      %v3304 = vld [vmem:[%s3231 + $0x240] sm:$0xff]
      %v3305 = vld [vmem:[%s3231 + $0x248] sm:$0xff]
      %v3306 = vld [vmem:[%s3231 + $0x250] sm:$0xff]
      %v3307 = vld [vmem:[%s3231 + $0x258] sm:$0xff]
      %v3308 = vld [vmem:[%s3231 + $0x260] sm:$0xff]
      %v3309 = vld [vmem:[%s3231 + $0x268] sm:$0xff]
      %v3310 = vld [vmem:[%s3231 + $0x270] sm:$0xff]
      %v3311 = vld [vmem:[%s3231 + $0x278] sm:$0xff]
      %v3312 = vld [vmem:[%s3231 + $0x280] sm:$0xff]
      %v3313 = vld [vmem:[%s3231 + $0x288] sm:$0xff]
      %v3314 = vld [vmem:[%s3231 + $0x290] sm:$0xff]
      %v3315 = vld [vmem:[%s3231 + $0x298] sm:$0xff]
      %v3316 = vld [vmem:[%s3231 + $0x2a0] sm:$0xff]
      %v3317 = vld [vmem:[%s3231 + $0x2a8] sm:$0xff]
      %v3318 = vld [vmem:[%s3231 + $0x2b0] sm:$0xff]
      %v3319 = vld [vmem:[%s3231 + $0x2b8] sm:$0xff]
      %v3320 = vld [vmem:[%s3231 + $0x2c0] sm:$0xff]
      %v3321 = vld [vmem:[%s3231 + $0x2c8] sm:$0xff]
      %v3322 = vld [vmem:[%s3231 + $0x2d0] sm:$0xff]
      %v3323 = vld [vmem:[%s3231 + $0x2d8] sm:$0xff]
      %v3324 = vld [vmem:[%s3231 + $0x2e0] sm:$0xff]
      %v3325 = vld [vmem:[%s3231 + $0x2e8] sm:$0xff]
      %v3326 = vld [vmem:[%s3231 + $0x2f0] sm:$0xff]
      %v3327 = vld [vmem:[%s3231 + $0x2f8] sm:$0xff]
      %v3328 = vld [vmem:[%s3231 + $0x300] sm:$0xff]
      %v3329 = vld [vmem:[%s3231 + $0x308] sm:$0xff]
      %v3330 = vld [vmem:[%s3231 + $0x310] sm:$0xff]
      %v3331 = vld [vmem:[%s3231 + $0x318] sm:$0xff]
      %v3332 = vld [vmem:[%s3231 + $0x320] sm:$0xff]
      %v3333 = vld [vmem:[%s3231 + $0x328] sm:$0xff]
      %v3334 = vld [vmem:[%s3231 + $0x330] sm:$0xff]
      %v3335 = vld [vmem:[%s3231 + $0x338] sm:$0xff]
      %v3336 = vld [vmem:[%s3231 + $0x340] sm:$0xff]
      %v3337 = vld [vmem:[%s3231 + $0x348] sm:$0xff]
      %v3338 = vld [vmem:[%s3231 + $0x350] sm:$0xff]
      %v3339 = vld [vmem:[%s3231 + $0x358] sm:$0xff]
      %v3340 = vld [vmem:[%s3231 + $0x360] sm:$0xff]
      %v3341 = vld [vmem:[%s3231 + $0x368] sm:$0xff]
      %v3342 = vld [vmem:[%s3231 + $0x370] sm:$0xff]
      %v3343 = vld [vmem:[%s3231 + $0x378] sm:$0xff]
      %v3344 = vld [vmem:[%s3231 + $0x380] sm:$0xff]
      %v3345 = vld [vmem:[%s3231 + $0x388] sm:$0xff]
      %v3346 = vld [vmem:[%s3231 + $0x390] sm:$0xff]
      %v3347 = vld [vmem:[%s3231 + $0x398] sm:$0xff]
      %v3348 = vld [vmem:[%s3231 + $0x3a0] sm:$0xff]
      %v3349 = vld [vmem:[%s3231 + $0x3a8] sm:$0xff]
      %v3350 = vld [vmem:[%s3231 + $0x3b0] sm:$0xff]
      %v3351 = vld [vmem:[%s3231 + $0x3b8] sm:$0xff]
      %v3352 = vld [vmem:[%s3231 + $0x3c0] sm:$0xff]
      %v3353 = vld [vmem:[%s3231 + $0x3c8] sm:$0xff]
      %v3354 = vld [vmem:[%s3231 + $0x3d0] sm:$0xff]
      %v3355 = vld [vmem:[%s3231 + $0x3d8] sm:$0xff]
      %v3356 = vld [vmem:[%s3231 + $0x3e0] sm:$0xff]
      %v3357 = vld [vmem:[%s3231 + $0x3e8] sm:$0xff]
      %v3358 = vld [vmem:[%s3231 + $0x3f0] sm:$0xff]
      %v3359 = vld [vmem:[%s3231 + $0x3f8] sm:$0xff]
      %v3362 = vlaneseq
      %v3363 = vshrl.u32 %v3362, 7
      %v3364 = vsub.s32 0, %v3363
      %v3365 = vrot.slane %v3223, %v3364
      %v3366 = vlaneseq
      %v3367 = vshrl.u32 %v3366, 7
      %v3368 = vsub.s32 4, %v3367
      %v3369 = vrot.slane %v3223, %v3368
      %v3370 = vlaneseq
      %v3371 = vshrl.u32 %v3370, 7
      %v3372 = vsub.s32 0, %v3371
      %v3373 = vrot.slane %v3224, %v3372
      %v3374 = vlaneseq
      %v3375 = vshrl.u32 %v3374, 7
      %v3376 = vsub.s32 4, %v3375
      %v3377 = vrot.slane %v3224, %v3376
      %v3382 = vlaneseq
      %v3383 = vshrl.u32 %v3382, 7
      %v3384 = vsub.s32 0, %v3383
      %v3385 = vrot.slane %v3365, %v3384
      %v3386 = vlaneseq
      %v3387 = vshrl.u32 %v3386, 7
      %v3388 = vsub.s32 0, %v3387
      %v3389 = vrot.slane %v3369, %v3388
      %v3390 = vlaneseq
      %v3391 = vshrl.u32 %v3390, 7
      %v3392 = vsub.s32 0, %v3391
      %v3393 = vrot.slane %v3373, %v3392
      %v3394 = vlaneseq
      %v3395 = vshrl.u32 %v3394, 7
      %v3396 = vsub.s32 0, %v3395
      %v3397 = vrot.slane %v3377, %v3396
      %v3526 = vunpack.c.l.b16 %v3232
      %v3527 = vunpack.c.h.b16 %v3232
      %v3528 = vunpack.c.l.b16 %v3233
      %v3529 = vunpack.c.h.b16 %v3233
      %v3530 = vunpack.c.l.b16 %v3234
      %v3531 = vunpack.c.h.b16 %v3234
      %v3532 = vunpack.c.l.b16 %v3235
      %v3533 = vunpack.c.h.b16 %v3235
      %v3534 = vunpack.c.l.b16 %v3236
      %v3535 = vunpack.c.h.b16 %v3236
      %v3536 = vunpack.c.l.b16 %v3237
      %v3537 = vunpack.c.h.b16 %v3237
      %v3538 = vunpack.c.l.b16 %v3238
      %v3539 = vunpack.c.h.b16 %v3238
      %v3540 = vunpack.c.l.b16 %v3239
      %v3541 = vunpack.c.h.b16 %v3239
      %v3542 = vunpack.c.l.b16 %v3240
      %v3543 = vunpack.c.h.b16 %v3240
      %v3544 = vunpack.c.l.b16 %v3241
      %v3545 = vunpack.c.h.b16 %v3241
      %v3546 = vunpack.c.l.b16 %v3242
      %v3547 = vunpack.c.h.b16 %v3242
      %v3548 = vunpack.c.l.b16 %v3243
      %v3549 = vunpack.c.h.b16 %v3243
      %v3550 = vunpack.c.l.b16 %v3244
      %v3551 = vunpack.c.h.b16 %v3244
      %v3552 = vunpack.c.l.b16 %v3245
      %v3553 = vunpack.c.h.b16 %v3245
      %v3554 = vunpack.c.l.b16 %v3246
      %v3555 = vunpack.c.h.b16 %v3246
      %v3556 = vunpack.c.l.b16 %v3247
      %v3557 = vunpack.c.h.b16 %v3247
      %v3558 = vunpack.c.l.b16 %v3248
      %v3559 = vunpack.c.h.b16 %v3248
      %v3560 = vunpack.c.l.b16 %v3249
      %v3561 = vunpack.c.h.b16 %v3249
      %v3562 = vunpack.c.l.b16 %v3250
      %v3563 = vunpack.c.h.b16 %v3250
      %v3564 = vunpack.c.l.b16 %v3251
      %v3565 = vunpack.c.h.b16 %v3251
      %v3566 = vunpack.c.l.b16 %v3252
      %v3567 = vunpack.c.h.b16 %v3252
      %v3568 = vunpack.c.l.b16 %v3253
      %v3569 = vunpack.c.h.b16 %v3253
      %v3570 = vunpack.c.l.b16 %v3254
      %v3571 = vunpack.c.h.b16 %v3254
      %v3572 = vunpack.c.l.b16 %v3255
      %v3573 = vunpack.c.h.b16 %v3255
      %v3574 = vunpack.c.l.b16 %v3256
      %v3575 = vunpack.c.h.b16 %v3256
      %v3576 = vunpack.c.l.b16 %v3257
      %v3577 = vunpack.c.h.b16 %v3257
      %v3578 = vunpack.c.l.b16 %v3258
      %v3579 = vunpack.c.h.b16 %v3258
      %v3580 = vunpack.c.l.b16 %v3259
      %v3581 = vunpack.c.h.b16 %v3259
      %v3582 = vunpack.c.l.b16 %v3260
      %v3583 = vunpack.c.h.b16 %v3260
      %v3584 = vunpack.c.l.b16 %v3261
      %v3585 = vunpack.c.h.b16 %v3261
      %v3586 = vunpack.c.l.b16 %v3262
      %v3587 = vunpack.c.h.b16 %v3262
      %v3588 = vunpack.c.l.b16 %v3263
      %v3589 = vunpack.c.h.b16 %v3263
      %v3590 = vunpack.c.l.b16 %v3264
      %v3591 = vunpack.c.h.b16 %v3264
      %v3592 = vunpack.c.l.b16 %v3265
      %v3593 = vunpack.c.h.b16 %v3265
      %v3594 = vunpack.c.l.b16 %v3266
      %v3595 = vunpack.c.h.b16 %v3266
      %v3596 = vunpack.c.l.b16 %v3267
      %v3597 = vunpack.c.h.b16 %v3267
      %v3598 = vunpack.c.l.b16 %v3268
      %v3599 = vunpack.c.h.b16 %v3268
      %v3600 = vunpack.c.l.b16 %v3269
      %v3601 = vunpack.c.h.b16 %v3269
      %v3602 = vunpack.c.l.b16 %v3270
      %v3603 = vunpack.c.h.b16 %v3270
      %v3604 = vunpack.c.l.b16 %v3271
      %v3605 = vunpack.c.h.b16 %v3271
      %v3606 = vunpack.c.l.b16 %v3272
      %v3607 = vunpack.c.h.b16 %v3272
      %v3608 = vunpack.c.l.b16 %v3273
      %v3609 = vunpack.c.h.b16 %v3273
      %v3610 = vunpack.c.l.b16 %v3274
      %v3611 = vunpack.c.h.b16 %v3274
      %v3612 = vunpack.c.l.b16 %v3275
      %v3613 = vunpack.c.h.b16 %v3275
      %v3614 = vunpack.c.l.b16 %v3276
      %v3615 = vunpack.c.h.b16 %v3276
      %v3616 = vunpack.c.l.b16 %v3277
      %v3617 = vunpack.c.h.b16 %v3277
      %v3618 = vunpack.c.l.b16 %v3278
      %v3619 = vunpack.c.h.b16 %v3278
      %v3620 = vunpack.c.l.b16 %v3279
      %v3621 = vunpack.c.h.b16 %v3279
      %v3622 = vunpack.c.l.b16 %v3280
      %v3623 = vunpack.c.h.b16 %v3280
      %v3624 = vunpack.c.l.b16 %v3281
      %v3625 = vunpack.c.h.b16 %v3281
      %v3626 = vunpack.c.l.b16 %v3282
      %v3627 = vunpack.c.h.b16 %v3282
      %v3628 = vunpack.c.l.b16 %v3283
      %v3629 = vunpack.c.h.b16 %v3283
      %v3630 = vunpack.c.l.b16 %v3284
      %v3631 = vunpack.c.h.b16 %v3284
      %v3632 = vunpack.c.l.b16 %v3285
      %v3633 = vunpack.c.h.b16 %v3285
      %v3634 = vunpack.c.l.b16 %v3286
      %v3635 = vunpack.c.h.b16 %v3286
      %v3636 = vunpack.c.l.b16 %v3287
      %v3637 = vunpack.c.h.b16 %v3287
      %v3638 = vunpack.c.l.b16 %v3288
      %v3639 = vunpack.c.h.b16 %v3288
      %v3640 = vunpack.c.l.b16 %v3289
      %v3641 = vunpack.c.h.b16 %v3289
      %v3642 = vunpack.c.l.b16 %v3290
      %v3643 = vunpack.c.h.b16 %v3290
      %v3644 = vunpack.c.l.b16 %v3291
      %v3645 = vunpack.c.h.b16 %v3291
      %v3646 = vunpack.c.l.b16 %v3292
      %v3647 = vunpack.c.h.b16 %v3292
      %v3648 = vunpack.c.l.b16 %v3293
      %v3649 = vunpack.c.h.b16 %v3293
      %v3650 = vunpack.c.l.b16 %v3294
      %v3651 = vunpack.c.h.b16 %v3294
      %v3652 = vunpack.c.l.b16 %v3295
      %v3653 = vunpack.c.h.b16 %v3295
      %v3654 = vunpack.c.l.b16 %v3296
      %v3655 = vunpack.c.h.b16 %v3296
      %v3656 = vunpack.c.l.b16 %v3297
      %v3657 = vunpack.c.h.b16 %v3297
      %v3658 = vunpack.c.l.b16 %v3298
      %v3659 = vunpack.c.h.b16 %v3298
      %v3660 = vunpack.c.l.b16 %v3299
      %v3661 = vunpack.c.h.b16 %v3299
      %v3662 = vunpack.c.l.b16 %v3300
      %v3663 = vunpack.c.h.b16 %v3300
      %v3664 = vunpack.c.l.b16 %v3301
      %v3665 = vunpack.c.h.b16 %v3301
      %v3666 = vunpack.c.l.b16 %v3302
      %v3667 = vunpack.c.h.b16 %v3302
      %v3668 = vunpack.c.l.b16 %v3303
      %v3669 = vunpack.c.h.b16 %v3303
      %v3670 = vunpack.c.l.b16 %v3304
      %v3671 = vunpack.c.h.b16 %v3304
      %v3672 = vunpack.c.l.b16 %v3305
      %v3673 = vunpack.c.h.b16 %v3305
      %v3674 = vunpack.c.l.b16 %v3306
      %v3675 = vunpack.c.h.b16 %v3306
      %v3676 = vunpack.c.l.b16 %v3307
      %v3677 = vunpack.c.h.b16 %v3307
      %v3678 = vunpack.c.l.b16 %v3308
      %v3679 = vunpack.c.h.b16 %v3308
      %v3680 = vunpack.c.l.b16 %v3309
      %v3681 = vunpack.c.h.b16 %v3309
      %v3682 = vunpack.c.l.b16 %v3310
      %v3683 = vunpack.c.h.b16 %v3310
      %v3684 = vunpack.c.l.b16 %v3311
      %v3685 = vunpack.c.h.b16 %v3311
      %v3686 = vunpack.c.l.b16 %v3312
      %v3687 = vunpack.c.h.b16 %v3312
      %v3688 = vunpack.c.l.b16 %v3313
      %v3689 = vunpack.c.h.b16 %v3313
      %v3690 = vunpack.c.l.b16 %v3314
      %v3691 = vunpack.c.h.b16 %v3314
      %v3692 = vunpack.c.l.b16 %v3315
      %v3693 = vunpack.c.h.b16 %v3315
      %v3694 = vunpack.c.l.b16 %v3316
      %v3695 = vunpack.c.h.b16 %v3316
      %v3696 = vunpack.c.l.b16 %v3317
      %v3697 = vunpack.c.h.b16 %v3317
      %v3698 = vunpack.c.l.b16 %v3318
      %v3699 = vunpack.c.h.b16 %v3318
      %v3700 = vunpack.c.l.b16 %v3319
      %v3701 = vunpack.c.h.b16 %v3319
      %v3702 = vunpack.c.l.b16 %v3320
      %v3703 = vunpack.c.h.b16 %v3320
      %v3704 = vunpack.c.l.b16 %v3321
      %v3705 = vunpack.c.h.b16 %v3321
      %v3706 = vunpack.c.l.b16 %v3322
      %v3707 = vunpack.c.h.b16 %v3322
      %v3708 = vunpack.c.l.b16 %v3323
      %v3709 = vunpack.c.h.b16 %v3323
      %v3710 = vunpack.c.l.b16 %v3324
      %v3711 = vunpack.c.h.b16 %v3324
      %v3712 = vunpack.c.l.b16 %v3325
      %v3713 = vunpack.c.h.b16 %v3325
      %v3714 = vunpack.c.l.b16 %v3326
      %v3715 = vunpack.c.h.b16 %v3326
      %v3716 = vunpack.c.l.b16 %v3327
      %v3717 = vunpack.c.h.b16 %v3327
      %v3718 = vunpack.c.l.b16 %v3328
      %v3719 = vunpack.c.h.b16 %v3328
      %v3720 = vunpack.c.l.b16 %v3329
      %v3721 = vunpack.c.h.b16 %v3329
      %v3722 = vunpack.c.l.b16 %v3330
      %v3723 = vunpack.c.h.b16 %v3330
      %v3724 = vunpack.c.l.b16 %v3331
      %v3725 = vunpack.c.h.b16 %v3331
      %v3726 = vunpack.c.l.b16 %v3332
      %v3727 = vunpack.c.h.b16 %v3332
      %v3728 = vunpack.c.l.b16 %v3333
      %v3729 = vunpack.c.h.b16 %v3333
      %v3730 = vunpack.c.l.b16 %v3334
      %v3731 = vunpack.c.h.b16 %v3334
      %v3732 = vunpack.c.l.b16 %v3335
      %v3733 = vunpack.c.h.b16 %v3335
      %v3734 = vunpack.c.l.b16 %v3336
      %v3735 = vunpack.c.h.b16 %v3336
      %v3736 = vunpack.c.l.b16 %v3337
      %v3737 = vunpack.c.h.b16 %v3337
      %v3738 = vunpack.c.l.b16 %v3338
      %v3739 = vunpack.c.h.b16 %v3338
      %v3740 = vunpack.c.l.b16 %v3339
      %v3741 = vunpack.c.h.b16 %v3339
      %v3742 = vunpack.c.l.b16 %v3340
      %v3743 = vunpack.c.h.b16 %v3340
      %v3744 = vunpack.c.l.b16 %v3341
      %v3745 = vunpack.c.h.b16 %v3341
      %v3746 = vunpack.c.l.b16 %v3342
      %v3747 = vunpack.c.h.b16 %v3342
      %v3748 = vunpack.c.l.b16 %v3343
      %v3749 = vunpack.c.h.b16 %v3343
      %v3750 = vunpack.c.l.b16 %v3344
      %v3751 = vunpack.c.h.b16 %v3344
      %v3752 = vunpack.c.l.b16 %v3345
      %v3753 = vunpack.c.h.b16 %v3345
      %v3754 = vunpack.c.l.b16 %v3346
      %v3755 = vunpack.c.h.b16 %v3346
      %v3756 = vunpack.c.l.b16 %v3347
      %v3757 = vunpack.c.h.b16 %v3347
      %v3758 = vunpack.c.l.b16 %v3348
      %v3759 = vunpack.c.h.b16 %v3348
      %v3760 = vunpack.c.l.b16 %v3349
      %v3761 = vunpack.c.h.b16 %v3349
      %v3762 = vunpack.c.l.b16 %v3350
      %v3763 = vunpack.c.h.b16 %v3350
      %v3764 = vunpack.c.l.b16 %v3351
      %v3765 = vunpack.c.h.b16 %v3351
      %v3766 = vunpack.c.l.b16 %v3352
      %v3767 = vunpack.c.h.b16 %v3352
      %v3768 = vunpack.c.l.b16 %v3353
      %v3769 = vunpack.c.h.b16 %v3353
      %v3770 = vunpack.c.l.b16 %v3354
      %v3771 = vunpack.c.h.b16 %v3354
      %v3772 = vunpack.c.l.b16 %v3355
      %v3773 = vunpack.c.h.b16 %v3355
      %v3774 = vunpack.c.l.b16 %v3356
      %v3775 = vunpack.c.h.b16 %v3356
      %v3776 = vunpack.c.l.b16 %v3357
      %v3777 = vunpack.c.h.b16 %v3357
      %v3778 = vunpack.c.l.b16 %v3358
      %v3779 = vunpack.c.h.b16 %v3358
      %v3780 = vunpack.c.l.b16 %v3359
      %v3781 = vunpack.c.h.b16 %v3359
      %v3782 = vpack.c.b16 %v3530, %v3526
      %v3783 = vpack.c.b16 %v3531, %v3527
      %v3784 = vpack.c.b16 %v3532, %v3528
      %v3785 = vpack.c.b16 %v3533, %v3529
      %v3786 = vpack.c.b16 %v3538, %v3534
      %v3787 = vpack.c.b16 %v3539, %v3535
      %v3788 = vpack.c.b16 %v3540, %v3536
      %v3789 = vpack.c.b16 %v3541, %v3537
      %v3790 = vpack.c.b16 %v3546, %v3542
      %v3791 = vpack.c.b16 %v3547, %v3543
      %v3792 = vpack.c.b16 %v3548, %v3544
      %v3793 = vpack.c.b16 %v3549, %v3545
      %v3794 = vpack.c.b16 %v3554, %v3550
      %v3795 = vpack.c.b16 %v3555, %v3551
      %v3796 = vpack.c.b16 %v3556, %v3552
      %v3797 = vpack.c.b16 %v3557, %v3553
      %v3798 = vpack.c.b16 %v3562, %v3558
      %v3799 = vpack.c.b16 %v3563, %v3559
      %v3800 = vpack.c.b16 %v3564, %v3560
      %v3801 = vpack.c.b16 %v3565, %v3561
      %v3802 = vpack.c.b16 %v3570, %v3566
      %v3803 = vpack.c.b16 %v3571, %v3567
      %v3804 = vpack.c.b16 %v3572, %v3568
      %v3805 = vpack.c.b16 %v3573, %v3569
      %v3806 = vpack.c.b16 %v3578, %v3574
      %v3807 = vpack.c.b16 %v3579, %v3575
      %v3808 = vpack.c.b16 %v3580, %v3576
      %v3809 = vpack.c.b16 %v3581, %v3577
      %v3810 = vpack.c.b16 %v3586, %v3582
      %v3811 = vpack.c.b16 %v3587, %v3583
      %v3812 = vpack.c.b16 %v3588, %v3584
      %v3813 = vpack.c.b16 %v3589, %v3585
      %v3814 = vpack.c.b16 %v3594, %v3590
      %v3815 = vpack.c.b16 %v3595, %v3591
      %v3816 = vpack.c.b16 %v3596, %v3592
      %v3817 = vpack.c.b16 %v3597, %v3593
      %v3818 = vpack.c.b16 %v3602, %v3598
      %v3819 = vpack.c.b16 %v3603, %v3599
      %v3820 = vpack.c.b16 %v3604, %v3600
      %v3821 = vpack.c.b16 %v3605, %v3601
      %v3822 = vpack.c.b16 %v3610, %v3606
      %v3823 = vpack.c.b16 %v3611, %v3607
      %v3824 = vpack.c.b16 %v3612, %v3608
      %v3825 = vpack.c.b16 %v3613, %v3609
      %v3826 = vpack.c.b16 %v3618, %v3614
      %v3827 = vpack.c.b16 %v3619, %v3615
      %v3828 = vpack.c.b16 %v3620, %v3616
      %v3829 = vpack.c.b16 %v3621, %v3617
      %v3830 = vpack.c.b16 %v3626, %v3622
      %v3831 = vpack.c.b16 %v3627, %v3623
      %v3832 = vpack.c.b16 %v3628, %v3624
      %v3833 = vpack.c.b16 %v3629, %v3625
      %v3834 = vpack.c.b16 %v3634, %v3630
      %v3835 = vpack.c.b16 %v3635, %v3631
      %v3836 = vpack.c.b16 %v3636, %v3632
      %v3837 = vpack.c.b16 %v3637, %v3633
      %v3838 = vpack.c.b16 %v3642, %v3638
      %v3839 = vpack.c.b16 %v3643, %v3639
      %v3840 = vpack.c.b16 %v3644, %v3640
      %v3841 = vpack.c.b16 %v3645, %v3641
      %v3842 = vpack.c.b16 %v3650, %v3646
      %v3843 = vpack.c.b16 %v3651, %v3647
      %v3844 = vpack.c.b16 %v3652, %v3648
      %v3845 = vpack.c.b16 %v3653, %v3649
      %v3846 = vpack.c.b16 %v3658, %v3654
      %v3847 = vpack.c.b16 %v3659, %v3655
      %v3848 = vpack.c.b16 %v3660, %v3656
      %v3849 = vpack.c.b16 %v3661, %v3657
      %v3850 = vpack.c.b16 %v3666, %v3662
      %v3851 = vpack.c.b16 %v3667, %v3663
      %v3852 = vpack.c.b16 %v3668, %v3664
      %v3853 = vpack.c.b16 %v3669, %v3665
      %v3854 = vpack.c.b16 %v3674, %v3670
      %v3855 = vpack.c.b16 %v3675, %v3671
      %v3856 = vpack.c.b16 %v3676, %v3672
      %v3857 = vpack.c.b16 %v3677, %v3673
      %v3858 = vpack.c.b16 %v3682, %v3678
      %v3859 = vpack.c.b16 %v3683, %v3679
      %v3860 = vpack.c.b16 %v3684, %v3680
      %v3861 = vpack.c.b16 %v3685, %v3681
      %v3862 = vpack.c.b16 %v3690, %v3686
      %v3863 = vpack.c.b16 %v3691, %v3687
      %v3864 = vpack.c.b16 %v3692, %v3688
      %v3865 = vpack.c.b16 %v3693, %v3689
      %v3866 = vpack.c.b16 %v3698, %v3694
      %v3867 = vpack.c.b16 %v3699, %v3695
      %v3868 = vpack.c.b16 %v3700, %v3696
      %v3869 = vpack.c.b16 %v3701, %v3697
      %v3870 = vpack.c.b16 %v3706, %v3702
      %v3871 = vpack.c.b16 %v3707, %v3703
      %v3872 = vpack.c.b16 %v3708, %v3704
      %v3873 = vpack.c.b16 %v3709, %v3705
      %v3874 = vpack.c.b16 %v3714, %v3710
      %v3875 = vpack.c.b16 %v3715, %v3711
      %v3876 = vpack.c.b16 %v3716, %v3712
      %v3877 = vpack.c.b16 %v3717, %v3713
      %v3878 = vpack.c.b16 %v3722, %v3718
      %v3879 = vpack.c.b16 %v3723, %v3719
      %v3880 = vpack.c.b16 %v3724, %v3720
      %v3881 = vpack.c.b16 %v3725, %v3721
      %v3882 = vpack.c.b16 %v3730, %v3726
      %v3883 = vpack.c.b16 %v3731, %v3727
      %v3884 = vpack.c.b16 %v3732, %v3728
      %v3885 = vpack.c.b16 %v3733, %v3729
      %v3886 = vpack.c.b16 %v3738, %v3734
      %v3887 = vpack.c.b16 %v3739, %v3735
      %v3888 = vpack.c.b16 %v3740, %v3736
      %v3889 = vpack.c.b16 %v3741, %v3737
      %v3890 = vpack.c.b16 %v3746, %v3742
      %v3891 = vpack.c.b16 %v3747, %v3743
      %v3892 = vpack.c.b16 %v3748, %v3744
      %v3893 = vpack.c.b16 %v3749, %v3745
      %v3894 = vpack.c.b16 %v3754, %v3750
      %v3895 = vpack.c.b16 %v3755, %v3751
      %v3896 = vpack.c.b16 %v3756, %v3752
      %v3897 = vpack.c.b16 %v3757, %v3753
      %v3898 = vpack.c.b16 %v3762, %v3758
      %v3899 = vpack.c.b16 %v3763, %v3759
      %v3900 = vpack.c.b16 %v3764, %v3760
      %v3901 = vpack.c.b16 %v3765, %v3761
      %v3902 = vpack.c.b16 %v3770, %v3766
      %v3903 = vpack.c.b16 %v3771, %v3767
      %v3904 = vpack.c.b16 %v3772, %v3768
      %v3905 = vpack.c.b16 %v3773, %v3769
      %v3906 = vpack.c.b16 %v3778, %v3774
      %v3907 = vpack.c.b16 %v3779, %v3775
      %v3908 = vpack.c.b16 %v3780, %v3776
      %v3909 = vpack.c.b16 %v3781, %v3777
      %4038 = vmatprep.subr.bf16.mxu0 %v3811
      %4039 = vmatpush1.bf16.msra.mxu0 %v3810
      %4040 = vmatprep.subr.bf16.mxu0 %v3807
      %4041 = vmatpush1.bf16.msra.mxu0 %v3806
      %4042 = vmatprep.subr.bf16.mxu0 %v3803
      %4043 = vmatpush1.bf16.msra.mxu0 %v3802
      %4044 = vmatprep.subr.bf16.mxu0 %v3799
      %4045 = vmatpush1.bf16.msra.mxu0 %v3798
      %4046 = vmatprep.subr.bf16.mxu0 %v3795
      %4047 = vmatpush1.bf16.msra.mxu0 %v3794
      %4048 = vmatprep.subr.bf16.mxu0 %v3791
      %4049 = vmatpush1.bf16.msra.mxu0 %v3790
      %4050 = vmatprep.subr.bf16.mxu0 %v3787
      %4051 = vmatpush1.bf16.msra.mxu0 %v3786
      %4052 = vmatprep.subr.bf16.mxu0 %v3783
      %4053 = vmatpush1.bf16.msra.mxu0 %v3782
      %4054 = vmatprep.subr.bf16.mxu0 %v3843
      %4055 = vmatpush2.bf16.msra.mxu0 %v3842
      %4056 = vmatprep.subr.bf16.mxu0 %v3839
      %4057 = vmatpush2.bf16.msra.mxu0 %v3838
      %4058 = vmatprep.subr.bf16.mxu0 %v3835
      %4059 = vmatpush2.bf16.msra.mxu0 %v3834
      %4060 = vmatprep.subr.bf16.mxu0 %v3831
      %4061 = vmatpush2.bf16.msra.mxu0 %v3830
      %4062 = vmatprep.subr.bf16.mxu0 %v3827
      %4063 = vmatpush2.bf16.msra.mxu0 %v3826
      %4064 = vmatprep.subr.bf16.mxu0 %v3823
      %4065 = vmatpush2.bf16.msra.mxu0 %v3822
      %4066 = vmatprep.subr.bf16.mxu0 %v3819
      %4067 = vmatpush2.bf16.msra.mxu0 %v3818
      %4068 = vmatprep.subr.bf16.mxu0 %v3815
      %4069 = vmatpush2.bf16.msra.mxu0 %v3814
      %4070 = vmatprep.mubr.bf16.mxu0 %v3226
      %4071 = vmatmul.mubr.bf16.gmra.mxu0 %v3225
      %v4072 = vpop.f32.mrf.mxu0
      %v4073 = vadd.f32 %v3385, %v4072
      %v4074 = vpop.f32.mrf.mxu0
      %v4075 = vadd.f32 %v3389, %v4074
      %v4076 = vpop.f32.mrf.mxu0
      %v4077 = vpop.f32.mrf.mxu0
      %4078 = vdwg.mxu0
      %4079 = vmatprep.subr.bf16.mxu0 %v3875
      %4080 = vmatpush1.bf16.msra.mxu0 %v3874
      %4081 = vmatprep.subr.bf16.mxu0 %v3871
      %4082 = vmatpush1.bf16.msra.mxu0 %v3870
      %4083 = vmatprep.subr.bf16.mxu0 %v3867
      %4084 = vmatpush1.bf16.msra.mxu0 %v3866
      %4085 = vmatprep.subr.bf16.mxu0 %v3863
      %4086 = vmatpush1.bf16.msra.mxu0 %v3862
      %4087 = vmatprep.subr.bf16.mxu0 %v3859
      %4088 = vmatpush1.bf16.msra.mxu0 %v3858
      %4089 = vmatprep.subr.bf16.mxu0 %v3855
      %4090 = vmatpush1.bf16.msra.mxu0 %v3854
      %4091 = vmatprep.subr.bf16.mxu0 %v3851
      %4092 = vmatpush1.bf16.msra.mxu0 %v3850
      %4093 = vmatprep.subr.bf16.mxu0 %v3847
      %4094 = vmatpush1.bf16.msra.mxu0 %v3846
      %4095 = vmatprep.subr.bf16.mxu0 %v3907
      %4096 = vmatpush2.bf16.msra.mxu0 %v3906
      %4097 = vmatprep.subr.bf16.mxu0 %v3903
      %4098 = vmatpush2.bf16.msra.mxu0 %v3902
      %4099 = vmatprep.subr.bf16.mxu0 %v3899
      %4100 = vmatpush2.bf16.msra.mxu0 %v3898
      %4101 = vmatprep.subr.bf16.mxu0 %v3895
      %4102 = vmatpush2.bf16.msra.mxu0 %v3894
      %4103 = vmatprep.subr.bf16.mxu0 %v3891
      %4104 = vmatpush2.bf16.msra.mxu0 %v3890
      %4105 = vmatprep.subr.bf16.mxu0 %v3887
      %4106 = vmatpush2.bf16.msra.mxu0 %v3886
      %4107 = vmatprep.subr.bf16.mxu0 %v3883
      %4108 = vmatpush2.bf16.msra.mxu0 %v3882
      %4109 = vmatprep.subr.bf16.mxu0 %v3879
      %4110 = vmatpush2.bf16.msra.mxu0 %v3878
      %4111 = vmatprep.mubr.bf16.mxu0 %v3228
      %4112 = vmatmul.mubr.bf16.gmra.mxu0 %v3227
      %v4113 = vpop.f32.mrf.mxu0
      %v4114 = vadd.f32 %v4073, %v4113
      %v4115 = vpop.f32.mrf.mxu0
      %v4116 = vadd.f32 %v4075, %v4115
      %v4117 = vpop.f32.mrf.mxu0
      %v4118 = vpop.f32.mrf.mxu0
      %4119 = vdwg.mxu0
      %4120 = vmatprep.subr.bf16.mxu0 %v3813
      %4121 = vmatpush1.bf16.msra.mxu0 %v3812
      %4122 = vmatprep.subr.bf16.mxu0 %v3809
      %4123 = vmatpush1.bf16.msra.mxu0 %v3808
      %4124 = vmatprep.subr.bf16.mxu0 %v3805
      %4125 = vmatpush1.bf16.msra.mxu0 %v3804
      %4126 = vmatprep.subr.bf16.mxu0 %v3801
      %4127 = vmatpush1.bf16.msra.mxu0 %v3800
      %4128 = vmatprep.subr.bf16.mxu0 %v3797
      %4129 = vmatpush1.bf16.msra.mxu0 %v3796
      %4130 = vmatprep.subr.bf16.mxu0 %v3793
      %4131 = vmatpush1.bf16.msra.mxu0 %v3792
      %4132 = vmatprep.subr.bf16.mxu0 %v3789
      %4133 = vmatpush1.bf16.msra.mxu0 %v3788
      %4134 = vmatprep.subr.bf16.mxu0 %v3785
      %4135 = vmatpush1.bf16.msra.mxu0 %v3784
      %4136 = vmatprep.subr.bf16.mxu0 %v3845
      %4137 = vmatpush2.bf16.msra.mxu0 %v3844
      %4138 = vmatprep.subr.bf16.mxu0 %v3841
      %4139 = vmatpush2.bf16.msra.mxu0 %v3840
      %4140 = vmatprep.subr.bf16.mxu0 %v3837
      %4141 = vmatpush2.bf16.msra.mxu0 %v3836
      %4142 = vmatprep.subr.bf16.mxu0 %v3833
      %4143 = vmatpush2.bf16.msra.mxu0 %v3832
      %4144 = vmatprep.subr.bf16.mxu0 %v3829
      %4145 = vmatpush2.bf16.msra.mxu0 %v3828
      %4146 = vmatprep.subr.bf16.mxu0 %v3825
      %4147 = vmatpush2.bf16.msra.mxu0 %v3824
      %4148 = vmatprep.subr.bf16.mxu0 %v3821
      %4149 = vmatpush2.bf16.msra.mxu0 %v3820
      %4150 = vmatprep.subr.bf16.mxu0 %v3817
      %4151 = vmatpush2.bf16.msra.mxu0 %v3816
      %4152 = vmatprep.mubr.bf16.mxu0 %v3226
      %4153 = vmatmul.mubr.bf16.gmra.mxu0 %v3225
      %v4154 = vpop.f32.mrf.mxu0
      %v4155 = vadd.f32 %v3393, %v4154
      %v4156 = vpop.f32.mrf.mxu0
      %v4157 = vadd.f32 %v3397, %v4156
      %v4158 = vpop.f32.mrf.mxu0
      %v4159 = vpop.f32.mrf.mxu0
      %4160 = vdwg.mxu0
      %4161 = vmatprep.subr.bf16.mxu0 %v3877
      %4162 = vmatpush1.bf16.msra.mxu0 %v3876
      %4163 = vmatprep.subr.bf16.mxu0 %v3873
      %4164 = vmatpush1.bf16.msra.mxu0 %v3872
      %4165 = vmatprep.subr.bf16.mxu0 %v3869
      %4166 = vmatpush1.bf16.msra.mxu0 %v3868
      %4167 = vmatprep.subr.bf16.mxu0 %v3865
      %4168 = vmatpush1.bf16.msra.mxu0 %v3864
      %4169 = vmatprep.subr.bf16.mxu0 %v3861
      %4170 = vmatpush1.bf16.msra.mxu0 %v3860
      %4171 = vmatprep.subr.bf16.mxu0 %v3857
      %4172 = vmatpush1.bf16.msra.mxu0 %v3856
      %4173 = vmatprep.subr.bf16.mxu0 %v3853
      %4174 = vmatpush1.bf16.msra.mxu0 %v3852
      %4175 = vmatprep.subr.bf16.mxu0 %v3849
      %4176 = vmatpush1.bf16.msra.mxu0 %v3848
      %4177 = vmatprep.subr.bf16.mxu0 %v3909
      %4178 = vmatpush2.bf16.msra.mxu0 %v3908
      %4179 = vmatprep.subr.bf16.mxu0 %v3905
      %4180 = vmatpush2.bf16.msra.mxu0 %v3904
      %4181 = vmatprep.subr.bf16.mxu0 %v3901
      %4182 = vmatpush2.bf16.msra.mxu0 %v3900
      %4183 = vmatprep.subr.bf16.mxu0 %v3897
      %4184 = vmatpush2.bf16.msra.mxu0 %v3896
      %4185 = vmatprep.subr.bf16.mxu0 %v3893
      %4186 = vmatpush2.bf16.msra.mxu0 %v3892
      %4187 = vmatprep.subr.bf16.mxu0 %v3889
      %4188 = vmatpush2.bf16.msra.mxu0 %v3888
      %4189 = vmatprep.subr.bf16.mxu0 %v3885
      %4190 = vmatpush2.bf16.msra.mxu0 %v3884
      %4191 = vmatprep.subr.bf16.mxu0 %v3881
      %4192 = vmatpush2.bf16.msra.mxu0 %v3880
      %4193 = vmatprep.mubr.bf16.mxu0 %v3228
      %4194 = vmatmul.mubr.bf16.gmra.mxu0 %v3227
      %v4195 = vpop.f32.mrf.mxu0
      %v4196 = vadd.f32 %v4155, %v4195
      %v4197 = vpop.f32.mrf.mxu0
      %v4198 = vadd.f32 %v4157, %v4197
      %v4199 = vpop.f32.mrf.mxu0
      %v4200 = vpop.f32.mrf.mxu0
      %4201 = vdwg.mxu0
      %vm4202 = vcmp.ge.f32.partialorder %v4114, 0.0
      %vm4203 = vcmp.ge.f32.partialorder %v4116, 0.0
      %vm4204 = vcmp.ge.f32.partialorder %v4196, 0.0
      %vm4205 = vcmp.ge.f32.partialorder %v4198, 0.0
      %v4206 = vlaneseq
      %v4207 = vshrl.u32 %v4206, 7
      %v4208 = vsub.s32 1, %v4207
      %v4209 = vrot.slane %v3223, %v4208
      %v4210 = vlaneseq
      %v4211 = vshrl.u32 %v4210, 7
      %v4212 = vsub.s32 5, %v4211
      %v4213 = vrot.slane %v3223, %v4212
      %v4214 = vlaneseq
      %v4215 = vshrl.u32 %v4214, 7
      %v4216 = vsub.s32 1, %v4215
      %v4217 = vrot.slane %v3224, %v4216
      %v4218 = vlaneseq
      %v4219 = vshrl.u32 %v4218, 7
      %v4220 = vsub.s32 5, %v4219
      %v4221 = vrot.slane %v3224, %v4220
      %v4226 = vlaneseq
      %v4227 = vshrl.u32 %v4226, 7
      %v4228 = vsub.s32 1, %v4227
      %v4229 = vrot.slane %v4209, %v4228
      %v4230 = vlaneseq
      %v4231 = vshrl.u32 %v4230, 7
      %v4232 = vsub.s32 1, %v4231
      %v4233 = vrot.slane %v4213, %v4232
      %v4234 = vlaneseq
      %v4235 = vshrl.u32 %v4234, 7
      %v4236 = vsub.s32 1, %v4235
      %v4237 = vrot.slane %v4217, %v4236
      %v4238 = vlaneseq
      %v4239 = vshrl.u32 %v4238, 7
      %v4240 = vsub.s32 1, %v4239
      %v4241 = vrot.slane %v4221, %v4240
      %v4242 = vmul.f32 %v4229, %v4114
      %v4243 = vmul.f32 %v4233, %v4116
      %v4244 = vmul.f32 %v4237, %v4196
      %v4245 = vmul.f32 %v4241, %v4198
      %v4246 = vsel %vm4202, %v4114, %v4242
      %v4247 = vsel %vm4203, %v4116, %v4243
      %v4248 = vsel %vm4204, %v4196, %v4244
      %v4249 = vsel %vm4205, %v4198, %v4245
      %v4250 = vpack.c.bf16 %v4246, %v4246
      %v4251 = vpack.c.bf16 %v4247, %v4247
      %v4252 = vpack.c.bf16 %v4248, %v4248
      %v4253 = vpack.c.bf16 %v4249, %v4249
      %s4254 = smul.addr %s3229, 4
      %s4255 = scalar_lea.vmem [#allocation9], %s4254
      %v4256 = vld [vmem:[%s4255] sm:$0xff]
      %v4257 = vld [vmem:[%s4255 + $0x8] sm:$0xff]
      %v4258 = vld [vmem:[%s4255 + $0x10] sm:$0xff]
      %v4259 = vld [vmem:[%s4255 + $0x18] sm:$0xff]
      %v4260 = vld [vmem:[%s4255 + $0x20] sm:$0xff]
      %v4261 = vld [vmem:[%s4255 + $0x28] sm:$0xff]
      %v4262 = vld [vmem:[%s4255 + $0x30] sm:$0xff]
      %v4263 = vld [vmem:[%s4255 + $0x38] sm:$0xff]
      %v4264 = vld [vmem:[%s4255 + $0x40] sm:$0xff]
      %v4265 = vld [vmem:[%s4255 + $0x48] sm:$0xff]
      %v4266 = vld [vmem:[%s4255 + $0x50] sm:$0xff]
      %v4267 = vld [vmem:[%s4255 + $0x58] sm:$0xff]
      %v4268 = vld [vmem:[%s4255 + $0x60] sm:$0xff]
      %v4269 = vld [vmem:[%s4255 + $0x68] sm:$0xff]
      %v4270 = vld [vmem:[%s4255 + $0x70] sm:$0xff]
      %v4271 = vld [vmem:[%s4255 + $0x78] sm:$0xff]
      %v4272 = vld [vmem:[%s4255 + $0x80] sm:$0xff]
      %v4273 = vld [vmem:[%s4255 + $0x88] sm:$0xff]
      %v4274 = vld [vmem:[%s4255 + $0x90] sm:$0xff]
      %v4275 = vld [vmem:[%s4255 + $0x98] sm:$0xff]
      %v4276 = vld [vmem:[%s4255 + $0xa0] sm:$0xff]
      %v4277 = vld [vmem:[%s4255 + $0xa8] sm:$0xff]
      %v4278 = vld [vmem:[%s4255 + $0xb0] sm:$0xff]
      %v4279 = vld [vmem:[%s4255 + $0xb8] sm:$0xff]
      %v4280 = vld [vmem:[%s4255 + $0xc0] sm:$0xff]
      %v4281 = vld [vmem:[%s4255 + $0xc8] sm:$0xff]
      %v4282 = vld [vmem:[%s4255 + $0xd0] sm:$0xff]
      %v4283 = vld [vmem:[%s4255 + $0xd8] sm:$0xff]
      %v4284 = vld [vmem:[%s4255 + $0xe0] sm:$0xff]
      %v4285 = vld [vmem:[%s4255 + $0xe8] sm:$0xff]
      %v4286 = vld [vmem:[%s4255 + $0xf0] sm:$0xff]
      %v4287 = vld [vmem:[%s4255 + $0xf8] sm:$0xff]
      %v4288 = vld [vmem:[%s4255 + $0x100] sm:$0xff]
      %v4289 = vld [vmem:[%s4255 + $0x108] sm:$0xff]
      %v4290 = vld [vmem:[%s4255 + $0x110] sm:$0xff]
      %v4291 = vld [vmem:[%s4255 + $0x118] sm:$0xff]
      %v4292 = vld [vmem:[%s4255 + $0x120] sm:$0xff]
      %v4293 = vld [vmem:[%s4255 + $0x128] sm:$0xff]
      %v4294 = vld [vmem:[%s4255 + $0x130] sm:$0xff]
      %v4295 = vld [vmem:[%s4255 + $0x138] sm:$0xff]
      %v4296 = vld [vmem:[%s4255 + $0x140] sm:$0xff]
      %v4297 = vld [vmem:[%s4255 + $0x148] sm:$0xff]
      %v4298 = vld [vmem:[%s4255 + $0x150] sm:$0xff]
      %v4299 = vld [vmem:[%s4255 + $0x158] sm:$0xff]
      %v4300 = vld [vmem:[%s4255 + $0x160] sm:$0xff]
      %v4301 = vld [vmem:[%s4255 + $0x168] sm:$0xff]
      %v4302 = vld [vmem:[%s4255 + $0x170] sm:$0xff]
      %v4303 = vld [vmem:[%s4255 + $0x178] sm:$0xff]
      %v4304 = vld [vmem:[%s4255 + $0x180] sm:$0xff]
      %v4305 = vld [vmem:[%s4255 + $0x188] sm:$0xff]
      %v4306 = vld [vmem:[%s4255 + $0x190] sm:$0xff]
      %v4307 = vld [vmem:[%s4255 + $0x198] sm:$0xff]
      %v4308 = vld [vmem:[%s4255 + $0x1a0] sm:$0xff]
      %v4309 = vld [vmem:[%s4255 + $0x1a8] sm:$0xff]
      %v4310 = vld [vmem:[%s4255 + $0x1b0] sm:$0xff]
      %v4311 = vld [vmem:[%s4255 + $0x1b8] sm:$0xff]
      %v4312 = vld [vmem:[%s4255 + $0x1c0] sm:$0xff]
      %v4313 = vld [vmem:[%s4255 + $0x1c8] sm:$0xff]
      %v4314 = vld [vmem:[%s4255 + $0x1d0] sm:$0xff]
      %v4315 = vld [vmem:[%s4255 + $0x1d8] sm:$0xff]
      %v4316 = vld [vmem:[%s4255 + $0x1e0] sm:$0xff]
      %v4317 = vld [vmem:[%s4255 + $0x1e8] sm:$0xff]
      %v4318 = vld [vmem:[%s4255 + $0x1f0] sm:$0xff]
      %v4319 = vld [vmem:[%s4255 + $0x1f8] sm:$0xff]
      %v4320 = vld [vmem:[%s4255 + $0x200] sm:$0xff]
      %v4321 = vld [vmem:[%s4255 + $0x208] sm:$0xff]
      %v4322 = vld [vmem:[%s4255 + $0x210] sm:$0xff]
      %v4323 = vld [vmem:[%s4255 + $0x218] sm:$0xff]
      %v4324 = vld [vmem:[%s4255 + $0x220] sm:$0xff]
      %v4325 = vld [vmem:[%s4255 + $0x228] sm:$0xff]
      %v4326 = vld [vmem:[%s4255 + $0x230] sm:$0xff]
      %v4327 = vld [vmem:[%s4255 + $0x238] sm:$0xff]
      %v4328 = vld [vmem:[%s4255 + $0x240] sm:$0xff]
      %v4329 = vld [vmem:[%s4255 + $0x248] sm:$0xff]
      %v4330 = vld [vmem:[%s4255 + $0x250] sm:$0xff]
      %v4331 = vld [vmem:[%s4255 + $0x258] sm:$0xff]
      %v4332 = vld [vmem:[%s4255 + $0x260] sm:$0xff]
      %v4333 = vld [vmem:[%s4255 + $0x268] sm:$0xff]
      %v4334 = vld [vmem:[%s4255 + $0x270] sm:$0xff]
      %v4335 = vld [vmem:[%s4255 + $0x278] sm:$0xff]
      %v4336 = vld [vmem:[%s4255 + $0x280] sm:$0xff]
      %v4337 = vld [vmem:[%s4255 + $0x288] sm:$0xff]
      %v4338 = vld [vmem:[%s4255 + $0x290] sm:$0xff]
      %v4339 = vld [vmem:[%s4255 + $0x298] sm:$0xff]
      %v4340 = vld [vmem:[%s4255 + $0x2a0] sm:$0xff]
      %v4341 = vld [vmem:[%s4255 + $0x2a8] sm:$0xff]
      %v4342 = vld [vmem:[%s4255 + $0x2b0] sm:$0xff]
      %v4343 = vld [vmem:[%s4255 + $0x2b8] sm:$0xff]
      %v4344 = vld [vmem:[%s4255 + $0x2c0] sm:$0xff]
      %v4345 = vld [vmem:[%s4255 + $0x2c8] sm:$0xff]
      %v4346 = vld [vmem:[%s4255 + $0x2d0] sm:$0xff]
      %v4347 = vld [vmem:[%s4255 + $0x2d8] sm:$0xff]
      %v4348 = vld [vmem:[%s4255 + $0x2e0] sm:$0xff]
      %v4349 = vld [vmem:[%s4255 + $0x2e8] sm:$0xff]
      %v4350 = vld [vmem:[%s4255 + $0x2f0] sm:$0xff]
      %v4351 = vld [vmem:[%s4255 + $0x2f8] sm:$0xff]
      %v4352 = vld [vmem:[%s4255 + $0x300] sm:$0xff]
      %v4353 = vld [vmem:[%s4255 + $0x308] sm:$0xff]
      %v4354 = vld [vmem:[%s4255 + $0x310] sm:$0xff]
      %v4355 = vld [vmem:[%s4255 + $0x318] sm:$0xff]
      %v4356 = vld [vmem:[%s4255 + $0x320] sm:$0xff]
      %v4357 = vld [vmem:[%s4255 + $0x328] sm:$0xff]
      %v4358 = vld [vmem:[%s4255 + $0x330] sm:$0xff]
      %v4359 = vld [vmem:[%s4255 + $0x338] sm:$0xff]
      %v4360 = vld [vmem:[%s4255 + $0x340] sm:$0xff]
      %v4361 = vld [vmem:[%s4255 + $0x348] sm:$0xff]
      %v4362 = vld [vmem:[%s4255 + $0x350] sm:$0xff]
      %v4363 = vld [vmem:[%s4255 + $0x358] sm:$0xff]
      %v4364 = vld [vmem:[%s4255 + $0x360] sm:$0xff]
      %v4365 = vld [vmem:[%s4255 + $0x368] sm:$0xff]
      %v4366 = vld [vmem:[%s4255 + $0x370] sm:$0xff]
      %v4367 = vld [vmem:[%s4255 + $0x378] sm:$0xff]
      %v4368 = vld [vmem:[%s4255 + $0x380] sm:$0xff]
      %v4369 = vld [vmem:[%s4255 + $0x388] sm:$0xff]
      %v4370 = vld [vmem:[%s4255 + $0x390] sm:$0xff]
      %v4371 = vld [vmem:[%s4255 + $0x398] sm:$0xff]
      %v4372 = vld [vmem:[%s4255 + $0x3a0] sm:$0xff]
      %v4373 = vld [vmem:[%s4255 + $0x3a8] sm:$0xff]
      %v4374 = vld [vmem:[%s4255 + $0x3b0] sm:$0xff]
      %v4375 = vld [vmem:[%s4255 + $0x3b8] sm:$0xff]
      %v4376 = vld [vmem:[%s4255 + $0x3c0] sm:$0xff]
      %v4377 = vld [vmem:[%s4255 + $0x3c8] sm:$0xff]
      %v4378 = vld [vmem:[%s4255 + $0x3d0] sm:$0xff]
      %v4379 = vld [vmem:[%s4255 + $0x3d8] sm:$0xff]
      %v4380 = vld [vmem:[%s4255 + $0x3e0] sm:$0xff]
      %v4381 = vld [vmem:[%s4255 + $0x3e8] sm:$0xff]
      %v4382 = vld [vmem:[%s4255 + $0x3f0] sm:$0xff]
      %v4383 = vld [vmem:[%s4255 + $0x3f8] sm:$0xff]
      %v4384 = vlaneseq
      %v4385 = vshrl.u32 %v4384, 7
      %v4386 = vsub.s32 2, %v4385
      %v4387 = vrot.slane %v3223, %v4386
      %v4388 = vlaneseq
      %v4389 = vshrl.u32 %v4388, 7
      %v4390 = vsub.s32 6, %v4389
      %v4391 = vrot.slane %v3223, %v4390
      %v4392 = vlaneseq
      %v4393 = vshrl.u32 %v4392, 7
      %v4394 = vsub.s32 2, %v4393
      %v4395 = vrot.slane %v3224, %v4394
      %v4396 = vlaneseq
      %v4397 = vshrl.u32 %v4396, 7
      %v4398 = vsub.s32 6, %v4397
      %v4399 = vrot.slane %v3224, %v4398
      %v4404 = vlaneseq
      %v4405 = vshrl.u32 %v4404, 7
      %v4406 = vsub.s32 2, %v4405
      %v4407 = vrot.slane %v4387, %v4406
      %v4408 = vlaneseq
      %v4409 = vshrl.u32 %v4408, 7
      %v4410 = vsub.s32 2, %v4409
      %v4411 = vrot.slane %v4391, %v4410
      %v4412 = vlaneseq
      %v4413 = vshrl.u32 %v4412, 7
      %v4414 = vsub.s32 2, %v4413
      %v4415 = vrot.slane %v4395, %v4414
      %v4416 = vlaneseq
      %v4417 = vshrl.u32 %v4416, 7
      %v4418 = vsub.s32 2, %v4417
      %v4419 = vrot.slane %v4399, %v4418
      %v4548 = vunpack.c.l.b16 %v4256
      %v4549 = vunpack.c.h.b16 %v4256
      %v4550 = vunpack.c.l.b16 %v4257
      %v4551 = vunpack.c.h.b16 %v4257
      %v4552 = vunpack.c.l.b16 %v4258
      %v4553 = vunpack.c.h.b16 %v4258
      %v4554 = vunpack.c.l.b16 %v4259
      %v4555 = vunpack.c.h.b16 %v4259
      %v4556 = vunpack.c.l.b16 %v4260
      %v4557 = vunpack.c.h.b16 %v4260
      %v4558 = vunpack.c.l.b16 %v4261
      %v4559 = vunpack.c.h.b16 %v4261
      %v4560 = vunpack.c.l.b16 %v4262
      %v4561 = vunpack.c.h.b16 %v4262
      %v4562 = vunpack.c.l.b16 %v4263
      %v4563 = vunpack.c.h.b16 %v4263
      %v4564 = vunpack.c.l.b16 %v4264
      %v4565 = vunpack.c.h.b16 %v4264
      %v4566 = vunpack.c.l.b16 %v4265
      %v4567 = vunpack.c.h.b16 %v4265
      %v4568 = vunpack.c.l.b16 %v4266
      %v4569 = vunpack.c.h.b16 %v4266
      %v4570 = vunpack.c.l.b16 %v4267
      %v4571 = vunpack.c.h.b16 %v4267
      %v4572 = vunpack.c.l.b16 %v4268
      %v4573 = vunpack.c.h.b16 %v4268
      %v4574 = vunpack.c.l.b16 %v4269
      %v4575 = vunpack.c.h.b16 %v4269
      %v4576 = vunpack.c.l.b16 %v4270
      %v4577 = vunpack.c.h.b16 %v4270
      %v4578 = vunpack.c.l.b16 %v4271
      %v4579 = vunpack.c.h.b16 %v4271
      %v4580 = vunpack.c.l.b16 %v4272
      %v4581 = vunpack.c.h.b16 %v4272
      %v4582 = vunpack.c.l.b16 %v4273
      %v4583 = vunpack.c.h.b16 %v4273
      %v4584 = vunpack.c.l.b16 %v4274
      %v4585 = vunpack.c.h.b16 %v4274
      %v4586 = vunpack.c.l.b16 %v4275
      %v4587 = vunpack.c.h.b16 %v4275
      %v4588 = vunpack.c.l.b16 %v4276
      %v4589 = vunpack.c.h.b16 %v4276
      %v4590 = vunpack.c.l.b16 %v4277
      %v4591 = vunpack.c.h.b16 %v4277
      %v4592 = vunpack.c.l.b16 %v4278
      %v4593 = vunpack.c.h.b16 %v4278
      %v4594 = vunpack.c.l.b16 %v4279
      %v4595 = vunpack.c.h.b16 %v4279
      %v4596 = vunpack.c.l.b16 %v4280
      %v4597 = vunpack.c.h.b16 %v4280
      %v4598 = vunpack.c.l.b16 %v4281
      %v4599 = vunpack.c.h.b16 %v4281
      %v4600 = vunpack.c.l.b16 %v4282
      %v4601 = vunpack.c.h.b16 %v4282
      %v4602 = vunpack.c.l.b16 %v4283
      %v4603 = vunpack.c.h.b16 %v4283
      %v4604 = vunpack.c.l.b16 %v4284
      %v4605 = vunpack.c.h.b16 %v4284
      %v4606 = vunpack.c.l.b16 %v4285
      %v4607 = vunpack.c.h.b16 %v4285
      %v4608 = vunpack.c.l.b16 %v4286
      %v4609 = vunpack.c.h.b16 %v4286
      %v4610 = vunpack.c.l.b16 %v4287
      %v4611 = vunpack.c.h.b16 %v4287
      %v4612 = vunpack.c.l.b16 %v4288
      %v4613 = vunpack.c.h.b16 %v4288
      %v4614 = vunpack.c.l.b16 %v4289
      %v4615 = vunpack.c.h.b16 %v4289
      %v4616 = vunpack.c.l.b16 %v4290
      %v4617 = vunpack.c.h.b16 %v4290
      %v4618 = vunpack.c.l.b16 %v4291
      %v4619 = vunpack.c.h.b16 %v4291
      %v4620 = vunpack.c.l.b16 %v4292
      %v4621 = vunpack.c.h.b16 %v4292
      %v4622 = vunpack.c.l.b16 %v4293
      %v4623 = vunpack.c.h.b16 %v4293
      %v4624 = vunpack.c.l.b16 %v4294
      %v4625 = vunpack.c.h.b16 %v4294
      %v4626 = vunpack.c.l.b16 %v4295
      %v4627 = vunpack.c.h.b16 %v4295
      %v4628 = vunpack.c.l.b16 %v4296
      %v4629 = vunpack.c.h.b16 %v4296
      %v4630 = vunpack.c.l.b16 %v4297
      %v4631 = vunpack.c.h.b16 %v4297
      %v4632 = vunpack.c.l.b16 %v4298
      %v4633 = vunpack.c.h.b16 %v4298
      %v4634 = vunpack.c.l.b16 %v4299
      %v4635 = vunpack.c.h.b16 %v4299
      %v4636 = vunpack.c.l.b16 %v4300
      %v4637 = vunpack.c.h.b16 %v4300
      %v4638 = vunpack.c.l.b16 %v4301
      %v4639 = vunpack.c.h.b16 %v4301
      %v4640 = vunpack.c.l.b16 %v4302
      %v4641 = vunpack.c.h.b16 %v4302
      %v4642 = vunpack.c.l.b16 %v4303
      %v4643 = vunpack.c.h.b16 %v4303
      %v4644 = vunpack.c.l.b16 %v4304
      %v4645 = vunpack.c.h.b16 %v4304
      %v4646 = vunpack.c.l.b16 %v4305
      %v4647 = vunpack.c.h.b16 %v4305
      %v4648 = vunpack.c.l.b16 %v4306
      %v4649 = vunpack.c.h.b16 %v4306
      %v4650 = vunpack.c.l.b16 %v4307
      %v4651 = vunpack.c.h.b16 %v4307
      %v4652 = vunpack.c.l.b16 %v4308
      %v4653 = vunpack.c.h.b16 %v4308
      %v4654 = vunpack.c.l.b16 %v4309
      %v4655 = vunpack.c.h.b16 %v4309
      %v4656 = vunpack.c.l.b16 %v4310
      %v4657 = vunpack.c.h.b16 %v4310
      %v4658 = vunpack.c.l.b16 %v4311
      %v4659 = vunpack.c.h.b16 %v4311
      %v4660 = vunpack.c.l.b16 %v4312
      %v4661 = vunpack.c.h.b16 %v4312
      %v4662 = vunpack.c.l.b16 %v4313
      %v4663 = vunpack.c.h.b16 %v4313
      %v4664 = vunpack.c.l.b16 %v4314
      %v4665 = vunpack.c.h.b16 %v4314
      %v4666 = vunpack.c.l.b16 %v4315
      %v4667 = vunpack.c.h.b16 %v4315
      %v4668 = vunpack.c.l.b16 %v4316
      %v4669 = vunpack.c.h.b16 %v4316
      %v4670 = vunpack.c.l.b16 %v4317
      %v4671 = vunpack.c.h.b16 %v4317
      %v4672 = vunpack.c.l.b16 %v4318
      %v4673 = vunpack.c.h.b16 %v4318
      %v4674 = vunpack.c.l.b16 %v4319
      %v4675 = vunpack.c.h.b16 %v4319
      %v4676 = vunpack.c.l.b16 %v4320
      %v4677 = vunpack.c.h.b16 %v4320
      %v4678 = vunpack.c.l.b16 %v4321
      %v4679 = vunpack.c.h.b16 %v4321
      %v4680 = vunpack.c.l.b16 %v4322
      %v4681 = vunpack.c.h.b16 %v4322
      %v4682 = vunpack.c.l.b16 %v4323
      %v4683 = vunpack.c.h.b16 %v4323
      %v4684 = vunpack.c.l.b16 %v4324
      %v4685 = vunpack.c.h.b16 %v4324
      %v4686 = vunpack.c.l.b16 %v4325
      %v4687 = vunpack.c.h.b16 %v4325
      %v4688 = vunpack.c.l.b16 %v4326
      %v4689 = vunpack.c.h.b16 %v4326
      %v4690 = vunpack.c.l.b16 %v4327
      %v4691 = vunpack.c.h.b16 %v4327
      %v4692 = vunpack.c.l.b16 %v4328
      %v4693 = vunpack.c.h.b16 %v4328
      %v4694 = vunpack.c.l.b16 %v4329
      %v4695 = vunpack.c.h.b16 %v4329
      %v4696 = vunpack.c.l.b16 %v4330
      %v4697 = vunpack.c.h.b16 %v4330
      %v4698 = vunpack.c.l.b16 %v4331
      %v4699 = vunpack.c.h.b16 %v4331
      %v4700 = vunpack.c.l.b16 %v4332
      %v4701 = vunpack.c.h.b16 %v4332
      %v4702 = vunpack.c.l.b16 %v4333
      %v4703 = vunpack.c.h.b16 %v4333
      %v4704 = vunpack.c.l.b16 %v4334
      %v4705 = vunpack.c.h.b16 %v4334
      %v4706 = vunpack.c.l.b16 %v4335
      %v4707 = vunpack.c.h.b16 %v4335
      %v4708 = vunpack.c.l.b16 %v4336
      %v4709 = vunpack.c.h.b16 %v4336
      %v4710 = vunpack.c.l.b16 %v4337
      %v4711 = vunpack.c.h.b16 %v4337
      %v4712 = vunpack.c.l.b16 %v4338
      %v4713 = vunpack.c.h.b16 %v4338
      %v4714 = vunpack.c.l.b16 %v4339
      %v4715 = vunpack.c.h.b16 %v4339
      %v4716 = vunpack.c.l.b16 %v4340
      %v4717 = vunpack.c.h.b16 %v4340
      %v4718 = vunpack.c.l.b16 %v4341
      %v4719 = vunpack.c.h.b16 %v4341
      %v4720 = vunpack.c.l.b16 %v4342
      %v4721 = vunpack.c.h.b16 %v4342
      %v4722 = vunpack.c.l.b16 %v4343
      %v4723 = vunpack.c.h.b16 %v4343
      %v4724 = vunpack.c.l.b16 %v4344
      %v4725 = vunpack.c.h.b16 %v4344
      %v4726 = vunpack.c.l.b16 %v4345
      %v4727 = vunpack.c.h.b16 %v4345
      %v4728 = vunpack.c.l.b16 %v4346
      %v4729 = vunpack.c.h.b16 %v4346
      %v4730 = vunpack.c.l.b16 %v4347
      %v4731 = vunpack.c.h.b16 %v4347
      %v4732 = vunpack.c.l.b16 %v4348
      %v4733 = vunpack.c.h.b16 %v4348
      %v4734 = vunpack.c.l.b16 %v4349
      %v4735 = vunpack.c.h.b16 %v4349
      %v4736 = vunpack.c.l.b16 %v4350
      %v4737 = vunpack.c.h.b16 %v4350
      %v4738 = vunpack.c.l.b16 %v4351
      %v4739 = vunpack.c.h.b16 %v4351
      %v4740 = vunpack.c.l.b16 %v4352
      %v4741 = vunpack.c.h.b16 %v4352
      %v4742 = vunpack.c.l.b16 %v4353
      %v4743 = vunpack.c.h.b16 %v4353
      %v4744 = vunpack.c.l.b16 %v4354
      %v4745 = vunpack.c.h.b16 %v4354
      %v4746 = vunpack.c.l.b16 %v4355
      %v4747 = vunpack.c.h.b16 %v4355
      %v4748 = vunpack.c.l.b16 %v4356
      %v4749 = vunpack.c.h.b16 %v4356
      %v4750 = vunpack.c.l.b16 %v4357
      %v4751 = vunpack.c.h.b16 %v4357
      %v4752 = vunpack.c.l.b16 %v4358
      %v4753 = vunpack.c.h.b16 %v4358
      %v4754 = vunpack.c.l.b16 %v4359
      %v4755 = vunpack.c.h.b16 %v4359
      %v4756 = vunpack.c.l.b16 %v4360
      %v4757 = vunpack.c.h.b16 %v4360
      %v4758 = vunpack.c.l.b16 %v4361
      %v4759 = vunpack.c.h.b16 %v4361
      %v4760 = vunpack.c.l.b16 %v4362
      %v4761 = vunpack.c.h.b16 %v4362
      %v4762 = vunpack.c.l.b16 %v4363
      %v4763 = vunpack.c.h.b16 %v4363
      %v4764 = vunpack.c.l.b16 %v4364
      %v4765 = vunpack.c.h.b16 %v4364
      %v4766 = vunpack.c.l.b16 %v4365
      %v4767 = vunpack.c.h.b16 %v4365
      %v4768 = vunpack.c.l.b16 %v4366
      %v4769 = vunpack.c.h.b16 %v4366
      %v4770 = vunpack.c.l.b16 %v4367
      %v4771 = vunpack.c.h.b16 %v4367
      %v4772 = vunpack.c.l.b16 %v4368
      %v4773 = vunpack.c.h.b16 %v4368
      %v4774 = vunpack.c.l.b16 %v4369
      %v4775 = vunpack.c.h.b16 %v4369
      %v4776 = vunpack.c.l.b16 %v4370
      %v4777 = vunpack.c.h.b16 %v4370
      %v4778 = vunpack.c.l.b16 %v4371
      %v4779 = vunpack.c.h.b16 %v4371
      %v4780 = vunpack.c.l.b16 %v4372
      %v4781 = vunpack.c.h.b16 %v4372
      %v4782 = vunpack.c.l.b16 %v4373
      %v4783 = vunpack.c.h.b16 %v4373
      %v4784 = vunpack.c.l.b16 %v4374
      %v4785 = vunpack.c.h.b16 %v4374
      %v4786 = vunpack.c.l.b16 %v4375
      %v4787 = vunpack.c.h.b16 %v4375
      %v4788 = vunpack.c.l.b16 %v4376
      %v4789 = vunpack.c.h.b16 %v4376
      %v4790 = vunpack.c.l.b16 %v4377
      %v4791 = vunpack.c.h.b16 %v4377
      %v4792 = vunpack.c.l.b16 %v4378
      %v4793 = vunpack.c.h.b16 %v4378
      %v4794 = vunpack.c.l.b16 %v4379
      %v4795 = vunpack.c.h.b16 %v4379
      %v4796 = vunpack.c.l.b16 %v4380
      %v4797 = vunpack.c.h.b16 %v4380
      %v4798 = vunpack.c.l.b16 %v4381
      %v4799 = vunpack.c.h.b16 %v4381
      %v4800 = vunpack.c.l.b16 %v4382
      %v4801 = vunpack.c.h.b16 %v4382
      %v4802 = vunpack.c.l.b16 %v4383
      %v4803 = vunpack.c.h.b16 %v4383
      %v4804 = vpack.c.b16 %v4552, %v4548
      %v4805 = vpack.c.b16 %v4553, %v4549
      %v4806 = vpack.c.b16 %v4554, %v4550
      %v4807 = vpack.c.b16 %v4555, %v4551
      %v4808 = vpack.c.b16 %v4560, %v4556
      %v4809 = vpack.c.b16 %v4561, %v4557
      %v4810 = vpack.c.b16 %v4562, %v4558
      %v4811 = vpack.c.b16 %v4563, %v4559
      %v4812 = vpack.c.b16 %v4568, %v4564
      %v4813 = vpack.c.b16 %v4569, %v4565
      %v4814 = vpack.c.b16 %v4570, %v4566
      %v4815 = vpack.c.b16 %v4571, %v4567
      %v4816 = vpack.c.b16 %v4576, %v4572
      %v4817 = vpack.c.b16 %v4577, %v4573
      %v4818 = vpack.c.b16 %v4578, %v4574
      %v4819 = vpack.c.b16 %v4579, %v4575
      %v4820 = vpack.c.b16 %v4584, %v4580
      %v4821 = vpack.c.b16 %v4585, %v4581
      %v4822 = vpack.c.b16 %v4586, %v4582
      %v4823 = vpack.c.b16 %v4587, %v4583
      %v4824 = vpack.c.b16 %v4592, %v4588
      %v4825 = vpack.c.b16 %v4593, %v4589
      %v4826 = vpack.c.b16 %v4594, %v4590
      %v4827 = vpack.c.b16 %v4595, %v4591
      %v4828 = vpack.c.b16 %v4600, %v4596
      %v4829 = vpack.c.b16 %v4601, %v4597
      %v4830 = vpack.c.b16 %v4602, %v4598
      %v4831 = vpack.c.b16 %v4603, %v4599
      %v4832 = vpack.c.b16 %v4608, %v4604
      %v4833 = vpack.c.b16 %v4609, %v4605
      %v4834 = vpack.c.b16 %v4610, %v4606
      %v4835 = vpack.c.b16 %v4611, %v4607
      %v4836 = vpack.c.b16 %v4616, %v4612
      %v4837 = vpack.c.b16 %v4617, %v4613
      %v4838 = vpack.c.b16 %v4618, %v4614
      %v4839 = vpack.c.b16 %v4619, %v4615
      %v4840 = vpack.c.b16 %v4624, %v4620
      %v4841 = vpack.c.b16 %v4625, %v4621
      %v4842 = vpack.c.b16 %v4626, %v4622
      %v4843 = vpack.c.b16 %v4627, %v4623
      %v4844 = vpack.c.b16 %v4632, %v4628
      %v4845 = vpack.c.b16 %v4633, %v4629
      %v4846 = vpack.c.b16 %v4634, %v4630
      %v4847 = vpack.c.b16 %v4635, %v4631
      %v4848 = vpack.c.b16 %v4640, %v4636
      %v4849 = vpack.c.b16 %v4641, %v4637
      %v4850 = vpack.c.b16 %v4642, %v4638
      %v4851 = vpack.c.b16 %v4643, %v4639
      %v4852 = vpack.c.b16 %v4648, %v4644
      %v4853 = vpack.c.b16 %v4649, %v4645
      %v4854 = vpack.c.b16 %v4650, %v4646
      %v4855 = vpack.c.b16 %v4651, %v4647
      %v4856 = vpack.c.b16 %v4656, %v4652
      %v4857 = vpack.c.b16 %v4657, %v4653
      %v4858 = vpack.c.b16 %v4658, %v4654
      %v4859 = vpack.c.b16 %v4659, %v4655
      %v4860 = vpack.c.b16 %v4664, %v4660
      %v4861 = vpack.c.b16 %v4665, %v4661
      %v4862 = vpack.c.b16 %v4666, %v4662
      %v4863 = vpack.c.b16 %v4667, %v4663
      %v4864 = vpack.c.b16 %v4672, %v4668
      %v4865 = vpack.c.b16 %v4673, %v4669
      %v4866 = vpack.c.b16 %v4674, %v4670
      %v4867 = vpack.c.b16 %v4675, %v4671
      %v4868 = vpack.c.b16 %v4680, %v4676
      %v4869 = vpack.c.b16 %v4681, %v4677
      %v4870 = vpack.c.b16 %v4682, %v4678
      %v4871 = vpack.c.b16 %v4683, %v4679
      %v4872 = vpack.c.b16 %v4688, %v4684
      %v4873 = vpack.c.b16 %v4689, %v4685
      %v4874 = vpack.c.b16 %v4690, %v4686
      %v4875 = vpack.c.b16 %v4691, %v4687
      %v4876 = vpack.c.b16 %v4696, %v4692
      %v4877 = vpack.c.b16 %v4697, %v4693
      %v4878 = vpack.c.b16 %v4698, %v4694
      %v4879 = vpack.c.b16 %v4699, %v4695
      %v4880 = vpack.c.b16 %v4704, %v4700
      %v4881 = vpack.c.b16 %v4705, %v4701
      %v4882 = vpack.c.b16 %v4706, %v4702
      %v4883 = vpack.c.b16 %v4707, %v4703
      %v4884 = vpack.c.b16 %v4712, %v4708
      %v4885 = vpack.c.b16 %v4713, %v4709
      %v4886 = vpack.c.b16 %v4714, %v4710
      %v4887 = vpack.c.b16 %v4715, %v4711
      %v4888 = vpack.c.b16 %v4720, %v4716
      %v4889 = vpack.c.b16 %v4721, %v4717
      %v4890 = vpack.c.b16 %v4722, %v4718
      %v4891 = vpack.c.b16 %v4723, %v4719
      %v4892 = vpack.c.b16 %v4728, %v4724
      %v4893 = vpack.c.b16 %v4729, %v4725
      %v4894 = vpack.c.b16 %v4730, %v4726
      %v4895 = vpack.c.b16 %v4731, %v4727
      %v4896 = vpack.c.b16 %v4736, %v4732
      %v4897 = vpack.c.b16 %v4737, %v4733
      %v4898 = vpack.c.b16 %v4738, %v4734
      %v4899 = vpack.c.b16 %v4739, %v4735
      %v4900 = vpack.c.b16 %v4744, %v4740
      %v4901 = vpack.c.b16 %v4745, %v4741
      %v4902 = vpack.c.b16 %v4746, %v4742
      %v4903 = vpack.c.b16 %v4747, %v4743
      %v4904 = vpack.c.b16 %v4752, %v4748
      %v4905 = vpack.c.b16 %v4753, %v4749
      %v4906 = vpack.c.b16 %v4754, %v4750
      %v4907 = vpack.c.b16 %v4755, %v4751
      %v4908 = vpack.c.b16 %v4760, %v4756
      %v4909 = vpack.c.b16 %v4761, %v4757
      %v4910 = vpack.c.b16 %v4762, %v4758
      %v4911 = vpack.c.b16 %v4763, %v4759
      %v4912 = vpack.c.b16 %v4768, %v4764
      %v4913 = vpack.c.b16 %v4769, %v4765
      %v4914 = vpack.c.b16 %v4770, %v4766
      %v4915 = vpack.c.b16 %v4771, %v4767
      %v4916 = vpack.c.b16 %v4776, %v4772
      %v4917 = vpack.c.b16 %v4777, %v4773
      %v4918 = vpack.c.b16 %v4778, %v4774
      %v4919 = vpack.c.b16 %v4779, %v4775
      %v4920 = vpack.c.b16 %v4784, %v4780
      %v4921 = vpack.c.b16 %v4785, %v4781
      %v4922 = vpack.c.b16 %v4786, %v4782
      %v4923 = vpack.c.b16 %v4787, %v4783
      %v4924 = vpack.c.b16 %v4792, %v4788
      %v4925 = vpack.c.b16 %v4793, %v4789
      %v4926 = vpack.c.b16 %v4794, %v4790
      %v4927 = vpack.c.b16 %v4795, %v4791
      %v4928 = vpack.c.b16 %v4800, %v4796
      %v4929 = vpack.c.b16 %v4801, %v4797
      %v4930 = vpack.c.b16 %v4802, %v4798
      %v4931 = vpack.c.b16 %v4803, %v4799
      %5060 = vmatprep.subr.bf16.mxu0 %v4833
      %5061 = vmatpush1.bf16.msra.mxu0 %v4832
      %5062 = vmatprep.subr.bf16.mxu0 %v4829
      %5063 = vmatpush1.bf16.msra.mxu0 %v4828
      %5064 = vmatprep.subr.bf16.mxu0 %v4825
      %5065 = vmatpush1.bf16.msra.mxu0 %v4824
      %5066 = vmatprep.subr.bf16.mxu0 %v4821
      %5067 = vmatpush1.bf16.msra.mxu0 %v4820
      %5068 = vmatprep.subr.bf16.mxu0 %v4817
      %5069 = vmatpush1.bf16.msra.mxu0 %v4816
      %5070 = vmatprep.subr.bf16.mxu0 %v4813
      %5071 = vmatpush1.bf16.msra.mxu0 %v4812
      %5072 = vmatprep.subr.bf16.mxu0 %v4809
      %5073 = vmatpush1.bf16.msra.mxu0 %v4808
      %5074 = vmatprep.subr.bf16.mxu0 %v4805
      %5075 = vmatpush1.bf16.msra.mxu0 %v4804
      %5076 = vmatprep.subr.bf16.mxu0 %v4865
      %5077 = vmatpush2.bf16.msra.mxu0 %v4864
      %5078 = vmatprep.subr.bf16.mxu0 %v4861
      %5079 = vmatpush2.bf16.msra.mxu0 %v4860
      %5080 = vmatprep.subr.bf16.mxu0 %v4857
      %5081 = vmatpush2.bf16.msra.mxu0 %v4856
      %5082 = vmatprep.subr.bf16.mxu0 %v4853
      %5083 = vmatpush2.bf16.msra.mxu0 %v4852
      %5084 = vmatprep.subr.bf16.mxu0 %v4849
      %5085 = vmatpush2.bf16.msra.mxu0 %v4848
      %5086 = vmatprep.subr.bf16.mxu0 %v4845
      %5087 = vmatpush2.bf16.msra.mxu0 %v4844
      %5088 = vmatprep.subr.bf16.mxu0 %v4841
      %5089 = vmatpush2.bf16.msra.mxu0 %v4840
      %5090 = vmatprep.subr.bf16.mxu0 %v4837
      %5091 = vmatpush2.bf16.msra.mxu0 %v4836
      %5092 = vmatprep.mubr.bf16.mxu0 %v4251
      %5093 = vmatmul.mubr.bf16.gmra.mxu0 %v4250
      %v5094 = vpop.f32.mrf.mxu0
      %v5095 = vadd.f32 %v4407, %v5094
      %v5096 = vpop.f32.mrf.mxu0
      %v5097 = vadd.f32 %v4411, %v5096
      %v5098 = vpop.f32.mrf.mxu0
      %v5099 = vpop.f32.mrf.mxu0
      %5100 = vdwg.mxu0
      %5101 = vmatprep.subr.bf16.mxu0 %v4897
      %5102 = vmatpush1.bf16.msra.mxu0 %v4896
      %5103 = vmatprep.subr.bf16.mxu0 %v4893
      %5104 = vmatpush1.bf16.msra.mxu0 %v4892
      %5105 = vmatprep.subr.bf16.mxu0 %v4889
      %5106 = vmatpush1.bf16.msra.mxu0 %v4888
      %5107 = vmatprep.subr.bf16.mxu0 %v4885
      %5108 = vmatpush1.bf16.msra.mxu0 %v4884
      %5109 = vmatprep.subr.bf16.mxu0 %v4881
      %5110 = vmatpush1.bf16.msra.mxu0 %v4880
      %5111 = vmatprep.subr.bf16.mxu0 %v4877
      %5112 = vmatpush1.bf16.msra.mxu0 %v4876
      %5113 = vmatprep.subr.bf16.mxu0 %v4873
      %5114 = vmatpush1.bf16.msra.mxu0 %v4872
      %5115 = vmatprep.subr.bf16.mxu0 %v4869
      %5116 = vmatpush1.bf16.msra.mxu0 %v4868
      %5117 = vmatprep.subr.bf16.mxu0 %v4929
      %5118 = vmatpush2.bf16.msra.mxu0 %v4928
      %5119 = vmatprep.subr.bf16.mxu0 %v4925
      %5120 = vmatpush2.bf16.msra.mxu0 %v4924
      %5121 = vmatprep.subr.bf16.mxu0 %v4921
      %5122 = vmatpush2.bf16.msra.mxu0 %v4920
      %5123 = vmatprep.subr.bf16.mxu0 %v4917
      %5124 = vmatpush2.bf16.msra.mxu0 %v4916
      %5125 = vmatprep.subr.bf16.mxu0 %v4913
      %5126 = vmatpush2.bf16.msra.mxu0 %v4912
      %5127 = vmatprep.subr.bf16.mxu0 %v4909
      %5128 = vmatpush2.bf16.msra.mxu0 %v4908
      %5129 = vmatprep.subr.bf16.mxu0 %v4905
      %5130 = vmatpush2.bf16.msra.mxu0 %v4904
      %5131 = vmatprep.subr.bf16.mxu0 %v4901
      %5132 = vmatpush2.bf16.msra.mxu0 %v4900
      %5133 = vmatprep.mubr.bf16.mxu0 %v4253
      %5134 = vmatmul.mubr.bf16.gmra.mxu0 %v4252
      %v5135 = vpop.f32.mrf.mxu0
      %v5136 = vadd.f32 %v5095, %v5135
      %v5137 = vpop.f32.mrf.mxu0
      %v5138 = vadd.f32 %v5097, %v5137
      %v5139 = vpop.f32.mrf.mxu0
      %v5140 = vpop.f32.mrf.mxu0
      %5141 = vdwg.mxu0
      %5142 = vmatprep.subr.bf16.mxu0 %v4835
      %5143 = vmatpush1.bf16.msra.mxu0 %v4834
      %5144 = vmatprep.subr.bf16.mxu0 %v4831
      %5145 = vmatpush1.bf16.msra.mxu0 %v4830
      %5146 = vmatprep.subr.bf16.mxu0 %v4827
      %5147 = vmatpush1.bf16.msra.mxu0 %v4826
      %5148 = vmatprep.subr.bf16.mxu0 %v4823
      %5149 = vmatpush1.bf16.msra.mxu0 %v4822
      %5150 = vmatprep.subr.bf16.mxu0 %v4819
      %5151 = vmatpush1.bf16.msra.mxu0 %v4818
      %5152 = vmatprep.subr.bf16.mxu0 %v4815
      %5153 = vmatpush1.bf16.msra.mxu0 %v4814
      %5154 = vmatprep.subr.bf16.mxu0 %v4811
      %5155 = vmatpush1.bf16.msra.mxu0 %v4810
      %5156 = vmatprep.subr.bf16.mxu0 %v4807
      %5157 = vmatpush1.bf16.msra.mxu0 %v4806
      %5158 = vmatprep.subr.bf16.mxu0 %v4867
      %5159 = vmatpush2.bf16.msra.mxu0 %v4866
      %5160 = vmatprep.subr.bf16.mxu0 %v4863
      %5161 = vmatpush2.bf16.msra.mxu0 %v4862
      %5162 = vmatprep.subr.bf16.mxu0 %v4859
      %5163 = vmatpush2.bf16.msra.mxu0 %v4858
      %5164 = vmatprep.subr.bf16.mxu0 %v4855
      %5165 = vmatpush2.bf16.msra.mxu0 %v4854
      %5166 = vmatprep.subr.bf16.mxu0 %v4851
      %5167 = vmatpush2.bf16.msra.mxu0 %v4850
      %5168 = vmatprep.subr.bf16.mxu0 %v4847
      %5169 = vmatpush2.bf16.msra.mxu0 %v4846
      %5170 = vmatprep.subr.bf16.mxu0 %v4843
      %5171 = vmatpush2.bf16.msra.mxu0 %v4842
      %5172 = vmatprep.subr.bf16.mxu0 %v4839
      %5173 = vmatpush2.bf16.msra.mxu0 %v4838
      %5174 = vmatprep.mubr.bf16.mxu0 %v4251
      %5175 = vmatmul.mubr.bf16.gmra.mxu0 %v4250
      %v5176 = vpop.f32.mrf.mxu0
      %v5177 = vadd.f32 %v4415, %v5176
      %v5178 = vpop.f32.mrf.mxu0
      %v5179 = vadd.f32 %v4419, %v5178
      %v5180 = vpop.f32.mrf.mxu0
      %v5181 = vpop.f32.mrf.mxu0
      %5182 = vdwg.mxu0
      %5183 = vmatprep.subr.bf16.mxu0 %v4899
      %5184 = vmatpush1.bf16.msra.mxu0 %v4898
      %5185 = vmatprep.subr.bf16.mxu0 %v4895
      %5186 = vmatpush1.bf16.msra.mxu0 %v4894
      %5187 = vmatprep.subr.bf16.mxu0 %v4891
      %5188 = vmatpush1.bf16.msra.mxu0 %v4890
      %5189 = vmatprep.subr.bf16.mxu0 %v4887
      %5190 = vmatpush1.bf16.msra.mxu0 %v4886
      %5191 = vmatprep.subr.bf16.mxu0 %v4883
      %5192 = vmatpush1.bf16.msra.mxu0 %v4882
      %5193 = vmatprep.subr.bf16.mxu0 %v4879
      %5194 = vmatpush1.bf16.msra.mxu0 %v4878
      %5195 = vmatprep.subr.bf16.mxu0 %v4875
      %5196 = vmatpush1.bf16.msra.mxu0 %v4874
      %5197 = vmatprep.subr.bf16.mxu0 %v4871
      %5198 = vmatpush1.bf16.msra.mxu0 %v4870
      %5199 = vmatprep.subr.bf16.mxu0 %v4931
      %5200 = vmatpush2.bf16.msra.mxu0 %v4930
      %5201 = vmatprep.subr.bf16.mxu0 %v4927
      %5202 = vmatpush2.bf16.msra.mxu0 %v4926
      %5203 = vmatprep.subr.bf16.mxu0 %v4923
      %5204 = vmatpush2.bf16.msra.mxu0 %v4922
      %5205 = vmatprep.subr.bf16.mxu0 %v4919
      %5206 = vmatpush2.bf16.msra.mxu0 %v4918
      %5207 = vmatprep.subr.bf16.mxu0 %v4915
      %5208 = vmatpush2.bf16.msra.mxu0 %v4914
      %5209 = vmatprep.subr.bf16.mxu0 %v4911
      %5210 = vmatpush2.bf16.msra.mxu0 %v4910
      %5211 = vmatprep.subr.bf16.mxu0 %v4907
      %5212 = vmatpush2.bf16.msra.mxu0 %v4906
      %5213 = vmatprep.subr.bf16.mxu0 %v4903
      %5214 = vmatpush2.bf16.msra.mxu0 %v4902
      %5215 = vmatprep.mubr.bf16.mxu0 %v4253
      %5216 = vmatmul.mubr.bf16.gmra.mxu0 %v4252
      %v5217 = vpop.f32.mrf.mxu0
      %v5218 = vadd.f32 %v5177, %v5217
      %v5219 = vpop.f32.mrf.mxu0
      %v5220 = vadd.f32 %v5179, %v5219
      %v5221 = vpop.f32.mrf.mxu0
      %v5222 = vpop.f32.mrf.mxu0
      %5223 = vdwg.mxu0
      %vm5224 = vcmp.ge.f32.partialorder %v5136, 0.0
      %vm5225 = vcmp.ge.f32.partialorder %v5138, 0.0
      %vm5226 = vcmp.ge.f32.partialorder %v5218, 0.0
      %vm5227 = vcmp.ge.f32.partialorder %v5220, 0.0
      %v5228 = vlaneseq
      %v5229 = vshrl.u32 %v5228, 7
      %v5230 = vsub.s32 3, %v5229
      %v5231 = vrot.slane %v3223, %v5230
      %v5232 = vlaneseq
      %v5233 = vshrl.u32 %v5232, 7
      %v5234 = vsub.s32 7, %v5233
      %v5235 = vrot.slane %v3223, %v5234
      %v5236 = vlaneseq
      %v5237 = vshrl.u32 %v5236, 7
      %v5238 = vsub.s32 3, %v5237
      %v5239 = vrot.slane %v3224, %v5238
      %v5240 = vlaneseq
      %v5241 = vshrl.u32 %v5240, 7
      %v5242 = vsub.s32 7, %v5241
      %v5243 = vrot.slane %v3224, %v5242
      %v5248 = vlaneseq
      %v5249 = vshrl.u32 %v5248, 7
      %v5250 = vsub.s32 3, %v5249
      %v5251 = vrot.slane %v5231, %v5250
      %v5252 = vlaneseq
      %v5253 = vshrl.u32 %v5252, 7
      %v5254 = vsub.s32 3, %v5253
      %v5255 = vrot.slane %v5235, %v5254
      %v5256 = vlaneseq
      %v5257 = vshrl.u32 %v5256, 7
      %v5258 = vsub.s32 3, %v5257
      %v5259 = vrot.slane %v5239, %v5258
      %v5260 = vlaneseq
      %v5261 = vshrl.u32 %v5260, 7
      %v5262 = vsub.s32 3, %v5261
      %v5263 = vrot.slane %v5243, %v5262
      %v5264 = vmul.f32 %v5251, %v5136
      %v5265 = vmul.f32 %v5255, %v5138
      %v5266 = vmul.f32 %v5259, %v5218
      %v5267 = vmul.f32 %v5263, %v5220
      %v5268 = vsel %vm5224, %v5136, %v5264
      %v5269 = vsel %vm5225, %v5138, %v5265
      %v5270 = vsel %vm5226, %v5218, %v5266
      %v5271 = vsel %vm5227, %v5220, %v5267
    $region114: #{flowtron_forward.1} parent=1 // loop_footer
      %s3215 = sadd.s32 1, %s3211
    $region115: #{flowtron_forward.1} parent=1 // loop_footer_branch
      %3210 = sbr.rel target = $region111
    $region116: #{flowtron_forward.1} parent=1 // loop_exit
      _
    %v5272 = vld [vmem:[#allocation21] sm:$0xff]
    %v5273 = vld [vmem:[#allocation21 + $0x8] sm:$0xff]
    %v5274 = vld [vmem:[#allocation21 + $0x10] sm:$0xf]
    %v5275 = vpack.c.bf16 %v3216, %v3216
    %v5276 = vpack.c.bf16 %v3217, %v3217
    %v5277 = vpack.c.bf16 %v3218, %v3218
    %v5278 = vpack.c.bf16 %v3219, %v3219
    %v5279 = vld [vmem:[#allocation12] sm:$0xff]
    %v5280 = vld [vmem:[#allocation12 + $0x8] sm:$0xff]
    %v5281 = vld [vmem:[#allocation12 + $0x10] sm:$0xff]
    %v5282 = vld [vmem:[#allocation12 + $0x18] sm:$0xff]
    %v5283 = vld [vmem:[#allocation12 + $0x20] sm:$0xff]
    %v5284 = vld [vmem:[#allocation12 + $0x28] sm:$0xff]
    %v5285 = vld [vmem:[#allocation12 + $0x30] sm:$0xff]
    %v5286 = vld [vmem:[#allocation12 + $0x38] sm:$0xff]
    %v5287 = vld [vmem:[#allocation12 + $0x40] sm:$0xff]
    %v5288 = vld [vmem:[#allocation12 + $0x48] sm:$0xff]
    %v5289 = vld [vmem:[#allocation12 + $0x50] sm:$0xff]
    %v5290 = vld [vmem:[#allocation12 + $0x58] sm:$0xff]
    %v5291 = vld [vmem:[#allocation12 + $0x60] sm:$0xff]
    %v5292 = vld [vmem:[#allocation12 + $0x68] sm:$0xff]
    %v5293 = vld [vmem:[#allocation12 + $0x70] sm:$0xff]
    %v5294 = vld [vmem:[#allocation12 + $0x78] sm:$0xff]
    %v5295 = vld [vmem:[#allocation12 + $0x80] sm:$0xff]
    %v5296 = vld [vmem:[#allocation12 + $0x88] sm:$0xff]
    %v5297 = vld [vmem:[#allocation12 + $0x90] sm:$0xff]
    %v5298 = vld [vmem:[#allocation12 + $0x98] sm:$0xff]
    %v5299 = vld [vmem:[#allocation12 + $0xa0] sm:$0xff]
    %v5300 = vld [vmem:[#allocation12 + $0xa8] sm:$0xff]
    %v5301 = vld [vmem:[#allocation12 + $0xb0] sm:$0xff]
    %v5302 = vld [vmem:[#allocation12 + $0xb8] sm:$0xff]
    %v5303 = vld [vmem:[#allocation12 + $0xc0] sm:$0xff]
    %v5304 = vld [vmem:[#allocation12 + $0xc8] sm:$0xff]
    %v5305 = vld [vmem:[#allocation12 + $0xd0] sm:$0xff]
    %v5306 = vld [vmem:[#allocation12 + $0xd8] sm:$0xff]
    %v5307 = vld [vmem:[#allocation12 + $0xe0] sm:$0xff]
    %v5308 = vld [vmem:[#allocation12 + $0xe8] sm:$0xff]
    %v5309 = vld [vmem:[#allocation12 + $0xf0] sm:$0xff]
    %v5310 = vld [vmem:[#allocation12 + $0xf8] sm:$0xff]
    %v5311 = vld [vmem:[#allocation12 + $0x100] sm:$0xff]
    %v5312 = vld [vmem:[#allocation12 + $0x108] sm:$0xff]
    %v5313 = vld [vmem:[#allocation12 + $0x110] sm:$0xff]
    %v5314 = vld [vmem:[#allocation12 + $0x118] sm:$0xff]
    %v5315 = vld [vmem:[#allocation12 + $0x120] sm:$0xff]
    %v5316 = vld [vmem:[#allocation12 + $0x128] sm:$0xff]
    %v5317 = vld [vmem:[#allocation12 + $0x130] sm:$0xff]
    %v5318 = vld [vmem:[#allocation12 + $0x138] sm:$0xff]
    %v5319 = vld [vmem:[#allocation12 + $0x140] sm:$0xff]
    %v5320 = vld [vmem:[#allocation12 + $0x148] sm:$0xff]
    %v5321 = vld [vmem:[#allocation12 + $0x150] sm:$0xff]
    %v5322 = vld [vmem:[#allocation12 + $0x158] sm:$0xff]
    %v5323 = vld [vmem:[#allocation12 + $0x160] sm:$0xff]
    %v5324 = vld [vmem:[#allocation12 + $0x168] sm:$0xff]
    %v5325 = vld [vmem:[#allocation12 + $0x170] sm:$0xff]
    %v5326 = vld [vmem:[#allocation12 + $0x178] sm:$0xff]
    %v5327 = vld [vmem:[#allocation12 + $0x180] sm:$0xff]
    %v5328 = vld [vmem:[#allocation12 + $0x188] sm:$0xff]
    %v5329 = vld [vmem:[#allocation12 + $0x190] sm:$0xff]
    %v5330 = vld [vmem:[#allocation12 + $0x198] sm:$0xff]
    %v5331 = vld [vmem:[#allocation12 + $0x1a0] sm:$0xff]
    %v5332 = vld [vmem:[#allocation12 + $0x1a8] sm:$0xff]
    %v5333 = vld [vmem:[#allocation12 + $0x1b0] sm:$0xff]
    %v5334 = vld [vmem:[#allocation12 + $0x1b8] sm:$0xff]
    %v5335 = vld [vmem:[#allocation12 + $0x1c0] sm:$0xff]
    %v5336 = vld [vmem:[#allocation12 + $0x1c8] sm:$0xff]
    %v5337 = vld [vmem:[#allocation12 + $0x1d0] sm:$0xff]
    %v5338 = vld [vmem:[#allocation12 + $0x1d8] sm:$0xff]
    %v5339 = vld [vmem:[#allocation12 + $0x1e0] sm:$0xff]
    %v5340 = vld [vmem:[#allocation12 + $0x1e8] sm:$0xff]
    %v5341 = vld [vmem:[#allocation12 + $0x1f0] sm:$0xff]
    %v5342 = vld [vmem:[#allocation12 + $0x1f8] sm:$0xff]
    %v5343 = vlaneseq
    %v5344 = vshrl.u32 %v5343, 7
    %v5345 = vsub.s32 0, %v5344
    %v5346 = vrot.slane %v5272, %v5345
    %v5347 = vlaneseq
    %v5348 = vshrl.u32 %v5347, 7
    %v5349 = vsub.s32 0, %v5348
    %v5350 = vrot.slane %v5273, %v5349
    %v5415 = vunpack.c.l.b16 %v5279
    %v5416 = vunpack.c.h.b16 %v5279
    %v5417 = vunpack.c.l.b16 %v5280
    %v5418 = vunpack.c.h.b16 %v5280
    %v5419 = vunpack.c.l.b16 %v5281
    %v5420 = vunpack.c.h.b16 %v5281
    %v5421 = vunpack.c.l.b16 %v5282
    %v5422 = vunpack.c.h.b16 %v5282
    %v5423 = vunpack.c.l.b16 %v5283
    %v5424 = vunpack.c.h.b16 %v5283
    %v5425 = vunpack.c.l.b16 %v5284
    %v5426 = vunpack.c.h.b16 %v5284
    %v5427 = vunpack.c.l.b16 %v5285
    %v5428 = vunpack.c.h.b16 %v5285
    %v5429 = vunpack.c.l.b16 %v5286
    %v5430 = vunpack.c.h.b16 %v5286
    %v5431 = vunpack.c.l.b16 %v5287
    %v5432 = vunpack.c.h.b16 %v5287
    %v5433 = vunpack.c.l.b16 %v5288
    %v5434 = vunpack.c.h.b16 %v5288
    %v5435 = vunpack.c.l.b16 %v5289
    %v5436 = vunpack.c.h.b16 %v5289
    %v5437 = vunpack.c.l.b16 %v5290
    %v5438 = vunpack.c.h.b16 %v5290
    %v5439 = vunpack.c.l.b16 %v5291
    %v5440 = vunpack.c.h.b16 %v5291
    %v5441 = vunpack.c.l.b16 %v5292
    %v5442 = vunpack.c.h.b16 %v5292
    %v5443 = vunpack.c.l.b16 %v5293
    %v5444 = vunpack.c.h.b16 %v5293
    %v5445 = vunpack.c.l.b16 %v5294
    %v5446 = vunpack.c.h.b16 %v5294
    %v5447 = vunpack.c.l.b16 %v5295
    %v5448 = vunpack.c.h.b16 %v5295
    %v5449 = vunpack.c.l.b16 %v5296
    %v5450 = vunpack.c.h.b16 %v5296
    %v5451 = vunpack.c.l.b16 %v5297
    %v5452 = vunpack.c.h.b16 %v5297
    %v5453 = vunpack.c.l.b16 %v5298
    %v5454 = vunpack.c.h.b16 %v5298
    %v5455 = vunpack.c.l.b16 %v5299
    %v5456 = vunpack.c.h.b16 %v5299
    %v5457 = vunpack.c.l.b16 %v5300
    %v5458 = vunpack.c.h.b16 %v5300
    %v5459 = vunpack.c.l.b16 %v5301
    %v5460 = vunpack.c.h.b16 %v5301
    %v5461 = vunpack.c.l.b16 %v5302
    %v5462 = vunpack.c.h.b16 %v5302
    %v5463 = vunpack.c.l.b16 %v5303
    %v5464 = vunpack.c.h.b16 %v5303
    %v5465 = vunpack.c.l.b16 %v5304
    %v5466 = vunpack.c.h.b16 %v5304
    %v5467 = vunpack.c.l.b16 %v5305
    %v5468 = vunpack.c.h.b16 %v5305
    %v5469 = vunpack.c.l.b16 %v5306
    %v5470 = vunpack.c.h.b16 %v5306
    %v5471 = vunpack.c.l.b16 %v5307
    %v5472 = vunpack.c.h.b16 %v5307
    %v5473 = vunpack.c.l.b16 %v5308
    %v5474 = vunpack.c.h.b16 %v5308
    %v5475 = vunpack.c.l.b16 %v5309
    %v5476 = vunpack.c.h.b16 %v5309
    %v5477 = vunpack.c.l.b16 %v5310
    %v5478 = vunpack.c.h.b16 %v5310
    %v5479 = vunpack.c.l.b16 %v5311
    %v5480 = vunpack.c.h.b16 %v5311
    %v5481 = vunpack.c.l.b16 %v5312
    %v5482 = vunpack.c.h.b16 %v5312
    %v5483 = vunpack.c.l.b16 %v5313
    %v5484 = vunpack.c.h.b16 %v5313
    %v5485 = vunpack.c.l.b16 %v5314
    %v5486 = vunpack.c.h.b16 %v5314
    %v5487 = vunpack.c.l.b16 %v5315
    %v5488 = vunpack.c.h.b16 %v5315
    %v5489 = vunpack.c.l.b16 %v5316
    %v5490 = vunpack.c.h.b16 %v5316
    %v5491 = vunpack.c.l.b16 %v5317
    %v5492 = vunpack.c.h.b16 %v5317
    %v5493 = vunpack.c.l.b16 %v5318
    %v5494 = vunpack.c.h.b16 %v5318
    %v5495 = vunpack.c.l.b16 %v5319
    %v5496 = vunpack.c.h.b16 %v5319
    %v5497 = vunpack.c.l.b16 %v5320
    %v5498 = vunpack.c.h.b16 %v5320
    %v5499 = vunpack.c.l.b16 %v5321
    %v5500 = vunpack.c.h.b16 %v5321
    %v5501 = vunpack.c.l.b16 %v5322
    %v5502 = vunpack.c.h.b16 %v5322
    %v5503 = vunpack.c.l.b16 %v5323
    %v5504 = vunpack.c.h.b16 %v5323
    %v5505 = vunpack.c.l.b16 %v5324
    %v5506 = vunpack.c.h.b16 %v5324
    %v5507 = vunpack.c.l.b16 %v5325
    %v5508 = vunpack.c.h.b16 %v5325
    %v5509 = vunpack.c.l.b16 %v5326
    %v5510 = vunpack.c.h.b16 %v5326
    %v5511 = vunpack.c.l.b16 %v5327
    %v5512 = vunpack.c.h.b16 %v5327
    %v5513 = vunpack.c.l.b16 %v5328
    %v5514 = vunpack.c.h.b16 %v5328
    %v5515 = vunpack.c.l.b16 %v5329
    %v5516 = vunpack.c.h.b16 %v5329
    %v5517 = vunpack.c.l.b16 %v5330
    %v5518 = vunpack.c.h.b16 %v5330
    %v5519 = vunpack.c.l.b16 %v5331
    %v5520 = vunpack.c.h.b16 %v5331
    %v5521 = vunpack.c.l.b16 %v5332
    %v5522 = vunpack.c.h.b16 %v5332
    %v5523 = vunpack.c.l.b16 %v5333
    %v5524 = vunpack.c.h.b16 %v5333
    %v5525 = vunpack.c.l.b16 %v5334
    %v5526 = vunpack.c.h.b16 %v5334
    %v5527 = vunpack.c.l.b16 %v5335
    %v5528 = vunpack.c.h.b16 %v5335
    %v5529 = vunpack.c.l.b16 %v5336
    %v5530 = vunpack.c.h.b16 %v5336
    %v5531 = vunpack.c.l.b16 %v5337
    %v5532 = vunpack.c.h.b16 %v5337
    %v5533 = vunpack.c.l.b16 %v5338
    %v5534 = vunpack.c.h.b16 %v5338
    %v5535 = vunpack.c.l.b16 %v5339
    %v5536 = vunpack.c.h.b16 %v5339
    %v5537 = vunpack.c.l.b16 %v5340
    %v5538 = vunpack.c.h.b16 %v5340
    %v5539 = vunpack.c.l.b16 %v5341
    %v5540 = vunpack.c.h.b16 %v5341
    %v5541 = vunpack.c.l.b16 %v5342
    %v5542 = vunpack.c.h.b16 %v5342
    %v5543 = vpack.c.b16 %v5417, %v5415
    %v5544 = vpack.c.b16 %v5418, %v5416
    %v5545 = vpack.c.b16 %v5421, %v5419
    %v5546 = vpack.c.b16 %v5422, %v5420
    %v5547 = vpack.c.b16 %v5425, %v5423
    %v5548 = vpack.c.b16 %v5426, %v5424
    %v5549 = vpack.c.b16 %v5429, %v5427
    %v5550 = vpack.c.b16 %v5430, %v5428
    %v5551 = vpack.c.b16 %v5433, %v5431
    %v5552 = vpack.c.b16 %v5434, %v5432
    %v5553 = vpack.c.b16 %v5437, %v5435
    %v5554 = vpack.c.b16 %v5438, %v5436
    %v5555 = vpack.c.b16 %v5441, %v5439
    %v5556 = vpack.c.b16 %v5442, %v5440
    %v5557 = vpack.c.b16 %v5445, %v5443
    %v5558 = vpack.c.b16 %v5446, %v5444
    %v5559 = vpack.c.b16 %v5449, %v5447
    %v5560 = vpack.c.b16 %v5450, %v5448
    %v5561 = vpack.c.b16 %v5453, %v5451
    %v5562 = vpack.c.b16 %v5454, %v5452
    %v5563 = vpack.c.b16 %v5457, %v5455
    %v5564 = vpack.c.b16 %v5458, %v5456
    %v5565 = vpack.c.b16 %v5461, %v5459
    %v5566 = vpack.c.b16 %v5462, %v5460
    %v5567 = vpack.c.b16 %v5465, %v5463
    %v5568 = vpack.c.b16 %v5466, %v5464
    %v5569 = vpack.c.b16 %v5469, %v5467
    %v5570 = vpack.c.b16 %v5470, %v5468
    %v5571 = vpack.c.b16 %v5473, %v5471
    %v5572 = vpack.c.b16 %v5474, %v5472
    %v5573 = vpack.c.b16 %v5477, %v5475
    %v5574 = vpack.c.b16 %v5478, %v5476
    %v5575 = vpack.c.b16 %v5481, %v5479
    %v5576 = vpack.c.b16 %v5482, %v5480
    %v5577 = vpack.c.b16 %v5485, %v5483
    %v5578 = vpack.c.b16 %v5486, %v5484
    %v5579 = vpack.c.b16 %v5489, %v5487
    %v5580 = vpack.c.b16 %v5490, %v5488
    %v5581 = vpack.c.b16 %v5493, %v5491
    %v5582 = vpack.c.b16 %v5494, %v5492
    %v5583 = vpack.c.b16 %v5497, %v5495
    %v5584 = vpack.c.b16 %v5498, %v5496
    %v5585 = vpack.c.b16 %v5501, %v5499
    %v5586 = vpack.c.b16 %v5502, %v5500
    %v5587 = vpack.c.b16 %v5505, %v5503
    %v5588 = vpack.c.b16 %v5506, %v5504
    %v5589 = vpack.c.b16 %v5509, %v5507
    %v5590 = vpack.c.b16 %v5510, %v5508
    %v5591 = vpack.c.b16 %v5513, %v5511
    %v5592 = vpack.c.b16 %v5514, %v5512
    %v5593 = vpack.c.b16 %v5517, %v5515
    %v5594 = vpack.c.b16 %v5518, %v5516
    %v5595 = vpack.c.b16 %v5521, %v5519
    %v5596 = vpack.c.b16 %v5522, %v5520
    %v5597 = vpack.c.b16 %v5525, %v5523
    %v5598 = vpack.c.b16 %v5526, %v5524
    %v5599 = vpack.c.b16 %v5529, %v5527
    %v5600 = vpack.c.b16 %v5530, %v5528
    %v5601 = vpack.c.b16 %v5533, %v5531
    %v5602 = vpack.c.b16 %v5534, %v5532
    %v5603 = vpack.c.b16 %v5537, %v5535
    %v5604 = vpack.c.b16 %v5538, %v5536
    %v5605 = vpack.c.b16 %v5541, %v5539
    %v5606 = vpack.c.b16 %v5542, %v5540
    %5671 = vmatprep.subr.bf16.mxu0 %v5558
    %5672 = vmatpush1.bf16.msra.mxu0 %v5557
    %5673 = vmatprep.subr.bf16.mxu0 %v5556
    %5674 = vmatpush1.bf16.msra.mxu0 %v5555
    %5675 = vmatprep.subr.bf16.mxu0 %v5554
    %5676 = vmatpush1.bf16.msra.mxu0 %v5553
    %5677 = vmatprep.subr.bf16.mxu0 %v5552
    %5678 = vmatpush1.bf16.msra.mxu0 %v5551
    %5679 = vmatprep.subr.bf16.mxu0 %v5550
    %5680 = vmatpush1.bf16.msra.mxu0 %v5549
    %5681 = vmatprep.subr.bf16.mxu0 %v5548
    %5682 = vmatpush1.bf16.msra.mxu0 %v5547
    %5683 = vmatprep.subr.bf16.mxu0 %v5546
    %5684 = vmatpush1.bf16.msra.mxu0 %v5545
    %5685 = vmatprep.subr.bf16.mxu0 %v5544
    %5686 = vmatpush1.bf16.msra.mxu0 %v5543
    %5687 = vmatprep.subr.bf16.mxu0 %v5574
    %5688 = vmatpush2.bf16.msra.mxu0 %v5573
    %5689 = vmatprep.subr.bf16.mxu0 %v5572
    %5690 = vmatpush2.bf16.msra.mxu0 %v5571
    %5691 = vmatprep.subr.bf16.mxu0 %v5570
    %5692 = vmatpush2.bf16.msra.mxu0 %v5569
    %5693 = vmatprep.subr.bf16.mxu0 %v5568
    %5694 = vmatpush2.bf16.msra.mxu0 %v5567
    %5695 = vmatprep.subr.bf16.mxu0 %v5566
    %5696 = vmatpush2.bf16.msra.mxu0 %v5565
    %5697 = vmatprep.subr.bf16.mxu0 %v5564
    %5698 = vmatpush2.bf16.msra.mxu0 %v5563
    %5699 = vmatprep.subr.bf16.mxu0 %v5562
    %5700 = vmatpush2.bf16.msra.mxu0 %v5561
    %5701 = vmatprep.subr.bf16.mxu0 %v5560
    %5702 = vmatpush2.bf16.msra.mxu0 %v5559
    %5703 = vmatprep.mubr.bf16.mxu0 %v5276
    %5704 = vmatmul.mubr.bf16.gmra.mxu0 %v5275
    %v5705 = vpop.f32.mrf.mxu0
    %v5706 = vadd.f32 %v5346, %v5705
    %v5707 = vpop.f32.mrf.mxu0
    %v5708 = vadd.f32 %v5350, %v5707
    %v5709 = vpop.f32.mrf.mxu0
    %v5710 = vpop.f32.mrf.mxu0
    %5711 = vdwg.mxu0
    %5712 = vmatprep.subr.bf16.mxu0 %v5590
    %5713 = vmatpush1.bf16.msra.mxu0 %v5589
    %5714 = vmatprep.subr.bf16.mxu0 %v5588
    %5715 = vmatpush1.bf16.msra.mxu0 %v5587
    %5716 = vmatprep.subr.bf16.mxu0 %v5586
    %5717 = vmatpush1.bf16.msra.mxu0 %v5585
    %5718 = vmatprep.subr.bf16.mxu0 %v5584
    %5719 = vmatpush1.bf16.msra.mxu0 %v5583
    %5720 = vmatprep.subr.bf16.mxu0 %v5582
    %5721 = vmatpush1.bf16.msra.mxu0 %v5581
    %5722 = vmatprep.subr.bf16.mxu0 %v5580
    %5723 = vmatpush1.bf16.msra.mxu0 %v5579
    %5724 = vmatprep.subr.bf16.mxu0 %v5578
    %5725 = vmatpush1.bf16.msra.mxu0 %v5577
    %5726 = vmatprep.subr.bf16.mxu0 %v5576
    %5727 = vmatpush1.bf16.msra.mxu0 %v5575
    %5728 = vmatprep.subr.bf16.mxu0 %v5606
    %5729 = vmatpush2.bf16.msra.mxu0 %v5605
    %5730 = vmatprep.subr.bf16.mxu0 %v5604
    %5731 = vmatpush2.bf16.msra.mxu0 %v5603
    %5732 = vmatprep.subr.bf16.mxu0 %v5602
    %5733 = vmatpush2.bf16.msra.mxu0 %v5601
    %5734 = vmatprep.subr.bf16.mxu0 %v5600
    %5735 = vmatpush2.bf16.msra.mxu0 %v5599
    %5736 = vmatprep.subr.bf16.mxu0 %v5598
    %5737 = vmatpush2.bf16.msra.mxu0 %v5597
    %5738 = vmatprep.subr.bf16.mxu0 %v5596
    %5739 = vmatpush2.bf16.msra.mxu0 %v5595
    %5740 = vmatprep.subr.bf16.mxu0 %v5594
    %5741 = vmatpush2.bf16.msra.mxu0 %v5593
    %5742 = vmatprep.subr.bf16.mxu0 %v5592
    %5743 = vmatpush2.bf16.msra.mxu0 %v5591
    %5744 = vmatprep.mubr.bf16.mxu0 %v5278
    %5745 = vmatmul.mubr.bf16.gmra.mxu0 %v5277
    %v5746 = vpop.f32.mrf.mxu0
    %v5747 = vadd.f32 %v5706, %v5746
    %v5748 = vpop.f32.mrf.mxu0
    %v5749 = vadd.f32 %v5708, %v5748
    %v5750 = vpop.f32.mrf.mxu0
    %v5751 = vpop.f32.mrf.mxu0
    %5752 = vdwg.mxu0
    %vm5753 = vcmp.ge.f32.partialorder %v5747, 0.0
    %vm5754 = vcmp.ge.f32.partialorder %v5749, 0.0
    %v5755 = vlaneseq
    %v5756 = vshrl.u32 %v5755, 7
    %v5757 = vsub.s32 1, %v5756
    %v5758 = vrot.slane %v5272, %v5757
    %v5759 = vlaneseq
    %v5760 = vshrl.u32 %v5759, 7
    %v5761 = vsub.s32 1, %v5760
    %v5762 = vrot.slane %v5273, %v5761
    %v5763 = vmul.f32 %v5758, %v5747
    %v5764 = vmul.f32 %v5762, %v5749
    %v5765 = vsel %vm5753, %v5747, %v5763
    %v5766 = vsel %vm5754, %v5749, %v5764
    %v5767 = vpack.c.bf16 %v5765, %v5765
    %v5768 = vpack.c.bf16 %v5766, %v5766
    %v5769 = vld [vmem:[#allocation13] sm:$0xf]
    %v5770 = vld [vmem:[#allocation13 + $0x4] sm:$0xf]
    %v5771 = vld [vmem:[#allocation13 + $0x8] sm:$0xf]
    %v5772 = vld [vmem:[#allocation13 + $0xc] sm:$0xf]
    %v5773 = vld [vmem:[#allocation13 + $0x10] sm:$0xf]
    %v5774 = vld [vmem:[#allocation13 + $0x14] sm:$0xf]
    %v5775 = vld [vmem:[#allocation13 + $0x18] sm:$0xf]
    %v5776 = vld [vmem:[#allocation13 + $0x1c] sm:$0xf]
    %v5777 = vld [vmem:[#allocation13 + $0x20] sm:$0xf]
    %v5778 = vld [vmem:[#allocation13 + $0x24] sm:$0xf]
    %v5779 = vld [vmem:[#allocation13 + $0x28] sm:$0xf]
    %v5780 = vld [vmem:[#allocation13 + $0x2c] sm:$0xf]
    %v5781 = vld [vmem:[#allocation13 + $0x30] sm:$0xf]
    %v5782 = vld [vmem:[#allocation13 + $0x34] sm:$0xf]
    %v5783 = vld [vmem:[#allocation13 + $0x38] sm:$0xf]
    %v5784 = vld [vmem:[#allocation13 + $0x3c] sm:$0xf]
    %v5785 = vld [vmem:[#allocation13 + $0x40] sm:$0xf]
    %v5786 = vld [vmem:[#allocation13 + $0x44] sm:$0xf]
    %v5787 = vld [vmem:[#allocation13 + $0x48] sm:$0xf]
    %v5788 = vld [vmem:[#allocation13 + $0x4c] sm:$0xf]
    %v5789 = vld [vmem:[#allocation13 + $0x50] sm:$0xf]
    %v5790 = vld [vmem:[#allocation13 + $0x54] sm:$0xf]
    %v5791 = vld [vmem:[#allocation13 + $0x58] sm:$0xf]
    %v5792 = vld [vmem:[#allocation13 + $0x5c] sm:$0xf]
    %v5793 = vld [vmem:[#allocation13 + $0x60] sm:$0xf]
    %v5794 = vld [vmem:[#allocation13 + $0x64] sm:$0xf]
    %v5795 = vld [vmem:[#allocation13 + $0x68] sm:$0xf]
    %v5796 = vld [vmem:[#allocation13 + $0x6c] sm:$0xf]
    %v5797 = vld [vmem:[#allocation13 + $0x70] sm:$0xf]
    %v5798 = vld [vmem:[#allocation13 + $0x74] sm:$0xf]
    %v5799 = vld [vmem:[#allocation13 + $0x78] sm:$0xf]
    %v5800 = vld [vmem:[#allocation13 + $0x7c] sm:$0xf]
    %v5801 = vlaneseq
    %v5802 = vshrl.u32 %v5801, 7
    %v5803 = vsub.s32 2, %v5802
    %v5804 = vrot.slane %v5272, %v5803
    %v5837 = vunpack.c.l.b16 %v5769
    %v5838 = vunpack.c.l.b16 %v5770
    %v5839 = vunpack.c.l.b16 %v5771
    %v5840 = vunpack.c.l.b16 %v5772
    %v5841 = vunpack.c.l.b16 %v5773
    %v5842 = vunpack.c.l.b16 %v5774
    %v5843 = vunpack.c.l.b16 %v5775
    %v5844 = vunpack.c.l.b16 %v5776
    %v5845 = vunpack.c.l.b16 %v5777
    %v5846 = vunpack.c.l.b16 %v5778
    %v5847 = vunpack.c.l.b16 %v5779
    %v5848 = vunpack.c.l.b16 %v5780
    %v5849 = vunpack.c.l.b16 %v5781
    %v5850 = vunpack.c.l.b16 %v5782
    %v5851 = vunpack.c.l.b16 %v5783
    %v5852 = vunpack.c.l.b16 %v5784
    %v5853 = vunpack.c.l.b16 %v5785
    %v5854 = vunpack.c.l.b16 %v5786
    %v5855 = vunpack.c.l.b16 %v5787
    %v5856 = vunpack.c.l.b16 %v5788
    %v5857 = vunpack.c.l.b16 %v5789
    %v5858 = vunpack.c.l.b16 %v5790
    %v5859 = vunpack.c.l.b16 %v5791
    %v5860 = vunpack.c.l.b16 %v5792
    %v5861 = vunpack.c.l.b16 %v5793
    %v5862 = vunpack.c.l.b16 %v5794
    %v5863 = vunpack.c.l.b16 %v5795
    %v5864 = vunpack.c.l.b16 %v5796
    %v5865 = vunpack.c.l.b16 %v5797
    %v5866 = vunpack.c.l.b16 %v5798
    %v5867 = vunpack.c.l.b16 %v5799
    %v5868 = vunpack.c.l.b16 %v5800
    %v5869 = vpack.c.b16 %v5838, %v5837
    %v5870 = vpack.c.b16 %v5840, %v5839
    %v5871 = vpack.c.b16 %v5842, %v5841
    %v5872 = vpack.c.b16 %v5844, %v5843
    %v5873 = vpack.c.b16 %v5846, %v5845
    %v5874 = vpack.c.b16 %v5848, %v5847
    %v5875 = vpack.c.b16 %v5850, %v5849
    %v5876 = vpack.c.b16 %v5852, %v5851
    %v5877 = vpack.c.b16 %v5854, %v5853
    %v5878 = vpack.c.b16 %v5856, %v5855
    %v5879 = vpack.c.b16 %v5858, %v5857
    %v5880 = vpack.c.b16 %v5860, %v5859
    %v5881 = vpack.c.b16 %v5862, %v5861
    %v5882 = vpack.c.b16 %v5864, %v5863
    %v5883 = vpack.c.b16 %v5866, %v5865
    %v5884 = vpack.c.b16 %v5868, %v5867
    %5901 = vmatprep.subr.bf16.mxu0 0
    %5902 = vmatpush1.bf16.msra.mxu0 %v5876
    %5903 = vmatprep.subr.bf16.mxu0 0
    %5904 = vmatpush1.bf16.msra.mxu0 %v5875
    %5905 = vmatprep.subr.bf16.mxu0 0
    %5906 = vmatpush1.bf16.msra.mxu0 %v5874
    %5907 = vmatprep.subr.bf16.mxu0 0
    %5908 = vmatpush1.bf16.msra.mxu0 %v5873
    %5909 = vmatprep.subr.bf16.mxu0 0
    %5910 = vmatpush1.bf16.msra.mxu0 %v5872
    %5911 = vmatprep.subr.bf16.mxu0 0
    %5912 = vmatpush1.bf16.msra.mxu0 %v5871
    %5913 = vmatprep.subr.bf16.mxu0 0
    %5914 = vmatpush1.bf16.msra.mxu0 %v5870
    %5915 = vmatprep.subr.bf16.mxu0 0
    %5916 = vmatpush1.bf16.msra.mxu0 %v5869
    %5917 = vmatprep.subr.bf16.mxu0 0
    %5918 = vmatpush2.bf16.msra.mxu0 %v5884
    %5919 = vmatprep.subr.bf16.mxu0 0
    %5920 = vmatpush2.bf16.msra.mxu0 %v5883
    %5921 = vmatprep.subr.bf16.mxu0 0
    %5922 = vmatpush2.bf16.msra.mxu0 %v5882
    %5923 = vmatprep.subr.bf16.mxu0 0
    %5924 = vmatpush2.bf16.msra.mxu0 %v5881
    %5925 = vmatprep.subr.bf16.mxu0 0
    %5926 = vmatpush2.bf16.msra.mxu0 %v5880
    %5927 = vmatprep.subr.bf16.mxu0 0
    %5928 = vmatpush2.bf16.msra.mxu0 %v5879
    %5929 = vmatprep.subr.bf16.mxu0 0
    %5930 = vmatpush2.bf16.msra.mxu0 %v5878
    %5931 = vmatprep.subr.bf16.mxu0 0
    %5932 = vmatpush2.bf16.msra.mxu0 %v5877
    %5933 = vmatprep.mubr.bf16.mxu0 %v5768
    %5934 = vmatmul.mubr.bf16.gmra.mxu0 %v5767
    %v5935 = vpop.f32.mrf.mxu0
    %v5936 = vadd.f32 %v5804, %v5935
    %v5937 = vpop.f32.mrf.mxu0
    %v5938 = vpop.f32.mrf.mxu0
    %v5939 = vpop.f32.mrf.mxu0
    %5940 = vdwg.mxu0
    %vm5941 = vcmp.ge.f32.partialorder %v5936, 0.0
    %v5942 = vlaneseq
    %v5943 = vshrl.u32 %v5942, 7
    %v5944 = vsub.s32 3, %v5943
    %v5945 = vrot.slane %v5272, %v5944
    %v5946 = vmul.f32 %v5945, %v5936
    %v5947 = vsel %vm5941, %v5936, %v5946
    %v5948 = vpack.c.bf16 %v5947, %v5947
    %v5949 = vld [vmem:[#allocation15] sm:$0xf]
    %v5950 = vld [vmem:[#allocation15 + $0x4] sm:$0xf]
    %v5951 = vld [vmem:[#allocation15 + $0x8] sm:$0xf]
    %v5952 = vld [vmem:[#allocation15 + $0xc] sm:$0xf]
    %v5953 = vld [vmem:[#allocation15 + $0x10] sm:$0xf]
    %v5954 = vld [vmem:[#allocation15 + $0x14] sm:$0xf]
    %v5955 = vld [vmem:[#allocation15 + $0x18] sm:$0xf]
    %v5956 = vld [vmem:[#allocation15 + $0x1c] sm:$0xf]
    %v5957 = vld [vmem:[#allocation15 + $0x20] sm:$0xf]
    %v5958 = vld [vmem:[#allocation15 + $0x24] sm:$0xf]
    %v5959 = vld [vmem:[#allocation15 + $0x28] sm:$0xf]
    %v5960 = vld [vmem:[#allocation15 + $0x2c] sm:$0xf]
    %v5961 = vld [vmem:[#allocation15 + $0x30] sm:$0xf]
    %v5962 = vld [vmem:[#allocation15 + $0x34] sm:$0xf]
    %v5963 = vld [vmem:[#allocation15 + $0x38] sm:$0xf]
    %v5964 = vld [vmem:[#allocation15 + $0x3c] sm:$0xf]
    %v5965 = vlaneseq
    %v5966 = vshrl.u32 %v5965, 7
    %v5967 = vsub.s32 4, %v5966
    %v5968 = vrot.slane %v5272, %v5967
    %v5985 = vunpack.c.l.b16 %v5949
    %v5986 = vunpack.c.l.b16 %v5950
    %v5987 = vunpack.c.l.b16 %v5951
    %v5988 = vunpack.c.l.b16 %v5952
    %v5989 = vunpack.c.l.b16 %v5953
    %v5990 = vunpack.c.l.b16 %v5954
    %v5991 = vunpack.c.l.b16 %v5955
    %v5992 = vunpack.c.l.b16 %v5956
    %v5993 = vunpack.c.l.b16 %v5957
    %v5994 = vunpack.c.l.b16 %v5958
    %v5995 = vunpack.c.l.b16 %v5959
    %v5996 = vunpack.c.l.b16 %v5960
    %v5997 = vunpack.c.l.b16 %v5961
    %v5998 = vunpack.c.l.b16 %v5962
    %v5999 = vunpack.c.l.b16 %v5963
    %v6000 = vunpack.c.l.b16 %v5964
    %v6001 = vpack.c.b16 %v5986, %v5985
    %v6002 = vpack.c.b16 %v5988, %v5987
    %v6003 = vpack.c.b16 %v5990, %v5989
    %v6004 = vpack.c.b16 %v5992, %v5991
    %v6005 = vpack.c.b16 %v5994, %v5993
    %v6006 = vpack.c.b16 %v5996, %v5995
    %v6007 = vpack.c.b16 %v5998, %v5997
    %v6008 = vpack.c.b16 %v6000, %v5999
    %6017 = vmatprep.subr.bf16.mxu0 0
    %6018 = vmatpush1.bf16.msra.mxu0 %v6008
    %6019 = vmatprep.subr.bf16.mxu0 0
    %6020 = vmatpush1.bf16.msra.mxu0 %v6007
    %6021 = vmatprep.subr.bf16.mxu0 0
    %6022 = vmatpush1.bf16.msra.mxu0 %v6006
    %6023 = vmatprep.subr.bf16.mxu0 0
    %6024 = vmatpush1.bf16.msra.mxu0 %v6005
    %6025 = vmatprep.subr.bf16.mxu0 0
    %6026 = vmatpush1.bf16.msra.mxu0 %v6004
    %6027 = vmatprep.subr.bf16.mxu0 0
    %6028 = vmatpush1.bf16.msra.mxu0 %v6003
    %6029 = vmatprep.subr.bf16.mxu0 0
    %6030 = vmatpush1.bf16.msra.mxu0 %v6002
    %6031 = vmatprep.subr.bf16.mxu0 0
    %6032 = vmatpush1.bf16.msra.mxu0 %v6001
    %6033 = vmatprep.subr.bf16.mxu0 0
    %6034 = vmatpush2.bf16.msra.mxu0 0
    %6035 = vmatprep.subr.bf16.mxu0 0
    %6036 = vmatpush2.bf16.msra.mxu0 0
    %6037 = vmatprep.subr.bf16.mxu0 0
    %6038 = vmatpush2.bf16.msra.mxu0 0
    %6039 = vmatprep.subr.bf16.mxu0 0
    %6040 = vmatpush2.bf16.msra.mxu0 0
    %6041 = vmatprep.subr.bf16.mxu0 0
    %6042 = vmatpush2.bf16.msra.mxu0 0
    %6043 = vmatprep.subr.bf16.mxu0 0
    %6044 = vmatpush2.bf16.msra.mxu0 0
    %6045 = vmatprep.subr.bf16.mxu0 0
    %6046 = vmatpush2.bf16.msra.mxu0 0
    %6047 = vmatprep.subr.bf16.mxu0 0
    %6048 = vmatpush2.bf16.msra.mxu0 0
    %6049 = vmatprep.mubr.bf16.mxu0 0
    %6050 = vmatmul.mubr.bf16.gmra.mxu0 %v5948
    %v6051 = vpop.f32.mrf.mxu0
    %v6052 = vadd.f32 %v5968, %v6051
    %v6053 = vpop.f32.mrf.mxu0
    %v6054 = vpop.f32.mrf.mxu0
    %v6055 = vpop.f32.mrf.mxu0
    %6056 = vdwg.mxu0
    %vm6057 = vcmp.ge.f32.partialorder %v6052, 0.0
    %v6058 = vlaneseq
    %v6059 = vshrl.u32 %v6058, 7
    %v6060 = vsub.s32 5, %v6059
    %v6061 = vrot.slane %v5272, %v6060
    %v6062 = vmul.f32 %v6061, %v6052
    %v6063 = vsel %vm6057, %v6052, %v6062
    %v6064 = vpack.c.bf16 %v6063, %v6063
    %v6065 = vld [vmem:[#allocation16] sm:$0xf]
    %v6066 = vld [vmem:[#allocation16 + $0x4] sm:$0xf]
    %v6067 = vld [vmem:[#allocation16 + $0x8] sm:$0xf]
    %v6068 = vld [vmem:[#allocation16 + $0xc] sm:$0xf]
    %v6069 = vld [vmem:[#allocation16 + $0x10] sm:$0xf]
    %v6070 = vld [vmem:[#allocation16 + $0x14] sm:$0xf]
    %v6071 = vld [vmem:[#allocation16 + $0x18] sm:$0xf]
    %v6072 = vld [vmem:[#allocation16 + $0x1c] sm:$0xf]
    %v6073 = vld [vmem:[#allocation16 + $0x20] sm:$0xf]
    %v6074 = vld [vmem:[#allocation16 + $0x24] sm:$0xf]
    %v6075 = vld [vmem:[#allocation16 + $0x28] sm:$0xf]
    %v6076 = vld [vmem:[#allocation16 + $0x2c] sm:$0xf]
    %v6077 = vld [vmem:[#allocation16 + $0x30] sm:$0xf]
    %v6078 = vld [vmem:[#allocation16 + $0x34] sm:$0xf]
    %v6079 = vld [vmem:[#allocation16 + $0x38] sm:$0xf]
    %v6080 = vld [vmem:[#allocation16 + $0x3c] sm:$0xf]
    %v6081 = vlaneseq
    %v6082 = vshrl.u32 %v6081, 7
    %v6083 = vsub.s32 6, %v6082
    %v6084 = vrot.slane %v5272, %v6083
    %v6101 = vunpack.c.l.b16 %v6065
    %v6102 = vunpack.c.l.b16 %v6066
    %v6103 = vunpack.c.l.b16 %v6067
    %v6104 = vunpack.c.l.b16 %v6068
    %v6105 = vunpack.c.l.b16 %v6069
    %v6106 = vunpack.c.l.b16 %v6070
    %v6107 = vunpack.c.l.b16 %v6071
    %v6108 = vunpack.c.l.b16 %v6072
    %v6109 = vunpack.c.l.b16 %v6073
    %v6110 = vunpack.c.l.b16 %v6074
    %v6111 = vunpack.c.l.b16 %v6075
    %v6112 = vunpack.c.l.b16 %v6076
    %v6113 = vunpack.c.l.b16 %v6077
    %v6114 = vunpack.c.l.b16 %v6078
    %v6115 = vunpack.c.l.b16 %v6079
    %v6116 = vunpack.c.l.b16 %v6080
    %v6117 = vpack.c.b16 %v6102, %v6101
    %v6118 = vpack.c.b16 %v6104, %v6103
    %v6119 = vpack.c.b16 %v6106, %v6105
    %v6120 = vpack.c.b16 %v6108, %v6107
    %v6121 = vpack.c.b16 %v6110, %v6109
    %v6122 = vpack.c.b16 %v6112, %v6111
    %v6123 = vpack.c.b16 %v6114, %v6113
    %v6124 = vpack.c.b16 %v6116, %v6115
    %6133 = vmatprep.subr.bf16.mxu0 0
    %6134 = vmatpush1.bf16.msra.mxu0 %v6124
    %6135 = vmatprep.subr.bf16.mxu0 0
    %6136 = vmatpush1.bf16.msra.mxu0 %v6123
    %6137 = vmatprep.subr.bf16.mxu0 0
    %6138 = vmatpush1.bf16.msra.mxu0 %v6122
    %6139 = vmatprep.subr.bf16.mxu0 0
    %6140 = vmatpush1.bf16.msra.mxu0 %v6121
    %6141 = vmatprep.subr.bf16.mxu0 0
    %6142 = vmatpush1.bf16.msra.mxu0 %v6120
    %6143 = vmatprep.subr.bf16.mxu0 0
    %6144 = vmatpush1.bf16.msra.mxu0 %v6119
    %6145 = vmatprep.subr.bf16.mxu0 0
    %6146 = vmatpush1.bf16.msra.mxu0 %v6118
    %6147 = vmatprep.subr.bf16.mxu0 0
    %6148 = vmatpush1.bf16.msra.mxu0 %v6117
    %6149 = vmatprep.subr.bf16.mxu0 0
    %6150 = vmatpush2.bf16.msra.mxu0 0
    %6151 = vmatprep.subr.bf16.mxu0 0
    %6152 = vmatpush2.bf16.msra.mxu0 0
    %6153 = vmatprep.subr.bf16.mxu0 0
    %6154 = vmatpush2.bf16.msra.mxu0 0
    %6155 = vmatprep.subr.bf16.mxu0 0
    %6156 = vmatpush2.bf16.msra.mxu0 0
    %6157 = vmatprep.subr.bf16.mxu0 0
    %6158 = vmatpush2.bf16.msra.mxu0 0
    %6159 = vmatprep.subr.bf16.mxu0 0
    %6160 = vmatpush2.bf16.msra.mxu0 0
    %6161 = vmatprep.subr.bf16.mxu0 0
    %6162 = vmatpush2.bf16.msra.mxu0 0
    %6163 = vmatprep.subr.bf16.mxu0 0
    %6164 = vmatpush2.bf16.msra.mxu0 0
    %6165 = vmatprep.mubr.bf16.mxu0 0
    %6166 = vmatmul.mubr.bf16.gmra.mxu0 %v6064
    %v6167 = vpop.f32.mrf.mxu0
    %v6168 = vadd.f32 %v6084, %v6167
    %v6169 = vpop.f32.mrf.mxu0
    %v6170 = vpop.f32.mrf.mxu0
    %v6171 = vpop.f32.mrf.mxu0
    %6172 = vdwg.mxu0
    %vm6173 = vcmp.ge.f32.partialorder %v6168, 0.0
    %v6174 = vlaneseq
    %v6175 = vshrl.u32 %v6174, 7
    %v6176 = vsub.s32 7, %v6175
    %v6177 = vrot.slane %v5272, %v6176
    %v6178 = vmul.f32 %v6177, %v6168
    %v6179 = vsel %vm6173, %v6168, %v6178
    %v6180 = vpack.c.bf16 %v6179, %v6179
    %v6181 = vld [vmem:[#allocation18] sm:$0xf]
    %v6182 = vld [vmem:[#allocation18 + $0x4] sm:$0xf]
    %v6183 = vld [vmem:[#allocation18 + $0x8] sm:$0xf]
    %v6184 = vld [vmem:[#allocation18 + $0xc] sm:$0xf]
    %v6185 = vld [vmem:[#allocation18 + $0x10] sm:$0xf]
    %v6186 = vld [vmem:[#allocation18 + $0x14] sm:$0xf]
    %v6187 = vld [vmem:[#allocation18 + $0x18] sm:$0xf]
    %v6188 = vld [vmem:[#allocation18 + $0x1c] sm:$0xf]
    %v6189 = vld [vmem:[#allocation18 + $0x20] sm:$0xf]
    %v6190 = vld [vmem:[#allocation18 + $0x24] sm:$0xf]
    %v6191 = vld [vmem:[#allocation18 + $0x28] sm:$0xf]
    %v6192 = vld [vmem:[#allocation18 + $0x2c] sm:$0xf]
    %v6193 = vld [vmem:[#allocation18 + $0x30] sm:$0xf]
    %v6194 = vld [vmem:[#allocation18 + $0x34] sm:$0xf]
    %v6195 = vld [vmem:[#allocation18 + $0x38] sm:$0xf]
    %v6196 = vld [vmem:[#allocation18 + $0x3c] sm:$0xf]
    %v6197 = vlaneseq
    %v6198 = vshrl.u32 %v6197, 7
    %v6199 = vsub.s32 0, %v6198
    %v6200 = vrot.slane %v5274, %v6199
    %v6217 = vunpack.c.l.b16 %v6181
    %v6218 = vunpack.c.l.b16 %v6182
    %v6219 = vunpack.c.l.b16 %v6183
    %v6220 = vunpack.c.l.b16 %v6184
    %v6221 = vunpack.c.l.b16 %v6185
    %v6222 = vunpack.c.l.b16 %v6186
    %v6223 = vunpack.c.l.b16 %v6187
    %v6224 = vunpack.c.l.b16 %v6188
    %v6225 = vunpack.c.l.b16 %v6189
    %v6226 = vunpack.c.l.b16 %v6190
    %v6227 = vunpack.c.l.b16 %v6191
    %v6228 = vunpack.c.l.b16 %v6192
    %v6229 = vunpack.c.l.b16 %v6193
    %v6230 = vunpack.c.l.b16 %v6194
    %v6231 = vunpack.c.l.b16 %v6195
    %v6232 = vunpack.c.l.b16 %v6196
    %v6233 = vpack.c.b16 %v6218, %v6217
    %v6234 = vpack.c.b16 %v6220, %v6219
    %v6235 = vpack.c.b16 %v6222, %v6221
    %v6236 = vpack.c.b16 %v6224, %v6223
    %v6237 = vpack.c.b16 %v6226, %v6225
    %v6238 = vpack.c.b16 %v6228, %v6227
    %v6239 = vpack.c.b16 %v6230, %v6229
    %v6240 = vpack.c.b16 %v6232, %v6231
    %6249 = vmatprep.subr.bf16.mxu0 0
    %6250 = vmatpush1.bf16.msra.mxu0 %v6240
    %6251 = vmatprep.subr.bf16.mxu0 0
    %6252 = vmatpush1.bf16.msra.mxu0 %v6239
    %6253 = vmatprep.subr.bf16.mxu0 0
    %6254 = vmatpush1.bf16.msra.mxu0 %v6238
    %6255 = vmatprep.subr.bf16.mxu0 0
    %6256 = vmatpush1.bf16.msra.mxu0 %v6237
    %6257 = vmatprep.subr.bf16.mxu0 0
    %6258 = vmatpush1.bf16.msra.mxu0 %v6236
    %6259 = vmatprep.subr.bf16.mxu0 0
    %6260 = vmatpush1.bf16.msra.mxu0 %v6235
    %6261 = vmatprep.subr.bf16.mxu0 0
    %6262 = vmatpush1.bf16.msra.mxu0 %v6234
    %6263 = vmatprep.subr.bf16.mxu0 0
    %6264 = vmatpush1.bf16.msra.mxu0 %v6233
    %6265 = vmatprep.subr.bf16.mxu0 0
    %6266 = vmatpush2.bf16.msra.mxu0 0
    %6267 = vmatprep.subr.bf16.mxu0 0
    %6268 = vmatpush2.bf16.msra.mxu0 0
    %6269 = vmatprep.subr.bf16.mxu0 0
    %6270 = vmatpush2.bf16.msra.mxu0 0
    %6271 = vmatprep.subr.bf16.mxu0 0
    %6272 = vmatpush2.bf16.msra.mxu0 0
    %6273 = vmatprep.subr.bf16.mxu0 0
    %6274 = vmatpush2.bf16.msra.mxu0 0
    %6275 = vmatprep.subr.bf16.mxu0 0
    %6276 = vmatpush2.bf16.msra.mxu0 0
    %6277 = vmatprep.subr.bf16.mxu0 0
    %6278 = vmatpush2.bf16.msra.mxu0 0
    %6279 = vmatprep.subr.bf16.mxu0 0
    %6280 = vmatpush2.bf16.msra.mxu0 0
    %6281 = vmatprep.mubr.bf16.mxu0 0
    %6282 = vmatmul.mubr.bf16.gmra.mxu0 %v6180
    %v6283 = vpop.f32.mrf.mxu0
    %v6284 = vadd.f32 %v6200, %v6283
    %v6285 = vpop.f32.mrf.mxu0
    %v6286 = vpop.f32.mrf.mxu0
    %v6287 = vpop.f32.mrf.mxu0
    %6288 = vdwg.mxu0
    %vm6289 = vcmp.ge.f32.partialorder %v6284, 0.0
    %v6290 = vlaneseq
    %v6291 = vshrl.u32 %v6290, 7
    %v6292 = vsub.s32 1, %v6291
    %v6293 = vrot.slane %v5274, %v6292
    %v6294 = vmul.f32 %v6293, %v6284
    %v6295 = vsel %vm6289, %v6284, %v6294
    %v6296 = vpack.c.bf16 %v6295, %v6295
    %v6297 = vld [vmem:[#allocation19] sm:$0xf]
    %v6298 = vld [vmem:[#allocation19 + $0x4] sm:$0xf]
    %v6299 = vld [vmem:[#allocation19 + $0x8] sm:$0xf]
    %v6300 = vld [vmem:[#allocation19 + $0xc] sm:$0xf]
    %v6301 = vld [vmem:[#allocation19 + $0x10] sm:$0xf]
    %v6302 = vld [vmem:[#allocation19 + $0x14] sm:$0xf]
    %v6303 = vld [vmem:[#allocation19 + $0x18] sm:$0xf]
    %v6304 = vld [vmem:[#allocation19 + $0x1c] sm:$0xf]
    %v6305 = vld [vmem:[#allocation19 + $0x20] sm:$0xf]
    %v6306 = vld [vmem:[#allocation19 + $0x24] sm:$0xf]
    %v6307 = vld [vmem:[#allocation19 + $0x28] sm:$0xf]
    %v6308 = vld [vmem:[#allocation19 + $0x2c] sm:$0xf]
    %v6309 = vld [vmem:[#allocation19 + $0x30] sm:$0xf]
    %v6310 = vld [vmem:[#allocation19 + $0x34] sm:$0xf]
    %v6311 = vld [vmem:[#allocation19 + $0x38] sm:$0xf]
    %v6312 = vld [vmem:[#allocation19 + $0x3c] sm:$0xf]
    %v6313 = vlaneseq
    %v6314 = vshrl.u32 %v6313, 7
    %v6315 = vsub.s32 2, %v6314
    %v6316 = vrot.slane %v5274, %v6315
    %v6333 = vunpack.c.l.b16 %v6297
    %v6334 = vunpack.c.l.b16 %v6298
    %v6335 = vunpack.c.l.b16 %v6299
    %v6336 = vunpack.c.l.b16 %v6300
    %v6337 = vunpack.c.l.b16 %v6301
    %v6338 = vunpack.c.l.b16 %v6302
    %v6339 = vunpack.c.l.b16 %v6303
    %v6340 = vunpack.c.l.b16 %v6304
    %v6341 = vunpack.c.l.b16 %v6305
    %v6342 = vunpack.c.l.b16 %v6306
    %v6343 = vunpack.c.l.b16 %v6307
    %v6344 = vunpack.c.l.b16 %v6308
    %v6345 = vunpack.c.l.b16 %v6309
    %v6346 = vunpack.c.l.b16 %v6310
    %v6347 = vunpack.c.l.b16 %v6311
    %v6348 = vunpack.c.l.b16 %v6312
    %v6349 = vpack.c.b16 %v6334, %v6333
    %v6350 = vpack.c.b16 %v6336, %v6335
    %v6351 = vpack.c.b16 %v6338, %v6337
    %v6352 = vpack.c.b16 %v6340, %v6339
    %v6353 = vpack.c.b16 %v6342, %v6341
    %v6354 = vpack.c.b16 %v6344, %v6343
    %v6355 = vpack.c.b16 %v6346, %v6345
    %v6356 = vpack.c.b16 %v6348, %v6347
    %6365 = vmatprep.subr.bf16.mxu0 0
    %6366 = vmatpush1.bf16.msra.mxu0 %v6356
    %6367 = vmatprep.subr.bf16.mxu0 0
    %6368 = vmatpush1.bf16.msra.mxu0 %v6355
    %6369 = vmatprep.subr.bf16.mxu0 0
    %6370 = vmatpush1.bf16.msra.mxu0 %v6354
    %6371 = vmatprep.subr.bf16.mxu0 0
    %6372 = vmatpush1.bf16.msra.mxu0 %v6353
    %6373 = vmatprep.subr.bf16.mxu0 0
    %6374 = vmatpush1.bf16.msra.mxu0 %v6352
    %6375 = vmatprep.subr.bf16.mxu0 0
    %6376 = vmatpush1.bf16.msra.mxu0 %v6351
    %6377 = vmatprep.subr.bf16.mxu0 0
    %6378 = vmatpush1.bf16.msra.mxu0 %v6350
    %6379 = vmatprep.subr.bf16.mxu0 0
    %6380 = vmatpush1.bf16.msra.mxu0 %v6349
    %6381 = vmatprep.subr.bf16.mxu0 0
    %6382 = vmatpush2.bf16.msra.mxu0 0
    %6383 = vmatprep.subr.bf16.mxu0 0
    %6384 = vmatpush2.bf16.msra.mxu0 0
    %6385 = vmatprep.subr.bf16.mxu0 0
    %6386 = vmatpush2.bf16.msra.mxu0 0
    %6387 = vmatprep.subr.bf16.mxu0 0
    %6388 = vmatpush2.bf16.msra.mxu0 0
    %6389 = vmatprep.subr.bf16.mxu0 0
    %6390 = vmatpush2.bf16.msra.mxu0 0
    %6391 = vmatprep.subr.bf16.mxu0 0
    %6392 = vmatpush2.bf16.msra.mxu0 0
    %6393 = vmatprep.subr.bf16.mxu0 0
    %6394 = vmatpush2.bf16.msra.mxu0 0
    %6395 = vmatprep.subr.bf16.mxu0 0
    %6396 = vmatpush2.bf16.msra.mxu0 0
    %6397 = vmatprep.mubr.bf16.mxu0 0
    %6398 = vmatmul.mubr.bf16.gmra.mxu0 %v6296
    %v6399 = vpop.f32.mrf.mxu0
    %v6400 = vadd.f32 %v6316, %v6399
    %v6401 = vpop.f32.mrf.mxu0
    %v6402 = vpop.f32.mrf.mxu0
    %v6403 = vpop.f32.mrf.mxu0
    %6404 = vdwg.mxu0
    %vm6405 = vcmp.ge.f32.partialorder %v6400, 0.0
    %v6406 = vlaneseq
    %v6407 = vshrl.u32 %v6406, 7
    %v6408 = vsub.s32 3, %v6407
    %v6409 = vrot.slane %v5274, %v6408
    %v6410 = vmul.f32 %v6409, %v6400
    %v6411 = vsel %vm6405, %v6400, %v6410
    %6412 = vst [vmem:[%s14] sm:$0xff] %v6411
    // Predicated region
    $region117: #{flowtron_forward.1} parent=1 // pred_check
      _
    $region118: #{flowtron_forward.1} parent=1 // pred_check_branch
      %6414 = sbr.rel (0) target = $region120
    $region119: #{flowtron_forward.1} parent=1 // pred_region
      _
    $region120: #{flowtron_forward.1} parent=1 // pred_fallthru
      _
    // Predicated region
    $region121: #{flowtron_forward.1} parent=1 // pred_check
      _
    $region122: #{flowtron_forward.1} parent=1 // pred_check_branch
      %6416 = sbr.rel (0) target = $region124
    $region123: #{flowtron_forward.1} parent=1 // pred_region
      _
    $region124: #{flowtron_forward.1} parent=1 // pred_fallthru
      _
    %6417 = vsyncpa [#allocation3], 1
    %6418 = vsyncpa [#allocation5], 1
    %6419 = vsyncpa [#allocation8], 1
    %6420 = vsyncpa [#allocation11], 1
    %6421 = vsyncpa [#allocation14], 1
    %6422 = vsyncpa [#allocation17], 1
    %6423 = vsyncpa [#allocation20], 1

</llo_original>
